<compile_context>
chip_gen: v7x
topology: tpu7x:2x2x1
jax: 0.10.0
libtpu: 0.0.40
codegen_flags: <defaults>
</compile_context>

<pallas_src>
import functools

import jax
import jax.numpy as jnp
from jax.experimental import pallas as pl
from jax.experimental.pallas import tpu as pltpu

PITCH = 32                       # per-image row pitch (28 image rows + 4 pad)
_VMEM_LIMIT = 32 * 1024 * 1024   # explicit scoped-VMEM budget (safe on v5e/v6e/v7x)


def _round_up(x, m):
    return (x + m - 1) // m * m


def _pick_batch_tile(n):
    # Multiple of 8 so every block stays (8,128)-aligned; small enough that the
    # grid has >=2 steps once the batch is non-trivial (v7x megacore), large
    # enough to amortize the ~0.35us per-grid-step overhead at big batch.
    if n <= 16:
        return 8
    if n <= 512:
        return 16
    return 32


# ----------------------------- Pallas kernel ------------------------------- #

def _net_kernel(x_ref, w1_ref, w2_ref, w3_ref, wfc_ref, bias_ref, o_ref, *,
                batch_tile, num_classes):
    """Whole-network forward for one batch tile; activations stay in VMEM.

    Row/lane encoding of every activation value `a`:
      * flat row  b*32 + r  holds image b at vertical position r (r = s*h where
        s is the vertical dilation: 1 after conv1, 2 after pool1, 4 after
        pool2, ...).  Rows that do not correspond to a valid position carry
        finite garbage and are never read by valid outputs.
      * lane      pw*C + c  holds horizontal position pw and channel c
        (compact after each horizontal pool-tap max, zero-padded to 128).
    Each conv layer = KH accumulated matmuls of vertically shifted row windows
    against a banded (lanes_in x 256) weight matrix whose two 128-lane halves
    are the even / odd horizontal pool taps.
    """

    def conv(a, w_ref, kh, step):
        n = a.shape[0] - step * (kh - 1)
        acc = jnp.dot(a[0:n, :].astype(jnp.bfloat16), w_ref[0],
                      preferred_element_type=jnp.float32)
        for di in range(1, kh):
            s = di * step
            acc = acc + jnp.dot(a[s:s + n, :].astype(jnp.bfloat16), w_ref[di],
                                preferred_element_type=jnp.float32)
        return acc                                              # (n, 256) f32

    def pool_bias_relu(acc, step, bias_row):
        y = jnp.maximum(acc[:, 0:128], acc[:, 128:256])         # horizontal taps
        n = y.shape[0] - step
        y = jnp.maximum(y[0:n, :], y[step:step + n, :])          # vertical taps
        return jnp.maximum(y + bias_row, 0.0)                    # bias + ReLU

    biases = bias_ref[...]                                       # (4, 128) f32
    x = x_ref[...]                                               # (tile*32, 28) f32
    a = pool_bias_relu(conv(x, w1_ref, 5, 1), 1, biases[0:1, :])  # conv1+pool+relu
    a = pool_bias_relu(conv(a, w2_ref, 5, 2), 2, biases[1:2, :])  # conv2+pool+relu
    a = pool_bias_relu(conv(a, w3_ref, 3, 4), 4, biases[2:3, :])  # conv3+pool+relu

    # Per-image feature vector lives at flat row b*32, lanes 0..39.  Gather the
    # batch_tile rows with a one-hot selection matmul (no strided slicing).
    m = a.shape[0]
    img = jax.lax.broadcasted_iota(jnp.int32, (batch_tile, m), 0)
    row = jax.lax.broadcasted_iota(jnp.int32, (batch_tile, m), 1)
    sel = (row == img * PITCH).astype(jnp.float32)
    feats = jnp.dot(sel, a, preferred_element_type=jnp.float32)   # (tile, 128)

    logits = jnp.dot(feats.astype(jnp.bfloat16), wfc_ref[...],
                     preferred_element_type=jnp.float32) + biases[3:4, :]
    lane = jax.lax.broadcasted_iota(jnp.int32, logits.shape, 1)
    valid = lane < num_classes
    masked = jnp.where(valid, logits, jnp.float32(-1e30))
    mx = jnp.max(masked, axis=-1, keepdims=True)
    z = masked - mx
    ez = jnp.where(valid, jnp.exp(z), 0.0)
    o_ref[...] = z - jnp.log(jnp.sum(ez, axis=-1, keepdims=True))


# ------------------------- weight re-packing (XLA) ------------------------- #

def _band_weights(w_oihw, w_in, k_pad):
    """(Cout,Cin,KH,KW) -> (KH, k_pad, 256) bf16 banded matrices.

    For vertical tap di, the matrix maps input lane (w*Cin + ci) to output lane
    (q*128 + pw*Cout + co) where the conv output column is w_out = 2*pw + q,
    encoding the horizontal part of the conv and the 2 horizontal pool taps.
    """
    cout, cin, kh, kw = w_oihw.shape
    w_out = w_in - kw + 1
    wp = w_out // 2
    assert wp * cout <= 128 and w_in * cin <= k_pad
    per_di = []
    for di in range(kh):
        m = jnp.zeros((w_in, cin, w_out, cout), jnp.float32)
        for dj in range(kw):
            diag = jnp.eye(w_in, w_out, k=-dj, dtype=jnp.float32)  # w_in == w_out+dj
            m = m + diag[:, None, :, None] * w_oihw[:, :, di, dj].T[None, :, None, :]
        blocks = []
        for q in range(2):                                         # pool-tap phases
            mq = m[:, :, q::2, :].reshape(w_in * cin, wp * cout)
            blocks.append(jnp.pad(mq, ((0, k_pad - w_in * cin),
                                       (0, 128 - wp * cout))))
        per_di.append(jnp.concatenate(blocks, axis=1))             # (k_pad, 256)
    return jnp.stack(per_di).astype(jnp.bfloat16)                  # (KH, k_pad, 256)


def _pad_lanes(v):
    return jnp.pad(v.astype(jnp.float32), (0, 128 - v.shape[0]))


# ------------------------------- JAX glue ---------------------------------- #

def net_forward(x_nchw, params):
    # TODO(synk): F.dropout (training=True by default in the source) is
    # implemented as identity (inference semantics); stochastic masking omitted.
    # Note: the source's `self.mp(self.conv1(x), 0.25)` passes a stray 0.25 to
    # the MaxPool2d module; we implement the intended 2x2 max-pool.
    n, c, h, w = x_nchw.shape
    assert (c, h, w) == (1, 28, 28), "architecture implies 1x28x28 inputs"
    tile = _pick_batch_tile(n)
    n_pad = _round_up(max(n, tile), tile)
    grid = n_pad // tile

    # (N,1,28,28) -> (n_pad*32, 28): rows = image-major vertical position,
    # lanes = horizontal position.  Cheap reshape/pad glue only, no im2col.
    x = x_nchw.reshape(n, 28, 28).astype(jnp.float32)
    x = jnp.pad(x, ((0, n_pad - n), (0, PITCH - 28), (0, 0)))
    x = x.reshape(n_pad * PITCH, 28)

    w1 = _band_weights(params["conv1_w"], w_in=28, k_pad=28)    # (5, 28, 256)
    w2 = _band_weights(params["conv2_w"], w_in=12, k_pad=128)   # (5, 128, 256)
    w3 = _band_weights(params["conv3_w"], w_in=4, k_pad=128)    # (3, 128, 256)
    wfc = jnp.zeros((128, 128), jnp.float32).at[:40, :10].set(
        params["fc_w"].T).astype(jnp.bfloat16)
    biases = jnp.stack([
        _pad_lanes(jnp.tile(params["conv1_b"], 12)),   # lane = pw*10 + c
        _pad_lanes(jnp.tile(params["conv2_b"], 4)),    # lane = pw*20 + c
        _pad_lanes(params["conv3_b"]),                 # lane = c
        _pad_lanes(params["fc_b"]),                    # lane = class
    ])                                                 # (4, 128) f32

    kern = functools.partial(_net_kernel, batch_tile=tile, num_classes=10)
    out = pl.pallas_call(
        kern,
        out_shape=jax.ShapeDtypeStruct((n_pad, 128), jnp.float32),
        grid=(grid,),
        in_specs=[
            pl.BlockSpec((tile * PITCH, 28), lambda i: (i, 0)),
            pl.BlockSpec((5, 28, 256), lambda i: (0, 0, 0)),
            pl.BlockSpec((5, 128, 256), lambda i: (0, 0, 0)),
            pl.BlockSpec((3, 128, 256), lambda i: (0, 0, 0)),
            pl.BlockSpec((128, 128), lambda i: (0, 0)),
            pl.BlockSpec((4, 128), lambda i: (0, 0)),
        ],
        out_specs=pl.BlockSpec((tile, 128), lambda i: (i, 0)),
        compiler_params=pltpu.CompilerParams(
            dimension_semantics=("parallel",),
            vmem_limit_bytes=_VMEM_LIMIT),
    )(x, w1, w2, w3, wfc, biases)
    return out[:n, :10]


# --------------------------- reference & params ----------------------------- #

def _reference_forward(x_nchw, params):
    """Pure-JAX reference (f32) with identical (inference) semantics."""
    def conv(x, w, b):
        y = jax.lax.conv_general_dilated(
            x, w, (1, 1), "VALID", dimension_numbers=("NCHW", "OIHW", "NCHW"))
        return y + b[None, :, None, None]

    def pool2(x):
        return jax.lax.reduce_window(x, -jnp.inf, jax.lax.max,
                                     (1, 1, 2, 2), (1, 1, 2, 2), "VALID")

    x = x_nchw.astype(jnp.float32)
    x = jax.nn.relu(pool2(conv(x, params["conv1_w"], params["conv1_b"])))
    x = jax.nn.relu(pool2(conv(x, params["conv2_w"], params["conv2_b"])))
    x = jax.nn.relu(pool2(conv(x, params["conv3_w"], params["conv3_b"])))
    x = x.reshape(x.shape[0], -1)
    logits = x @ params["fc_w"].T + params["fc_b"]
    return jax.nn.log_softmax(logits, axis=-1)


def init_params(key):
    ks = jax.random.split(key, 8)
    s = 0.1
    return {
        "conv1_w": jax.random.normal(ks[0], (10, 1, 5, 5), jnp.float32) * s,
        "conv1_b": jax.random.normal(ks[1], (10,), jnp.float32) * s,
        "conv2_w": jax.random.normal(ks[2], (20, 10, 5, 5), jnp.float32) * s,
        "conv2_b": jax.random.normal(ks[3], (20,), jnp.float32) * s,
        "conv3_w": jax.random.normal(ks[4], (40, 20, 3, 3), jnp.float32) * s,
        "conv3_b": jax.random.normal(ks[5], (40,), jnp.float32) * s,
        "fc_w":    jax.random.normal(ks[6], (10, 40), jnp.float32) * s,
        "fc_b":    jax.random.normal(ks[7], (10,), jnp.float32) * s,
    }


if __name__ == "__main__":
    key = jax.random.PRNGKey(0)
    pkey, xkey = jax.random.split(key)
    params = init_params(pkey)
    # The architecture forces 28x28 inputs (fc expects 40 = 40*1*1 features).
    x = jax.random.normal(xkey, (2, 1, 28, 28), jnp.float32)

    out = jax.block_until_ready(jax.jit(net_forward)(x, params))
    ref = jax.block_until_ready(_reference_forward(x, params))

    assert out.shape == (2, 10), out.shape
    assert bool(jnp.all(jnp.isfinite(out)))
    # log_softmax rows must exponentiate to probability distributions
    row_sums = jnp.exp(out).sum(axis=1)
    assert bool(jnp.allclose(row_sums, 1.0, atol=1e-4)), row_sums
    # bf16 matmul operands (f32 accumulation) -> loose tolerance vs f32 reference
    assert bool(jnp.allclose(out, ref, atol=0.1, rtol=0.05)), (out, ref)
    print("KERNEL_OK")
</pallas_src>

<mosaic_0001>
module attributes {stable_mosaic.version = 11 : i64} {
  func.func @_net_kernel(%arg0: i32, %arg1: memref<256x28xf32, #tpu.memory_space<vmem>>, %arg2: memref<5x28x256xbf16, #tpu.memory_space<vmem>>, %arg3: memref<5x128x256xbf16, #tpu.memory_space<vmem>>, %arg4: memref<3x128x256xbf16, #tpu.memory_space<vmem>>, %arg5: memref<128x128xbf16, #tpu.memory_space<vmem>>, %arg6: memref<4x128xf32, #tpu.memory_space<vmem>>, %arg7: memref<8x128xf32, #tpu.memory_space<vmem>>) attributes {dimension_semantics = [#tpu.dimension_semantics<parallel>], iteration_bounds = array<i64: 1>, scalar_prefetch = 0 : i64, scratch_operands = 0 : i64, tpu.core_type = #tpu.core_type<tc>, window_params = [{transform_indices = @transform_0, window_bounds = array<i64: 256, 28>}, {pipeline_mode = #tpu.pipeline_mode<synchronous>, transform_indices = @transform_1, window_bounds = array<i64: 5, 28, 256>}, {pipeline_mode = #tpu.pipeline_mode<synchronous>, transform_indices = @transform_2, window_bounds = array<i64: 5, 128, 256>}, {pipeline_mode = #tpu.pipeline_mode<synchronous>, transform_indices = @transform_3, window_bounds = array<i64: 3, 128, 256>}, {pipeline_mode = #tpu.pipeline_mode<synchronous>, transform_indices = @transform_4, window_bounds = array<i64: 128, 128>}, {pipeline_mode = #tpu.pipeline_mode<synchronous>, transform_indices = @transform_5, window_bounds = array<i64: 4, 128>}, {transform_indices = @transform_6, window_bounds = array<i64: 8, 128>}]} {
    %c0 = arith.constant 0 : index
    %c0_0 = arith.constant 0 : index
    %0 = vector.load %arg6[%c0, %c0_0] : memref<4x128xf32, #tpu.memory_space<vmem>>, vector<4x128xf32>
    %c0_1 = arith.constant 0 : index
    %c0_2 = arith.constant 0 : index
    %1 = vector.load %arg1[%c0_1, %c0_2] : memref<256x28xf32, #tpu.memory_space<vmem>>, vector<256x28xf32>
    %2 = vector.extract_strided_slice %1 {offsets = [0, 0], sizes = [252, 28], strides = [1, 1]} : vector<256x28xf32> to vector<252x28xf32>
    %3 = arith.truncf %2 : vector<252x28xf32> to vector<252x28xbf16>
    %c0_3 = arith.constant 0 : index
    %c0_4 = arith.constant 0 : index
    %c0_5 = arith.constant 0 : index
    %4 = vector.load %arg2[%c0_3, %c0_4, %c0_5] : memref<5x28x256xbf16, #tpu.memory_space<vmem>>, vector<1x28x256xbf16>
    %5 = vector.shape_cast %4 : vector<1x28x256xbf16> to vector<28x256xbf16>
    %cst = arith.constant dense<0.000000e+00> : vector<252x256xf32>
    %6 = tpu.matmul %3, %5, %cst {dimension_numbers = #tpu.dot_dimension_numbers<[1], [0], [0], [1], [0, 0, 1, 1], [], []>} : vector<252x28xbf16>, vector<28x256xbf16>, vector<252x256xf32> -> vector<252x256xf32>
    %7 = vector.extract_strided_slice %1 {offsets = [1, 0], sizes = [252, 28], strides = [1, 1]} : vector<256x28xf32> to vector<252x28xf32>
    %8 = arith.truncf %7 : vector<252x28xf32> to vector<252x28xbf16>
    %c1 = arith.constant 1 : index
    %c0_6 = arith.constant 0 : index
    %c0_7 = arith.constant 0 : index
    %9 = vector.load %arg2[%c1, %c0_6, %c0_7] : memref<5x28x256xbf16, #tpu.memory_space<vmem>>, vector<1x28x256xbf16>
    %10 = vector.shape_cast %9 : vector<1x28x256xbf16> to vector<28x256xbf16>
    %cst_8 = arith.constant dense<0.000000e+00> : vector<252x256xf32>
    %11 = tpu.matmul %8, %10, %cst_8 {dimension_numbers = #tpu.dot_dimension_numbers<[1], [0], [0], [1], [0, 0, 1, 1], [], []>} : vector<252x28xbf16>, vector<28x256xbf16>, vector<252x256xf32> -> vector<252x256xf32>
    %12 = arith.addf %6, %11 : vector<252x256xf32>
    %13 = vector.extract_strided_slice %1 {offsets = [2, 0], sizes = [252, 28], strides = [1, 1]} : vector<256x28xf32> to vector<252x28xf32>
    %14 = arith.truncf %13 : vector<252x28xf32> to vector<252x28xbf16>
    %c2 = arith.constant 2 : index
    %c0_9 = arith.constant 0 : index
    %c0_10 = arith.constant 0 : index
    %15 = vector.load %arg2[%c2, %c0_9, %c0_10] : memref<5x28x256xbf16, #tpu.memory_space<vmem>>, vector<1x28x256xbf16>
    %16 = vector.shape_cast %15 : vector<1x28x256xbf16> to vector<28x256xbf16>
    %cst_11 = arith.constant dense<0.000000e+00> : vector<252x256xf32>
    %17 = tpu.matmul %14, %16, %cst_11 {dimension_numbers = #tpu.dot_dimension_numbers<[1], [0], [0], [1], [0, 0, 1, 1], [], []>} : vector<252x28xbf16>, vector<28x256xbf16>, vector<252x256xf32> -> vector<252x256xf32>
    %18 = arith.addf %12, %17 : vector<252x256xf32>
    %19 = vector.extract_strided_slice %1 {offsets = [3, 0], sizes = [252, 28], strides = [1, 1]} : vector<256x28xf32> to vector<252x28xf32>
    %20 = arith.truncf %19 : vector<252x28xf32> to vector<252x28xbf16>
    %c3 = arith.constant 3 : index
    %c0_12 = arith.constant 0 : index
    %c0_13 = arith.constant 0 : index
    %21 = vector.load %arg2[%c3, %c0_12, %c0_13] : memref<5x28x256xbf16, #tpu.memory_space<vmem>>, vector<1x28x256xbf16>
    %22 = vector.shape_cast %21 : vector<1x28x256xbf16> to vector<28x256xbf16>
    %cst_14 = arith.constant dense<0.000000e+00> : vector<252x256xf32>
    %23 = tpu.matmul %20, %22, %cst_14 {dimension_numbers = #tpu.dot_dimension_numbers<[1], [0], [0], [1], [0, 0, 1, 1], [], []>} : vector<252x28xbf16>, vector<28x256xbf16>, vector<252x256xf32> -> vector<252x256xf32>
    %24 = arith.addf %18, %23 : vector<252x256xf32>
    %25 = vector.extract_strided_slice %1 {offsets = [4, 0], sizes = [252, 28], strides = [1, 1]} : vector<256x28xf32> to vector<252x28xf32>
    %26 = arith.truncf %25 : vector<252x28xf32> to vector<252x28xbf16>
    %c4 = arith.constant 4 : index
    %c0_15 = arith.constant 0 : index
    %c0_16 = arith.constant 0 : index
    %27 = vector.load %arg2[%c4, %c0_15, %c0_16] : memref<5x28x256xbf16, #tpu.memory_space<vmem>>, vector<1x28x256xbf16>
    %28 = vector.shape_cast %27 : vector<1x28x256xbf16> to vector<28x256xbf16>
    %cst_17 = arith.constant dense<0.000000e+00> : vector<252x256xf32>
    %29 = tpu.matmul %26, %28, %cst_17 {dimension_numbers = #tpu.dot_dimension_numbers<[1], [0], [0], [1], [0, 0, 1, 1], [], []>} : vector<252x28xbf16>, vector<28x256xbf16>, vector<252x256xf32> -> vector<252x256xf32>
    %30 = arith.addf %24, %29 : vector<252x256xf32>
    %31 = vector.extract_strided_slice %0 {offsets = [0, 0], sizes = [1, 128], strides = [1, 1]} : vector<4x128xf32> to vector<1x128xf32>
    %32 = vector.extract_strided_slice %30 {offsets = [0, 0], sizes = [252, 128], strides = [1, 1]} : vector<252x256xf32> to vector<252x128xf32>
    %33 = vector.extract_strided_slice %30 {offsets = [0, 128], sizes = [252, 128], strides = [1, 1]} : vector<252x256xf32> to vector<252x128xf32>
    %34 = arith.maximumf %32, %33 : vector<252x128xf32>
    %35 = vector.extract_strided_slice %34 {offsets = [0, 0], sizes = [251, 128], strides = [1, 1]} : vector<252x128xf32> to vector<251x128xf32>
    %36 = vector.extract_strided_slice %34 {offsets = [1, 0], sizes = [251, 128], strides = [1, 1]} : vector<252x128xf32> to vector<251x128xf32>
    %37 = arith.maximumf %35, %36 : vector<251x128xf32>
    %38 = vector.broadcast %31 : vector<1x128xf32> to vector<251x128xf32>
    %39 = arith.addf %37, %38 : vector<251x128xf32>
    %cst_18 = arith.constant 0.000000e+00 : f32
    %40 = vector.broadcast %cst_18 : f32 to vector<251x128xf32>
    %41 = arith.maximumf %39, %40 : vector<251x128xf32>
    %42 = vector.extract_strided_slice %41 {offsets = [0, 0], sizes = [243, 128], strides = [1, 1]} : vector<251x128xf32> to vector<243x128xf32>
    %43 = arith.truncf %42 : vector<243x128xf32> to vector<243x128xbf16>
    %c0_19 = arith.constant 0 : index
    %c0_20 = arith.constant 0 : index
    %c0_21 = arith.constant 0 : index
    %44 = vector.load %arg3[%c0_19, %c0_20, %c0_21] : memref<5x128x256xbf16, #tpu.memory_space<vmem>>, vector<1x128x256xbf16>
    %45 = vector.shape_cast %44 : vector<1x128x256xbf16> to vector<128x256xbf16>
    %cst_22 = arith.constant dense<0.000000e+00> : vector<243x256xf32>
    %46 = tpu.matmul %43, %45, %cst_22 {dimension_numbers = #tpu.dot_dimension_numbers<[1], [0], [0], [1], [0, 0, 1, 1], [], []>} : vector<243x128xbf16>, vector<128x256xbf16>, vector<243x256xf32> -> vector<243x256xf32>
    %47 = vector.extract_strided_slice %41 {offsets = [2, 0], sizes = [243, 128], strides = [1, 1]} : vector<251x128xf32> to vector<243x128xf32>
    %48 = arith.truncf %47 : vector<243x128xf32> to vector<243x128xbf16>
    %c1_23 = arith.constant 1 : index
    %c0_24 = arith.constant 0 : index
    %c0_25 = arith.constant 0 : index
    %49 = vector.load %arg3[%c1_23, %c0_24, %c0_25] : memref<5x128x256xbf16, #tpu.memory_space<vmem>>, vector<1x128x256xbf16>
    %50 = vector.shape_cast %49 : vector<1x128x256xbf16> to vector<128x256xbf16>
    %cst_26 = arith.constant dense<0.000000e+00> : vector<243x256xf32>
    %51 = tpu.matmul %48, %50, %cst_26 {dimension_numbers = #tpu.dot_dimension_numbers<[1], [0], [0], [1], [0, 0, 1, 1], [], []>} : vector<243x128xbf16>, vector<128x256xbf16>, vector<243x256xf32> -> vector<243x256xf32>
    %52 = arith.addf %46, %51 : vector<243x256xf32>
    %53 = vector.extract_strided_slice %41 {offsets = [4, 0], sizes = [243, 128], strides = [1, 1]} : vector<251x128xf32> to vector<243x128xf32>
    %54 = arith.truncf %53 : vector<243x128xf32> to vector<243x128xbf16>
    %c2_27 = arith.constant 2 : index
    %c0_28 = arith.constant 0 : index
    %c0_29 = arith.constant 0 : index
    %55 = vector.load %arg3[%c2_27, %c0_28, %c0_29] : memref<5x128x256xbf16, #tpu.memory_space<vmem>>, vector<1x128x256xbf16>
    %56 = vector.shape_cast %55 : vector<1x128x256xbf16> to vector<128x256xbf16>
    %cst_30 = arith.constant dense<0.000000e+00> : vector<243x256xf32>
    %57 = tpu.matmul %54, %56, %cst_30 {dimension_numbers = #tpu.dot_dimension_numbers<[1], [0], [0], [1], [0, 0, 1, 1], [], []>} : vector<243x128xbf16>, vector<128x256xbf16>, vector<243x256xf32> -> vector<243x256xf32>
    %58 = arith.addf %52, %57 : vector<243x256xf32>
    %59 = vector.extract_strided_slice %41 {offsets = [6, 0], sizes = [243, 128], strides = [1, 1]} : vector<251x128xf32> to vector<243x128xf32>
    %60 = arith.truncf %59 : vector<243x128xf32> to vector<243x128xbf16>
    %c3_31 = arith.constant 3 : index
    %c0_32 = arith.constant 0 : index
    %c0_33 = arith.constant 0 : index
    %61 = vector.load %arg3[%c3_31, %c0_32, %c0_33] : memref<5x128x256xbf16, #tpu.memory_space<vmem>>, vector<1x128x256xbf16>
    %62 = vector.shape_cast %61 : vector<1x128x256xbf16> to vector<128x256xbf16>
    %cst_34 = arith.constant dense<0.000000e+00> : vector<243x256xf32>
    %63 = tpu.matmul %60, %62, %cst_34 {dimension_numbers = #tpu.dot_dimension_numbers<[1], [0], [0], [1], [0, 0, 1, 1], [], []>} : vector<243x128xbf16>, vector<128x256xbf16>, vector<243x256xf32> -> vector<243x256xf32>
    %64 = arith.addf %58, %63 : vector<243x256xf32>
    %65 = vector.extract_strided_slice %41 {offsets = [8, 0], sizes = [243, 128], strides = [1, 1]} : vector<251x128xf32> to vector<243x128xf32>
    %66 = arith.truncf %65 : vector<243x128xf32> to vector<243x128xbf16>
    %c4_35 = arith.constant 4 : index
    %c0_36 = arith.constant 0 : index
    %c0_37 = arith.constant 0 : index
    %67 = vector.load %arg3[%c4_35, %c0_36, %c0_37] : memref<5x128x256xbf16, #tpu.memory_space<vmem>>, vector<1x128x256xbf16>
    %68 = vector.shape_cast %67 : vector<1x128x256xbf16> to vector<128x256xbf16>
    %cst_38 = arith.constant dense<0.000000e+00> : vector<243x256xf32>
    %69 = tpu.matmul %66, %68, %cst_38 {dimension_numbers = #tpu.dot_dimension_numbers<[1], [0], [0], [1], [0, 0, 1, 1], [], []>} : vector<243x128xbf16>, vector<128x256xbf16>, vector<243x256xf32> -> vector<243x256xf32>
    %70 = arith.addf %64, %69 : vector<243x256xf32>
    %71 = vector.extract_strided_slice %0 {offsets = [1, 0], sizes = [1, 128], strides = [1, 1]} : vector<4x128xf32> to vector<1x128xf32>
    %72 = vector.extract_strided_slice %70 {offsets = [0, 0], sizes = [243, 128], strides = [1, 1]} : vector<243x256xf32> to vector<243x128xf32>
    %73 = vector.extract_strided_slice %70 {offsets = [0, 128], sizes = [243, 128], strides = [1, 1]} : vector<243x256xf32> to vector<243x128xf32>
    %74 = arith.maximumf %72, %73 : vector<243x128xf32>
    %75 = vector.extract_strided_slice %74 {offsets = [0, 0], sizes = [241, 128], strides = [1, 1]} : vector<243x128xf32> to vector<241x128xf32>
    %76 = vector.extract_strided_slice %74 {offsets = [2, 0], sizes = [241, 128], strides = [1, 1]} : vector<243x128xf32> to vector<241x128xf32>
    %77 = arith.maximumf %75, %76 : vector<241x128xf32>
    %78 = vector.broadcast %71 : vector<1x128xf32> to vector<241x128xf32>
    %79 = arith.addf %77, %78 : vector<241x128xf32>
    %cst_39 = arith.constant 0.000000e+00 : f32
    %80 = vector.broadcast %cst_39 : f32 to vector<241x128xf32>
    %81 = arith.maximumf %79, %80 : vector<241x128xf32>
    %82 = vector.extract_strided_slice %81 {offsets = [0, 0], sizes = [233, 128], strides = [1, 1]} : vector<241x128xf32> to vector<233x128xf32>
    %83 = arith.truncf %82 : vector<233x128xf32> to vector<233x128xbf16>
    %c0_40 = arith.constant 0 : index
    %c0_41 = arith.constant 0 : index
    %c0_42 = arith.constant 0 : index
    %84 = vector.load %arg4[%c0_40, %c0_41, %c0_42] : memref<3x128x256xbf16, #tpu.memory_space<vmem>>, vector<1x128x256xbf16>
    %85 = vector.shape_cast %84 : vector<1x128x256xbf16> to vector<128x256xbf16>
    %cst_43 = arith.constant dense<0.000000e+00> : vector<233x256xf32>
    %86 = tpu.matmul %83, %85, %cst_43 {dimension_numbers = #tpu.dot_dimension_numbers<[1], [0], [0], [1], [0, 0, 1, 1], [], []>} : vector<233x128xbf16>, vector<128x256xbf16>, vector<233x256xf32> -> vector<233x256xf32>
    %87 = vector.extract_strided_slice %81 {offsets = [4, 0], sizes = [233, 128], strides = [1, 1]} : vector<241x128xf32> to vector<233x128xf32>
    %88 = arith.truncf %87 : vector<233x128xf32> to vector<233x128xbf16>
    %c1_44 = arith.constant 1 : index
    %c0_45 = arith.constant 0 : index
    %c0_46 = arith.constant 0 : index
    %89 = vector.load %arg4[%c1_44, %c0_45, %c0_46] : memref<3x128x256xbf16, #tpu.memory_space<vmem>>, vector<1x128x256xbf16>
    %90 = vector.shape_cast %89 : vector<1x128x256xbf16> to vector<128x256xbf16>
    %cst_47 = arith.constant dense<0.000000e+00> : vector<233x256xf32>
    %91 = tpu.matmul %88, %90, %cst_47 {dimension_numbers = #tpu.dot_dimension_numbers<[1], [0], [0], [1], [0, 0, 1, 1], [], []>} : vector<233x128xbf16>, vector<128x256xbf16>, vector<233x256xf32> -> vector<233x256xf32>
    %92 = arith.addf %86, %91 : vector<233x256xf32>
    %93 = vector.extract_strided_slice %81 {offsets = [8, 0], sizes = [233, 128], strides = [1, 1]} : vector<241x128xf32> to vector<233x128xf32>
    %94 = arith.truncf %93 : vector<233x128xf32> to vector<233x128xbf16>
    %c2_48 = arith.constant 2 : index
    %c0_49 = arith.constant 0 : index
    %c0_50 = arith.constant 0 : index
    %95 = vector.load %arg4[%c2_48, %c0_49, %c0_50] : memref<3x128x256xbf16, #tpu.memory_space<vmem>>, vector<1x128x256xbf16>
    %96 = vector.shape_cast %95 : vector<1x128x256xbf16> to vector<128x256xbf16>
    %cst_51 = arith.constant dense<0.000000e+00> : vector<233x256xf32>
    %97 = tpu.matmul %94, %96, %cst_51 {dimension_numbers = #tpu.dot_dimension_numbers<[1], [0], [0], [1], [0, 0, 1, 1], [], []>} : vector<233x128xbf16>, vector<128x256xbf16>, vector<233x256xf32> -> vector<233x256xf32>
    %98 = arith.addf %92, %97 : vector<233x256xf32>
    %99 = vector.extract_strided_slice %0 {offsets = [2, 0], sizes = [1, 128], strides = [1, 1]} : vector<4x128xf32> to vector<1x128xf32>
    %100 = vector.extract_strided_slice %98 {offsets = [0, 0], sizes = [233, 128], strides = [1, 1]} : vector<233x256xf32> to vector<233x128xf32>
    %101 = vector.extract_strided_slice %98 {offsets = [0, 128], sizes = [233, 128], strides = [1, 1]} : vector<233x256xf32> to vector<233x128xf32>
    %102 = arith.maximumf %100, %101 : vector<233x128xf32>
    %103 = vector.extract_strided_slice %102 {offsets = [0, 0], sizes = [229, 128], strides = [1, 1]} : vector<233x128xf32> to vector<229x128xf32>
    %104 = vector.extract_strided_slice %102 {offsets = [4, 0], sizes = [229, 128], strides = [1, 1]} : vector<233x128xf32> to vector<229x128xf32>
    %105 = arith.maximumf %103, %104 : vector<229x128xf32>
    %106 = vector.broadcast %99 : vector<1x128xf32> to vector<229x128xf32>
    %107 = arith.addf %105, %106 : vector<229x128xf32>
    %cst_52 = arith.constant 0.000000e+00 : f32
    %108 = vector.broadcast %cst_52 : f32 to vector<229x128xf32>
    %109 = arith.maximumf %107, %108 : vector<229x128xf32>
    %110 = tpu.iota {dimensions = array<i32: 0>} : vector<8x229xi32>
    %111 = tpu.iota {dimensions = array<i32: 1>} : vector<8x229xi32>
    %c32_i32 = arith.constant 32 : i32
    %112 = vector.broadcast %c32_i32 : i32 to vector<8x229xi32>
    %113 = arith.muli %110, %112 : vector<8x229xi32>
    %114 = arith.cmpi eq, %111, %113 : vector<8x229xi32>
    %115 = arith.extui %114 : vector<8x229xi1> to vector<8x229xi32>
    %116 = arith.sitofp %115 : vector<8x229xi32> to vector<8x229xf32>
    %cst_53 = arith.constant dense<0.000000e+00> : vector<8x128xf32>
    %117 = tpu.matmul %116, %109, %cst_53 {dimension_numbers = #tpu.dot_dimension_numbers<[1], [0], [0], [1], [0, 0, 1, 1], [], []>} : vector<8x229xf32>, vector<229x128xf32>, vector<8x128xf32> -> vector<8x128xf32>
    %118 = arith.truncf %117 : vector<8x128xf32> to vector<8x128xbf16>
    %c0_54 = arith.constant 0 : index
    %c0_55 = arith.constant 0 : index
    %119 = vector.load %arg5[%c0_54, %c0_55] : memref<128x128xbf16, #tpu.memory_space<vmem>>, vector<128x128xbf16>
    %cst_56 = arith.constant dense<0.000000e+00> : vector<8x128xf32>
    %120 = tpu.matmul %118, %119, %cst_56 {dimension_numbers = #tpu.dot_dimension_numbers<[1], [0], [0], [1], [0, 0, 1, 1], [], []>} : vector<8x128xbf16>, vector<128x128xbf16>, vector<8x128xf32> -> vector<8x128xf32>
    %121 = vector.extract_strided_slice %0 {offsets = [3, 0], sizes = [1, 128], strides = [1, 1]} : vector<4x128xf32> to vector<1x128xf32>
    %122 = vector.broadcast %121 : vector<1x128xf32> to vector<8x128xf32>
    %123 = arith.addf %120, %122 : vector<8x128xf32>
    %124 = tpu.iota {dimensions = array<i32: 1>} : vector<8x128xi32>
    %c10_i32 = arith.constant 10 : i32
    %125 = vector.broadcast %c10_i32 : i32 to vector<8x128xi32>
    %126 = arith.cmpi slt, %124, %125 : vector<8x128xi32>
    %cst_57 = arith.constant -1.000000e+30 : f32
    %127 = vector.broadcast %cst_57 : f32 to vector<8x128xf32>
    %128 = arith.select %126, %123, %127 : vector<8x128xi1>, vector<8x128xf32>
    %cst_58 = arith.constant dense<0xFF800000> : vector<8xf32>
    %129 = vector.multi_reduction <maximumf>, %128, %cst_58 [1] : vector<8x128xf32> to vector<8xf32>
    %130 = vector.shape_cast %129 : vector<8xf32> to vector<8x1xf32>
    %131 = vector.broadcast %130 : vector<8x1xf32> to vector<8x128xf32>
    %132 = arith.subf %128, %131 : vector<8x128xf32>
    %133 = math.exp %132 : vector<8x128xf32>
    %cst_59 = arith.constant 0.000000e+00 : f32
    %134 = vector.broadcast %cst_59 : f32 to vector<8x128xf32>
    %135 = arith.select %126, %133, %134 : vector<8x128xi1>, vector<8x128xf32>
    %cst_60 = arith.constant dense<0.000000e+00> : vector<8xf32>
    %136 = vector.multi_reduction <add>, %135, %cst_60 [1] : vector<8x128xf32> to vector<8xf32>
    %137 = vector.shape_cast %136 : vector<8xf32> to vector<8x1xf32>
    %138 = math.log %137 : vector<8x1xf32>
    %139 = vector.broadcast %138 : vector<8x1xf32> to vector<8x128xf32>
    %140 = arith.subf %132, %139 : vector<8x128xf32>
    %c0_61 = arith.constant 0 : index
    %c0_62 = arith.constant 0 : index
    %141 = vector.load %arg7[%c0_61, %c0_62] : memref<8x128xf32, #tpu.memory_space<vmem>>, vector<8x128xf32>
    tpu.vector_store %arg7[%c0_61, %c0_62], %140 {strides = array<i32>} : memref<8x128xf32, #tpu.memory_space<vmem>>, vector<8x128xf32>,
    return
  }
  func.func @transform_0(%arg0: i32) -> (i32, i32) {
    %c0_i32 = arith.constant 0 : i32
    %c0_i32_0 = arith.constant 0 : i32
    return %arg0, %c0_i32 : i32, i32
  }
  func.func @transform_1(%arg0: i32) -> (i32, i32, i32) {
    %c0_i32 = arith.constant 0 : i32
    %c0_i32_0 = arith.constant 0 : i32
    %c0_i32_1 = arith.constant 0 : i32
    %c0_i32_2 = arith.constant 0 : i32
    return %c0_i32, %c0_i32_0, %c0_i32_1 : i32, i32, i32
  }
  func.func @transform_2(%arg0: i32) -> (i32, i32, i32) {
    %c0_i32 = arith.constant 0 : i32
    %c0_i32_0 = arith.constant 0 : i32
    %c0_i32_1 = arith.constant 0 : i32
    %c0_i32_2 = arith.constant 0 : i32
    return %c0_i32, %c0_i32_0, %c0_i32_1 : i32, i32, i32
  }
  func.func @transform_3(%arg0: i32) -> (i32, i32, i32) {
    %c0_i32 = arith.constant 0 : i32
    %c0_i32_0 = arith.constant 0 : i32
    %c0_i32_1 = arith.constant 0 : i32
    %c0_i32_2 = arith.constant 0 : i32
    return %c0_i32, %c0_i32_0, %c0_i32_1 : i32, i32, i32
  }
  func.func @transform_4(%arg0: i32) -> (i32, i32) {
    %c0_i32 = arith.constant 0 : i32
    %c0_i32_0 = arith.constant 0 : i32
    %c0_i32_1 = arith.constant 0 : i32
    return %c0_i32, %c0_i32_0 : i32, i32
  }
  func.func @transform_5(%arg0: i32) -> (i32, i32) {
    %c0_i32 = arith.constant 0 : i32
    %c0_i32_0 = arith.constant 0 : i32
    %c0_i32_1 = arith.constant 0 : i32
    return %c0_i32, %c0_i32_0 : i32, i32
  }
  func.func @transform_6(%arg0: i32) -> (i32, i32) {
    %c0_i32 = arith.constant 0 : i32
    %c0_i32_0 = arith.constant 0 : i32
    return %arg0, %c0_i32 : i32, i32
  }
}

</mosaic_0001>

<llo_original>
// kernel: tile.13
$region0: #{tile.13}
  #allocation0 [shape = 's32[1]{0}', space=sflag, size = 0x4, scoped, tag = 'scoped memory for tile.13']
  %s0 = inlined_call_operand.vmem [shape: f32[10], index: 0, kind: input, shape index: {}]
  %s1 = inlined_call_operand.vmem [shape: f32[12,10], index: 1, kind: output, shape index: {}]
  // Predicated region
  $region2: #{tile.13} parent=0 // pred_check
    _
  $region3: #{tile.13} parent=0 // pred_check_branch
    %3 = sbr.rel (0) target = $region5
  $region4: #{tile.13} parent=0 // pred_region
    _
  $region5: #{tile.13} parent=0 // pred_fallthru
    _
  %v4 = vld [vmem:[%s0] ss:$0 sm:$0xff]
  %5 = vst [vmem:[%s1] sm:$0xff] %v4
  %s6 = scalar_lea.vmem %s1, 8
  %7 = vst [vmem:[%s6] sm:$0xff] %v4

// kernel: tile.18
$region0: #{tile.18}
  #allocation0 [shape = 's32[1]{0}', space=sflag, size = 0x4, scoped, tag = 'scoped memory for tile.18']
  %s0 = inlined_call_operand.vmem [shape: f32[20], index: 0, kind: input, shape index: {}]
  %s1 = inlined_call_operand.vmem [shape: f32[4,20], index: 1, kind: output, shape index: {}]
  // Predicated region
  $region2: #{tile.18} parent=0 // pred_check
    _
  $region3: #{tile.18} parent=0 // pred_check_branch
    %3 = sbr.rel (0) target = $region5
  $region4: #{tile.18} parent=0 // pred_region
    _
  $region5: #{tile.18} parent=0 // pred_fallthru
    _
  %v4 = vld [vmem:[%s0] ss:$0 sm:$0xff]
  %5 = vst [vmem:[%s1] sm:$0xf] %v4

// kernel: tile.14
$region0: #{tile.14}
  %s0 = inlined_call_operand.vmem [shape: f32[12,10], index: 0, kind: input, shape index: {}]
  %s1 = inlined_call_operand.vmem [shape: f32[120], index: 1, kind: output, shape index: {}]
  $region1: #{tile.14} parent=0
    #allocation0 [shape = 'u8[4096]{0}', space=vmem, size = 0x1000, scoped, tag = 'scoped mem for output reshape']
    %v2 = vld [vmem:[%s0] sm:$0x1]
    %vm3 = vcmask 80896
    %4 = vst.msk [vmem:[#allocation0] sm:$0x1] %vm3, %v2
    %s5 = scalar_lea.vmem %s0, 11
    %v6 = vld [vmem:[%s5] sm:$0x1]
    %7 = vrot.lane.b32.xlu0 %v6, 110
    %v8 = vpop.permute.xlu0 %7
    %vm9 = vcmask 982896
    %10 = vst.msk [vmem:[#allocation0] sm:$0x1] %vm9, %v8
    %s11 = scalar_lea.vmem %s0, 10
    %v12 = vld [vmem:[%s11] sm:$0x1]
    %13 = vrot.lane.b32.xlu0 %v12, 100
    %v14 = vpop.permute.xlu0 %13
    %vm15 = vcmask 900896
    %16 = vst.msk [vmem:[#allocation0] sm:$0x1] %vm15, %v14
    %s17 = scalar_lea.vmem %s0, 9
    %v18 = vld [vmem:[%s17] sm:$0x1]
    %19 = vrot.lane.b32.xlu0 %v18, 90
    %v20 = vpop.permute.xlu0 %19
    %vm21 = vcmask 818896
    %22 = vst.msk [vmem:[#allocation0] sm:$0x1] %vm21, %v20
    %s23 = scalar_lea.vmem %s0, 8
    %v24 = vld [vmem:[%s23] sm:$0x1]
    %25 = vrot.lane.b32.xlu0 %v24, 80
    %v26 = vpop.permute.xlu0 %25
    %vm27 = vcmask 736896
    %28 = vst.msk [vmem:[#allocation0] sm:$0x1] %vm27, %v26
    %s29 = scalar_lea.vmem %s0, 7
    %v30 = vld [vmem:[%s29] sm:$0x1]
    %31 = vrot.lane.b32.xlu0 %v30, 70
    %v32 = vpop.permute.xlu0 %31
    %vm33 = vcmask 654896
    %34 = vst.msk [vmem:[#allocation0] sm:$0x1] %vm33, %v32
    %s35 = scalar_lea.vmem %s0, 6
    %v36 = vld [vmem:[%s35] sm:$0x1]
    %37 = vrot.lane.b32.xlu0 %v36, 60
    %v38 = vpop.permute.xlu0 %37
    %vm39 = vcmask 572896
    %40 = vst.msk [vmem:[#allocation0] sm:$0x1] %vm39, %v38
    %s41 = scalar_lea.vmem %s0, 5
    %v42 = vld [vmem:[%s41] sm:$0x1]
    %43 = vrot.lane.b32.xlu0 %v42, 50
    %v44 = vpop.permute.xlu0 %43
    %vm45 = vcmask 490896
    %46 = vst.msk [vmem:[#allocation0] sm:$0x1] %vm45, %v44
    %s47 = scalar_lea.vmem %s0, 4
    %v48 = vld [vmem:[%s47] sm:$0x1]
    %49 = vrot.lane.b32.xlu0 %v48, 40
    %v50 = vpop.permute.xlu0 %49
    %vm51 = vcmask 408896
    %52 = vst.msk [vmem:[#allocation0] sm:$0x1] %vm51, %v50
    %s53 = scalar_lea.vmem %s0, 3
    %v54 = vld [vmem:[%s53] sm:$0x1]
    %55 = vrot.lane.b32.xlu0 %v54, 30
    %v56 = vpop.permute.xlu0 %55
    %vm57 = vcmask 326896
    %58 = vst.msk [vmem:[#allocation0] sm:$0x1] %vm57, %v56
    %s59 = scalar_lea.vmem %s0, 2
    %v60 = vld [vmem:[%s59] sm:$0x1]
    %61 = vrot.lane.b32.xlu0 %v60, 20
    %v62 = vpop.permute.xlu0 %61
    %vm63 = vcmask 244896
    %64 = vst.msk [vmem:[#allocation0] sm:$0x1] %vm63, %v62
    %s65 = scalar_lea.vmem %s0, 1
    %v66 = vld [vmem:[%s65] sm:$0x1]
    %67 = vrot.lane.b32.xlu0 %v66, 10
    %v68 = vpop.permute.xlu0 %67
    %vm69 = vcmask 162896
    %70 = vst.msk [vmem:[#allocation0] sm:$0x1] %vm69, %v68
    %s72 = sshllo.u32 0, 1
    %v74 = vld [vmem:[#allocation0] sm:%s72]
    %s75 = sshllo.u32 0, 1
    %76 = vst [vmem:[%s1] sm:%s75] %v74

// kernel: tile.19
$region0: #{tile.19}
  %s0 = inlined_call_operand.vmem [shape: f32[4,20], index: 0, kind: input, shape index: {}]
  %s1 = inlined_call_operand.vmem [shape: f32[80], index: 1, kind: output, shape index: {}]
  $region1: #{tile.19} parent=0
    #allocation0 [shape = 'u8[4096]{0}', space=vmem, size = 0x1000, scoped, tag = 'scoped mem for output reshape']
    #allocation1 [shape = 'u8[4096]{0}', space=vmem, size = 0x1000, scoped, tag = 'scoped mem for input reshape']
    %s3 = sshllo.u32 0, 4
    %v4 = vld [vmem:[%s0] sm:%s3]
    %5 = vst [vmem:[#allocation1] sm:%s3] %v4
    %v6 = vld [vmem:[#allocation1] sm:$0x1]
    %vm7 = vcmask 162816
    %8 = vst.msk [vmem:[#allocation0] sm:$0x1] %vm7, %v6
    %s9 = scalar_lea.vmem [#allocation1], 3
    %v10 = vld [vmem:[%s9] sm:$0x1]
    %11 = vrot.lane.b32.xlu0 %v10, 60
    %v12 = vpop.permute.xlu0 %11
    %vm13 = vcmask 654816
    %14 = vst.msk [vmem:[#allocation0] sm:$0x1] %vm13, %v12
    %s15 = scalar_lea.vmem [#allocation1], 2
    %v16 = vld [vmem:[%s15] sm:$0x1]
    %17 = vrot.lane.b32.xlu0 %v16, 40
    %v18 = vpop.permute.xlu0 %17
    %vm19 = vcmask 490816
    %20 = vst.msk [vmem:[#allocation0] sm:$0x1] %vm19, %v18
    %s21 = scalar_lea.vmem [#allocation1], 1
    %v22 = vld [vmem:[%s21] sm:$0x1]
    %23 = vrot.lane.b32.xlu0 %v22, 20
    %v24 = vpop.permute.xlu0 %23
    %vm25 = vcmask 326816
    %26 = vst.msk [vmem:[#allocation0] sm:$0x1] %vm25, %v24
    %s28 = sshllo.u32 0, 1
    %v30 = vld [vmem:[#allocation0] sm:%s28]
    %s31 = sshllo.u32 0, 1
    %32 = vst [vmem:[%s1] sm:%s31] %v30

// kernel: net_forward.1
$region0: #{net_forward.1}
  #allocation0 [shape = 'u32[]', space=smem, size = 0x4, offset = 0x4, fixed_abs, tag = 'smem constant byte address 0x4 - core index']
  #allocation1 [shape = 'u32[144,128]{1,0:T(1,128)}', space=vmem, size = 0x12000, scoped, tag = 'internal scratch']
  %s0 = inlined_call_operand.vmem [shape: f32[256,28], index: 0, kind: input, shape index: {}]
  %s1 = inlined_call_operand.vmem [shape: bf16[5,28,256], index: 1, kind: input, shape index: {}]
  %s2 = inlined_call_operand.vmem [shape: bf16[5,128,256], index: 2, kind: input, shape index: {}]
  %s3 = inlined_call_operand.vmem [shape: bf16[3,128,256], index: 3, kind: input, shape index: {}]
  %s4 = inlined_call_operand.vmem [shape: bf16[128,128], index: 4, kind: input, shape index: {}]
  %s5 = inlined_call_operand.vmem [shape: f32[4,128], index: 5, kind: input, shape index: {}]
  %s6 = inlined_call_operand.vmem [shape: f32[8,128], index: 6, kind: output, shape index: {}]
  %s7 = sld [smem:[#allocation0]]
  $region34: #{net_forward.1} parent=0
    _
  %s9 = ssub.s32 1, %s7
  %s10 = scalar_select 0, %s9, %s7
  // Predicated region
  $region2: #{net_forward.1} parent=0 // pred_check
    _
  $region3: #{net_forward.1} parent=0 // pred_check_branch
    %12 = sbr.rel (0) target = $region5
  $region4: #{net_forward.1} parent=0 // pred_region
    _
  $region5: #{net_forward.1} parent=0 // pred_fallthru
    _
  // Predicated region
  $region6: #{net_forward.1} parent=0 // pred_check
    _
  $region7: #{net_forward.1} parent=0 // pred_check_branch
    %14 = sbr.rel (0) target = $region9
  $region8: #{net_forward.1} parent=0 // pred_region
    _
  $region9: #{net_forward.1} parent=0 // pred_fallthru
    _
  // Predicated region
  $region10: #{net_forward.1} parent=0 // pred_check
    _
  $region11: #{net_forward.1} parent=0 // pred_check_branch
    %16 = sbr.rel (0) target = $region13
  $region12: #{net_forward.1} parent=0 // pred_region
    _
  $region13: #{net_forward.1} parent=0 // pred_fallthru
    _
  // Predicated region
  $region14: #{net_forward.1} parent=0 // pred_check
    _
  $region15: #{net_forward.1} parent=0 // pred_check_branch
    %18 = sbr.rel (0) target = $region17
  $region16: #{net_forward.1} parent=0 // pred_region
    _
  $region17: #{net_forward.1} parent=0 // pred_fallthru
    _
  // Predicated region
  $region18: #{net_forward.1} parent=0 // pred_check
    _
  $region19: #{net_forward.1} parent=0 // pred_check_branch
    %20 = sbr.rel (0) target = $region21
  $region20: #{net_forward.1} parent=0 // pred_region
    _
  $region21: #{net_forward.1} parent=0 // pred_fallthru
    _
  // Predicated region
  $region22: #{net_forward.1} parent=0 // pred_check
    _
  $region23: #{net_forward.1} parent=0 // pred_check_branch
    %22 = sbr.rel (0) target = $region25
  $region24: #{net_forward.1} parent=0 // pred_region
    _
  $region25: #{net_forward.1} parent=0 // pred_fallthru
    _
  %v24 = vld [vmem:[%s5] sm:$0xf]
  %v25 = vld [vmem:[%s0] sm:$0xff]
  %v26 = vld [vmem:[%s0 + $0x8] sm:$0xff]
  %v27 = vld [vmem:[%s0 + $0x10] sm:$0xff]
  %v28 = vld [vmem:[%s0 + $0x18] sm:$0xff]
  %v29 = vld [vmem:[%s0 + $0x20] sm:$0xff]
  %v30 = vld [vmem:[%s0 + $0x28] sm:$0xff]
  %v31 = vld [vmem:[%s0 + $0x30] sm:$0xff]
  %v32 = vld [vmem:[%s0 + $0x38] sm:$0xff]
  %v33 = vld [vmem:[%s0 + $0x40] sm:$0xff]
  %v34 = vld [vmem:[%s0 + $0x48] sm:$0xff]
  %v35 = vld [vmem:[%s0 + $0x50] sm:$0xff]
  %v36 = vld [vmem:[%s0 + $0x58] sm:$0xff]
  %v37 = vld [vmem:[%s0 + $0x60] sm:$0xff]
  %v38 = vld [vmem:[%s0 + $0x68] sm:$0xff]
  %v39 = vld [vmem:[%s0 + $0x70] sm:$0xff]
  %v40 = vld [vmem:[%s0 + $0x78] sm:$0xff]
  %v41 = vld [vmem:[%s0 + $0x80] sm:$0xff]
  %v42 = vld [vmem:[%s0 + $0x88] sm:$0xff]
  %v43 = vld [vmem:[%s0 + $0x90] sm:$0xff]
  %v44 = vld [vmem:[%s0 + $0x98] sm:$0xff]
  %v45 = vld [vmem:[%s0 + $0xa0] sm:$0xff]
  %v46 = vld [vmem:[%s0 + $0xa8] sm:$0xff]
  %v47 = vld [vmem:[%s0 + $0xb0] sm:$0xff]
  %v48 = vld [vmem:[%s0 + $0xb8] sm:$0xff]
  %v49 = vld [vmem:[%s0 + $0xc0] sm:$0xff]
  %v50 = vld [vmem:[%s0 + $0xc8] sm:$0xff]
  %v51 = vld [vmem:[%s0 + $0xd0] sm:$0xff]
  %v52 = vld [vmem:[%s0 + $0xd8] sm:$0xff]
  %v53 = vld [vmem:[%s0 + $0xe0] sm:$0xff]
  %v54 = vld [vmem:[%s0 + $0xe8] sm:$0xff]
  %v55 = vld [vmem:[%s0 + $0xf0] sm:$0xff]
  %v56 = vld [vmem:[%s0 + $0xf8] sm:$0xff]
  %v57 = vpack.c.bf16 %v26, %v25
  %v58 = vpack.c.bf16 %v28, %v27
  %v59 = vpack.c.bf16 %v30, %v29
  %v60 = vpack.c.bf16 %v32, %v31
  %v61 = vpack.c.bf16 %v34, %v33
  %v62 = vpack.c.bf16 %v36, %v35
  %v63 = vpack.c.bf16 %v38, %v37
  %v64 = vpack.c.bf16 %v40, %v39
  %v65 = vpack.c.bf16 %v42, %v41
  %v66 = vpack.c.bf16 %v44, %v43
  %v67 = vpack.c.bf16 %v46, %v45
  %v68 = vpack.c.bf16 %v48, %v47
  %v69 = vpack.c.bf16 %v50, %v49
  %v70 = vpack.c.bf16 %v52, %v51
  %v71 = vpack.c.bf16 %v54, %v53
  %v72 = vpack.c.bf16 %v56, %v55
  %v73 = vld [vmem:[%s1] sm:$0xff]
  %v74 = vld [vmem:[%s1 + $0x8] sm:$0xff]
  %v75 = vld [vmem:[%s1 + $0x10] sm:$0xff]
  %v76 = vld [vmem:[%s1 + $0x18] sm:$0x33]
  %s77 = scalar_lea.vmem %s1, 32
  %v78 = vld [vmem:[%s77] sm:$0xff]
  %v79 = vld [vmem:[%s77 + $0x8] sm:$0xff]
  %v80 = vld [vmem:[%s77 + $0x10] sm:$0xff]
  %v81 = vld [vmem:[%s77 + $0x18] sm:$0x33]
  %vm82 = vsmask.f32 7424
  %v84 = vshrl.u32 %v57, 16
  %v86 = vshll.u32 %v57, 16
  %v88 = vrot.slane %v86, 1
  %v89 = vor.u32 %v84, %v88
  %v91 = vshll.u32 %v58, 16
  %v93 = vrot.slane %v91, 1
  %v94 = vsel %vm82, %v89, %v93
  %v95 = vshrl.u32 %v58, 16
  %v97 = vor.u32 %v95, %v93
  %v99 = vshll.u32 %v59, 16
  %v101 = vrot.slane %v99, 1
  %v102 = vsel %vm82, %v97, %v101
  %v103 = vshrl.u32 %v59, 16
  %v105 = vor.u32 %v103, %v101
  %v107 = vshll.u32 %v60, 16
  %v109 = vrot.slane %v107, 1
  %v110 = vsel %vm82, %v105, %v109
  %v111 = vshrl.u32 %v60, 16
  %v113 = vor.u32 %v111, %v109
  %v115 = vshll.u32 %v61, 16
  %v117 = vrot.slane %v115, 1
  %v118 = vsel %vm82, %v113, %v117
  %v119 = vshrl.u32 %v61, 16
  %v121 = vor.u32 %v119, %v117
  %v123 = vshll.u32 %v62, 16
  %v125 = vrot.slane %v123, 1
  %v126 = vsel %vm82, %v121, %v125
  %v127 = vshrl.u32 %v62, 16
  %v129 = vor.u32 %v127, %v125
  %v131 = vshll.u32 %v63, 16
  %v133 = vrot.slane %v131, 1
  %v134 = vsel %vm82, %v129, %v133
  %v135 = vshrl.u32 %v63, 16
  %v137 = vor.u32 %v135, %v133
  %v139 = vshll.u32 %v64, 16
  %v141 = vrot.slane %v139, 1
  %v142 = vsel %vm82, %v137, %v141
  %v143 = vshrl.u32 %v64, 16
  %v145 = vor.u32 %v143, %v141
  %v147 = vshll.u32 %v65, 16
  %v149 = vrot.slane %v147, 1
  %v150 = vsel %vm82, %v145, %v149
  %v151 = vshrl.u32 %v65, 16
  %v153 = vor.u32 %v151, %v149
  %v155 = vshll.u32 %v66, 16
  %v157 = vrot.slane %v155, 1
  %v158 = vsel %vm82, %v153, %v157
  %v159 = vshrl.u32 %v66, 16
  %v161 = vor.u32 %v159, %v157
  %v163 = vshll.u32 %v67, 16
  %v165 = vrot.slane %v163, 1
  %v166 = vsel %vm82, %v161, %v165
  %v167 = vshrl.u32 %v67, 16
  %v169 = vor.u32 %v167, %v165
  %v171 = vshll.u32 %v68, 16
  %v173 = vrot.slane %v171, 1
  %v174 = vsel %vm82, %v169, %v173
  %v175 = vshrl.u32 %v68, 16
  %v177 = vor.u32 %v175, %v173
  %v179 = vshll.u32 %v69, 16
  %v181 = vrot.slane %v179, 1
  %v182 = vsel %vm82, %v177, %v181
  %v183 = vshrl.u32 %v69, 16
  %v185 = vor.u32 %v183, %v181
  %v187 = vshll.u32 %v70, 16
  %v189 = vrot.slane %v187, 1
  %v190 = vsel %vm82, %v185, %v189
  %v191 = vshrl.u32 %v70, 16
  %v193 = vor.u32 %v191, %v189
  %v195 = vshll.u32 %v71, 16
  %v197 = vrot.slane %v195, 1
  %v198 = vsel %vm82, %v193, %v197
  %v199 = vshrl.u32 %v71, 16
  %v201 = vor.u32 %v199, %v197
  %v203 = vshll.u32 %v72, 16
  %v205 = vrot.slane %v203, 1
  %v206 = vsel %vm82, %v201, %v205
  %v207 = vshrl.u32 %v72, 16
  %v209 = vor.u32 %v207, %v205
  %v214 = vunpack.c.l.b16 %v78
  %v215 = vunpack.c.h.b16 %v78
  %v216 = vunpack.c.l.b16 %v79
  %v217 = vunpack.c.h.b16 %v79
  %v218 = vunpack.c.l.b16 %v80
  %v219 = vunpack.c.h.b16 %v80
  %v220 = vunpack.c.l.b16 %v81
  %v221 = vunpack.c.h.b16 %v81
  %v222 = vpack.c.b16 %v216, %v214
  %v223 = vpack.c.b16 %v217, %v215
  %v224 = vpack.c.b16 %v220, %v218
  %v225 = vpack.c.b16 %v221, %v219
  %vm228 = vcmask 228352
  %v230 = vsel %vm228, %v94, 0
  %v233 = vsel %vm228, %v102, 0
  %v236 = vsel %vm228, %v110, 0
  %v239 = vsel %vm228, %v118, 0
  %v242 = vsel %vm228, %v126, 0
  %v245 = vsel %vm228, %v134, 0
  %v248 = vsel %vm228, %v142, 0
  %v251 = vsel %vm228, %v150, 0
  %v254 = vsel %vm228, %v158, 0
  %v257 = vsel %vm228, %v166, 0
  %v260 = vsel %vm228, %v174, 0
  %v263 = vsel %vm228, %v182, 0
  %v266 = vsel %vm228, %v190, 0
  %v269 = vsel %vm228, %v198, 0
  %v272 = vsel %vm228, %v206, 0
  %v275 = vsel %vm228, %v209, 0
  %vm277 = vcmask 1045504
  %v279 = vsel %vm277, %v224, 0
  %v282 = vsel %vm277, %v225, 0
  %284 = vmatprep.subr.bf16.mxu0 %v223
  %285 = vmatpush1.bf16.msra.mxu0 %v222
  %286 = vmatprep.subr.bf16.mxu0 %v282
  %287 = vmatpush1.bf16.msra.mxu0 %v279
  %288 = vmatprep.subr.bf16.mxu0 0
  %289 = vmatpush1.bf16.msra.mxu0 0
  %290 = vmatprep.subr.bf16.mxu0 0
  %291 = vmatpush1.bf16.msra.mxu0 0
  %292 = vmatprep.subr.bf16.mxu0 0
  %293 = vmatpush1.bf16.msra.mxu0 0
  %294 = vmatprep.subr.bf16.mxu0 0
  %295 = vmatpush1.bf16.msra.mxu0 0
  %296 = vmatprep.subr.bf16.mxu0 0
  %297 = vmatpush1.bf16.msra.mxu0 0
  %298 = vmatprep.subr.bf16.mxu0 0
  %299 = vmatpush1.bf16.msra.mxu0 0
  %300 = vmatprep.subr.bf16.mxu0 0
  %301 = vmatpush1.bf16.msra.mxu0 0
  %302 = vmatprep.subr.bf16.mxu0 0
  %303 = vmatpush1.bf16.msra.mxu0 0
  %304 = vmatprep.subr.bf16.mxu0 0
  %305 = vmatpush1.bf16.msra.mxu0 0
  %306 = vmatprep.subr.bf16.mxu0 0
  %307 = vmatpush1.bf16.msra.mxu0 0
  %308 = vmatprep.subr.bf16.mxu0 0
  %309 = vmatpush1.bf16.msra.mxu0 0
  %310 = vmatprep.subr.bf16.mxu0 0
  %311 = vmatpush1.bf16.msra.mxu0 0
  %312 = vmatprep.subr.bf16.mxu0 0
  %313 = vmatpush1.bf16.msra.mxu0 0
  %314 = vmatprep.subr.bf16.mxu0 0
  %315 = vmatpush1.bf16.msra.mxu0 0
  %316 = vmatprep.mubr.bf16.mxu0 0
  %317 = vmatmul.mubr.bf16.gmra.mrb[0].mxu0 %v230
  %v318 = vpop.f32.mrb[0].mxu0
  %v319 = vadd.f32 0.0, %v318
  %v320 = vpop.f32.mrb[0].mxu0
  %v321 = vadd.f32 0.0, %v320
  %v322 = vpop.f32.mrb[0].mxu0
  %v323 = vadd.f32 0.0, %v322
  %v324 = vpop.f32.mrb[0].mxu0
  %v325 = vadd.f32 0.0, %v324
  %326 = vmatprep.mubr.bf16.mxu0 0
  %327 = vmatmul.mubr.bf16.gmra.mrb[0].mxu0 %v233
  %v328 = vpop.f32.mrb[0].mxu0
  %v329 = vadd.f32 0.0, %v328
  %v330 = vpop.f32.mrb[0].mxu0
  %v331 = vadd.f32 0.0, %v330
  %v332 = vpop.f32.mrb[0].mxu0
  %v333 = vadd.f32 0.0, %v332
  %v334 = vpop.f32.mrb[0].mxu0
  %v335 = vadd.f32 0.0, %v334
  %336 = vmatprep.mubr.bf16.mxu0 0
  %337 = vmatmul.mubr.bf16.gmra.mrb[0].mxu0 %v236
  %v338 = vpop.f32.mrb[0].mxu0
  %v339 = vadd.f32 0.0, %v338
  %v340 = vpop.f32.mrb[0].mxu0
  %v341 = vadd.f32 0.0, %v340
  %v342 = vpop.f32.mrb[0].mxu0
  %v343 = vadd.f32 0.0, %v342
  %v344 = vpop.f32.mrb[0].mxu0
  %v345 = vadd.f32 0.0, %v344
  %346 = vmatprep.mubr.bf16.mxu0 0
  %347 = vmatmul.mubr.bf16.gmra.mrb[0].mxu0 %v239
  %v348 = vpop.f32.mrb[0].mxu0
  %v349 = vadd.f32 0.0, %v348
  %v350 = vpop.f32.mrb[0].mxu0
  %v351 = vadd.f32 0.0, %v350
  %v352 = vpop.f32.mrb[0].mxu0
  %v353 = vadd.f32 0.0, %v352
  %v354 = vpop.f32.mrb[0].mxu0
  %v355 = vadd.f32 0.0, %v354
  %356 = vmatprep.mubr.bf16.mxu0 0
  %357 = vmatmul.mubr.bf16.gmra.mrb[0].mxu0 %v242
  %v358 = vpop.f32.mrb[0].mxu0
  %v359 = vadd.f32 0.0, %v358
  %v360 = vpop.f32.mrb[0].mxu0
  %v361 = vadd.f32 0.0, %v360
  %v362 = vpop.f32.mrb[0].mxu0
  %v363 = vadd.f32 0.0, %v362
  %v364 = vpop.f32.mrb[0].mxu0
  %v365 = vadd.f32 0.0, %v364
  %366 = vmatprep.mubr.bf16.mxu0 0
  %367 = vmatmul.mubr.bf16.gmra.mrb[0].mxu0 %v245
  %v368 = vpop.f32.mrb[0].mxu0
  %v369 = vadd.f32 0.0, %v368
  %v370 = vpop.f32.mrb[0].mxu0
  %v371 = vadd.f32 0.0, %v370
  %v372 = vpop.f32.mrb[0].mxu0
  %v373 = vadd.f32 0.0, %v372
  %v374 = vpop.f32.mrb[0].mxu0
  %v375 = vadd.f32 0.0, %v374
  %376 = vmatprep.mubr.bf16.mxu0 0
  %377 = vmatmul.mubr.bf16.gmra.mrb[0].mxu0 %v248
  %v378 = vpop.f32.mrb[0].mxu0
  %v379 = vadd.f32 0.0, %v378
  %v380 = vpop.f32.mrb[0].mxu0
  %v381 = vadd.f32 0.0, %v380
  %v382 = vpop.f32.mrb[0].mxu0
  %v383 = vadd.f32 0.0, %v382
  %v384 = vpop.f32.mrb[0].mxu0
  %v385 = vadd.f32 0.0, %v384
  %386 = vmatprep.mubr.bf16.mxu0 0
  %387 = vmatmul.mubr.bf16.gmra.mrb[0].mxu0 %v251
  %v388 = vpop.f32.mrb[0].mxu0
  %v389 = vadd.f32 0.0, %v388
  %v390 = vpop.f32.mrb[0].mxu0
  %v391 = vadd.f32 0.0, %v390
  %v392 = vpop.f32.mrb[0].mxu0
  %v393 = vadd.f32 0.0, %v392
  %v394 = vpop.f32.mrb[0].mxu0
  %v395 = vadd.f32 0.0, %v394
  %396 = vmatprep.mubr.bf16.mxu0 0
  %397 = vmatmul.mubr.bf16.gmra.mrb[0].mxu0 %v254
  %v398 = vpop.f32.mrb[0].mxu0
  %v399 = vadd.f32 0.0, %v398
  %v400 = vpop.f32.mrb[0].mxu0
  %v401 = vadd.f32 0.0, %v400
  %v402 = vpop.f32.mrb[0].mxu0
  %v403 = vadd.f32 0.0, %v402
  %v404 = vpop.f32.mrb[0].mxu0
  %v405 = vadd.f32 0.0, %v404
  %406 = vmatprep.mubr.bf16.mxu0 0
  %407 = vmatmul.mubr.bf16.gmra.mrb[0].mxu0 %v257
  %v408 = vpop.f32.mrb[0].mxu0
  %v409 = vadd.f32 0.0, %v408
  %v410 = vpop.f32.mrb[0].mxu0
  %v411 = vadd.f32 0.0, %v410
  %v412 = vpop.f32.mrb[0].mxu0
  %v413 = vadd.f32 0.0, %v412
  %v414 = vpop.f32.mrb[0].mxu0
  %v415 = vadd.f32 0.0, %v414
  %416 = vmatprep.mubr.bf16.mxu0 0
  %417 = vmatmul.mubr.bf16.gmra.mrb[0].mxu0 %v260
  %v418 = vpop.f32.mrb[0].mxu0
  %v419 = vadd.f32 0.0, %v418
  %v420 = vpop.f32.mrb[0].mxu0
  %v421 = vadd.f32 0.0, %v420
  %v422 = vpop.f32.mrb[0].mxu0
  %v423 = vadd.f32 0.0, %v422
  %v424 = vpop.f32.mrb[0].mxu0
  %v425 = vadd.f32 0.0, %v424
  %426 = vmatprep.mubr.bf16.mxu0 0
  %427 = vmatmul.mubr.bf16.gmra.mrb[0].mxu0 %v263
  %v428 = vpop.f32.mrb[0].mxu0
  %v429 = vadd.f32 0.0, %v428
  %v430 = vpop.f32.mrb[0].mxu0
  %v431 = vadd.f32 0.0, %v430
  %v432 = vpop.f32.mrb[0].mxu0
  %v433 = vadd.f32 0.0, %v432
  %v434 = vpop.f32.mrb[0].mxu0
  %v435 = vadd.f32 0.0, %v434
  %436 = vmatprep.mubr.bf16.mxu0 0
  %437 = vmatmul.mubr.bf16.gmra.mrb[0].mxu0 %v266
  %v438 = vpop.f32.mrb[0].mxu0
  %v439 = vadd.f32 0.0, %v438
  %v440 = vpop.f32.mrb[0].mxu0
  %v441 = vadd.f32 0.0, %v440
  %v442 = vpop.f32.mrb[0].mxu0
  %v443 = vadd.f32 0.0, %v442
  %v444 = vpop.f32.mrb[0].mxu0
  %v445 = vadd.f32 0.0, %v444
  %446 = vmatprep.mubr.bf16.mxu0 0
  %447 = vmatmul.mubr.bf16.gmra.mrb[0].mxu0 %v269
  %v448 = vpop.f32.mrb[0].mxu0
  %v449 = vadd.f32 0.0, %v448
  %v450 = vpop.f32.mrb[0].mxu0
  %v451 = vadd.f32 0.0, %v450
  %v452 = vpop.f32.mrb[0].mxu0
  %v453 = vadd.f32 0.0, %v452
  %v454 = vpop.f32.mrb[0].mxu0
  %v455 = vadd.f32 0.0, %v454
  %456 = vmatprep.mubr.bf16.mxu0 0
  %457 = vmatmul.mubr.bf16.gmra.mrb[0].mxu0 %v272
  %v458 = vpop.f32.mrb[0].mxu0
  %v459 = vadd.f32 0.0, %v458
  %v460 = vpop.f32.mrb[0].mxu0
  %v461 = vadd.f32 0.0, %v460
  %v462 = vpop.f32.mrb[0].mxu0
  %v463 = vadd.f32 0.0, %v462
  %v464 = vpop.f32.mrb[0].mxu0
  %v465 = vadd.f32 0.0, %v464
  %466 = vmatprep.mubr.bf16.mxu0 0
  %467 = vmatmul.mubr.bf16.gmra.mrb[0].mxu0 %v275
  %v468 = vpop.f32.mrb[0].mxu0
  %v469 = vadd.f32 0.0, %v468
  %v470 = vpop.f32.mrb[0].mxu0
  %v471 = vadd.f32 0.0, %v470
  %v472 = vpop.f32.mrb[0].mxu0
  %v473 = vadd.f32 0.0, %v472
  %v474 = vpop.f32.mrb[0].mxu0
  %v475 = vadd.f32 0.0, %v474
  %476 = vdwg.mxu0
  %v481 = vunpack.c.l.b16 %v73
  %v482 = vunpack.c.h.b16 %v73
  %v483 = vunpack.c.l.b16 %v74
  %v484 = vunpack.c.h.b16 %v74
  %v485 = vunpack.c.l.b16 %v75
  %v486 = vunpack.c.h.b16 %v75
  %v487 = vunpack.c.l.b16 %v76
  %v488 = vunpack.c.h.b16 %v76
  %v489 = vpack.c.b16 %v483, %v481
  %v490 = vpack.c.b16 %v484, %v482
  %v491 = vpack.c.b16 %v487, %v485
  %v492 = vpack.c.b16 %v488, %v486
  %v495 = vsel %vm228, %v57, 0
  %v497 = vsel %vm228, %v58, 0
  %v499 = vsel %vm228, %v59, 0
  %v501 = vsel %vm228, %v60, 0
  %v503 = vsel %vm228, %v61, 0
  %v505 = vsel %vm228, %v62, 0
  %v507 = vsel %vm228, %v63, 0
  %v509 = vsel %vm228, %v64, 0
  %v511 = vsel %vm228, %v65, 0
  %v513 = vsel %vm228, %v66, 0
  %v515 = vsel %vm228, %v67, 0
  %v517 = vsel %vm228, %v68, 0
  %v519 = vsel %vm228, %v69, 0
  %v521 = vsel %vm228, %v70, 0
  %v523 = vsel %vm228, %v71, 0
  %v525 = vsel %vm228, %v72, 0
  %v528 = vsel %vm277, %v491, 0
  %v531 = vsel %vm277, %v492, 0
  %533 = vmatprep.subr.bf16.mxu0 %v490
  %534 = vmatpush1.bf16.msra.mxu0 %v489
  %535 = vmatprep.subr.bf16.mxu0 %v531
  %536 = vmatpush1.bf16.msra.mxu0 %v528
  %537 = vmatprep.subr.bf16.mxu0 0
  %538 = vmatpush1.bf16.msra.mxu0 0
  %539 = vmatprep.subr.bf16.mxu0 0
  %540 = vmatpush1.bf16.msra.mxu0 0
  %541 = vmatprep.subr.bf16.mxu0 0
  %542 = vmatpush1.bf16.msra.mxu0 0
  %543 = vmatprep.subr.bf16.mxu0 0
  %544 = vmatpush1.bf16.msra.mxu0 0
  %545 = vmatprep.subr.bf16.mxu0 0
  %546 = vmatpush1.bf16.msra.mxu0 0
  %547 = vmatprep.subr.bf16.mxu0 0
  %548 = vmatpush1.bf16.msra.mxu0 0
  %549 = vmatprep.subr.bf16.mxu0 0
  %550 = vmatpush1.bf16.msra.mxu0 0
  %551 = vmatprep.subr.bf16.mxu0 0
  %552 = vmatpush1.bf16.msra.mxu0 0
  %553 = vmatprep.subr.bf16.mxu0 0
  %554 = vmatpush1.bf16.msra.mxu0 0
  %555 = vmatprep.subr.bf16.mxu0 0
  %556 = vmatpush1.bf16.msra.mxu0 0
  %557 = vmatprep.subr.bf16.mxu0 0
  %558 = vmatpush1.bf16.msra.mxu0 0
  %559 = vmatprep.subr.bf16.mxu0 0
  %560 = vmatpush1.bf16.msra.mxu0 0
  %561 = vmatprep.subr.bf16.mxu0 0
  %562 = vmatpush1.bf16.msra.mxu0 0
  %563 = vmatprep.subr.bf16.mxu0 0
  %564 = vmatpush1.bf16.msra.mxu0 0
  %565 = vmatprep.mubr.bf16.mxu0 0
  %566 = vmatmul.mubr.bf16.gmra.mrb[0].mxu0 %v495
  %v567 = vpop.f32.mrb[0].mxu0
  %v568 = vadd.f32 %v319, %v567
  %v569 = vpop.f32.mrb[0].mxu0
  %v570 = vadd.f32 %v321, %v569
  %v571 = vpop.f32.mrb[0].mxu0
  %v572 = vadd.f32 %v323, %v571
  %v573 = vpop.f32.mrb[0].mxu0
  %v574 = vadd.f32 %v325, %v573
  %575 = vmatprep.mubr.bf16.mxu0 0
  %576 = vmatmul.mubr.bf16.gmra.mrb[0].mxu0 %v497
  %v577 = vpop.f32.mrb[0].mxu0
  %v578 = vadd.f32 %v329, %v577
  %v579 = vpop.f32.mrb[0].mxu0
  %v580 = vadd.f32 %v331, %v579
  %v581 = vpop.f32.mrb[0].mxu0
  %v582 = vadd.f32 %v333, %v581
  %v583 = vpop.f32.mrb[0].mxu0
  %v584 = vadd.f32 %v335, %v583
  %585 = vmatprep.mubr.bf16.mxu0 0
  %586 = vmatmul.mubr.bf16.gmra.mrb[0].mxu0 %v499
  %v587 = vpop.f32.mrb[0].mxu0
  %v588 = vadd.f32 %v339, %v587
  %v589 = vpop.f32.mrb[0].mxu0
  %v590 = vadd.f32 %v341, %v589
  %v591 = vpop.f32.mrb[0].mxu0
  %v592 = vadd.f32 %v343, %v591
  %v593 = vpop.f32.mrb[0].mxu0
  %v594 = vadd.f32 %v345, %v593
  %595 = vmatprep.mubr.bf16.mxu0 0
  %596 = vmatmul.mubr.bf16.gmra.mrb[0].mxu0 %v501
  %v597 = vpop.f32.mrb[0].mxu0
  %v598 = vadd.f32 %v349, %v597
  %v599 = vpop.f32.mrb[0].mxu0
  %v600 = vadd.f32 %v351, %v599
  %v601 = vpop.f32.mrb[0].mxu0
  %v602 = vadd.f32 %v353, %v601
  %v603 = vpop.f32.mrb[0].mxu0
  %v604 = vadd.f32 %v355, %v603
  %605 = vmatprep.mubr.bf16.mxu0 0
  %606 = vmatmul.mubr.bf16.gmra.mrb[0].mxu0 %v503
  %v607 = vpop.f32.mrb[0].mxu0
  %v608 = vadd.f32 %v359, %v607
  %v609 = vpop.f32.mrb[0].mxu0
  %v610 = vadd.f32 %v361, %v609
  %v611 = vpop.f32.mrb[0].mxu0
  %v612 = vadd.f32 %v363, %v611
  %v613 = vpop.f32.mrb[0].mxu0
  %v614 = vadd.f32 %v365, %v613
  %615 = vmatprep.mubr.bf16.mxu0 0
  %616 = vmatmul.mubr.bf16.gmra.mrb[0].mxu0 %v505
  %v617 = vpop.f32.mrb[0].mxu0
  %v618 = vadd.f32 %v369, %v617
  %v619 = vpop.f32.mrb[0].mxu0
  %v620 = vadd.f32 %v371, %v619
  %v621 = vpop.f32.mrb[0].mxu0
  %v622 = vadd.f32 %v373, %v621
  %v623 = vpop.f32.mrb[0].mxu0
  %v624 = vadd.f32 %v375, %v623
  %625 = vmatprep.mubr.bf16.mxu0 0
  %626 = vmatmul.mubr.bf16.gmra.mrb[0].mxu0 %v507
  %v627 = vpop.f32.mrb[0].mxu0
  %v628 = vadd.f32 %v379, %v627
  %v629 = vpop.f32.mrb[0].mxu0
  %v630 = vadd.f32 %v381, %v629
  %v631 = vpop.f32.mrb[0].mxu0
  %v632 = vadd.f32 %v383, %v631
  %v633 = vpop.f32.mrb[0].mxu0
  %v634 = vadd.f32 %v385, %v633
  %635 = vmatprep.mubr.bf16.mxu0 0
  %636 = vmatmul.mubr.bf16.gmra.mrb[0].mxu0 %v509
  %v637 = vpop.f32.mrb[0].mxu0
  %v638 = vadd.f32 %v389, %v637
  %v639 = vpop.f32.mrb[0].mxu0
  %v640 = vadd.f32 %v391, %v639
  %v641 = vpop.f32.mrb[0].mxu0
  %v642 = vadd.f32 %v393, %v641
  %v643 = vpop.f32.mrb[0].mxu0
  %v644 = vadd.f32 %v395, %v643
  %645 = vmatprep.mubr.bf16.mxu0 0
  %646 = vmatmul.mubr.bf16.gmra.mrb[0].mxu0 %v511
  %v647 = vpop.f32.mrb[0].mxu0
  %v648 = vadd.f32 %v399, %v647
  %v649 = vpop.f32.mrb[0].mxu0
  %v650 = vadd.f32 %v401, %v649
  %v651 = vpop.f32.mrb[0].mxu0
  %v652 = vadd.f32 %v403, %v651
  %v653 = vpop.f32.mrb[0].mxu0
  %v654 = vadd.f32 %v405, %v653
  %655 = vmatprep.mubr.bf16.mxu0 0
  %656 = vmatmul.mubr.bf16.gmra.mrb[0].mxu0 %v513
  %v657 = vpop.f32.mrb[0].mxu0
  %v658 = vadd.f32 %v409, %v657
  %v659 = vpop.f32.mrb[0].mxu0
  %v660 = vadd.f32 %v411, %v659
  %v661 = vpop.f32.mrb[0].mxu0
  %v662 = vadd.f32 %v413, %v661
  %v663 = vpop.f32.mrb[0].mxu0
  %v664 = vadd.f32 %v415, %v663
  %665 = vmatprep.mubr.bf16.mxu0 0
  %666 = vmatmul.mubr.bf16.gmra.mrb[0].mxu0 %v515
  %v667 = vpop.f32.mrb[0].mxu0
  %v668 = vadd.f32 %v419, %v667
  %v669 = vpop.f32.mrb[0].mxu0
  %v670 = vadd.f32 %v421, %v669
  %v671 = vpop.f32.mrb[0].mxu0
  %v672 = vadd.f32 %v423, %v671
  %v673 = vpop.f32.mrb[0].mxu0
  %v674 = vadd.f32 %v425, %v673
  %675 = vmatprep.mubr.bf16.mxu0 0
  %676 = vmatmul.mubr.bf16.gmra.mrb[0].mxu0 %v517
  %v677 = vpop.f32.mrb[0].mxu0
  %v678 = vadd.f32 %v429, %v677
  %v679 = vpop.f32.mrb[0].mxu0
  %v680 = vadd.f32 %v431, %v679
  %v681 = vpop.f32.mrb[0].mxu0
  %v682 = vadd.f32 %v433, %v681
  %v683 = vpop.f32.mrb[0].mxu0
  %v684 = vadd.f32 %v435, %v683
  %685 = vmatprep.mubr.bf16.mxu0 0
  %686 = vmatmul.mubr.bf16.gmra.mrb[0].mxu0 %v519
  %v687 = vpop.f32.mrb[0].mxu0
  %v688 = vadd.f32 %v439, %v687
  %v689 = vpop.f32.mrb[0].mxu0
  %v690 = vadd.f32 %v441, %v689
  %v691 = vpop.f32.mrb[0].mxu0
  %v692 = vadd.f32 %v443, %v691
  %v693 = vpop.f32.mrb[0].mxu0
  %v694 = vadd.f32 %v445, %v693
  %695 = vmatprep.mubr.bf16.mxu0 0
  %696 = vmatmul.mubr.bf16.gmra.mrb[0].mxu0 %v521
  %v697 = vpop.f32.mrb[0].mxu0
  %v698 = vadd.f32 %v449, %v697
  %v699 = vpop.f32.mrb[0].mxu0
  %v700 = vadd.f32 %v451, %v699
  %v701 = vpop.f32.mrb[0].mxu0
  %v702 = vadd.f32 %v453, %v701
  %v703 = vpop.f32.mrb[0].mxu0
  %v704 = vadd.f32 %v455, %v703
  %705 = vmatprep.mubr.bf16.mxu0 0
  %706 = vmatmul.mubr.bf16.gmra.mrb[0].mxu0 %v523
  %v707 = vpop.f32.mrb[0].mxu0
  %v708 = vadd.f32 %v459, %v707
  %v709 = vpop.f32.mrb[0].mxu0
  %v710 = vadd.f32 %v461, %v709
  %v711 = vpop.f32.mrb[0].mxu0
  %v712 = vadd.f32 %v463, %v711
  %v713 = vpop.f32.mrb[0].mxu0
  %v714 = vadd.f32 %v465, %v713
  %715 = vmatprep.mubr.bf16.mxu0 0
  %716 = vmatmul.mubr.bf16.gmra.mrb[0].mxu0 %v525
  %v717 = vpop.f32.mrb[0].mxu0
  %v718 = vadd.f32 %v469, %v717
  %v719 = vpop.f32.mrb[0].mxu0
  %v720 = vadd.f32 %v471, %v719
  %v721 = vpop.f32.mrb[0].mxu0
  %v722 = vadd.f32 %v473, %v721
  %v723 = vpop.f32.mrb[0].mxu0
  %v724 = vadd.f32 %v475, %v723
  %725 = vdwg.mxu0
  %s726 = scalar_lea.vmem %s1, 64
  %v727 = vld [vmem:[%s726] sm:$0xff]
  %v728 = vld [vmem:[%s726 + $0x8] sm:$0xff]
  %v729 = vld [vmem:[%s726 + $0x10] sm:$0xff]
  %v730 = vld [vmem:[%s726 + $0x18] sm:$0x33]
  %vm747 = vcmask 1046528
  %v748 = vrot.slane %v57, 1
  %v749 = vrot.slane %v58, 1
  %v750 = vsel %vm747, %v748, %v749
  %v751 = vrot.slane %v59, 1
  %v752 = vsel %vm747, %v749, %v751
  %v753 = vrot.slane %v60, 1
  %v754 = vsel %vm747, %v751, %v753
  %v755 = vrot.slane %v61, 1
  %v756 = vsel %vm747, %v753, %v755
  %v757 = vrot.slane %v62, 1
  %v758 = vsel %vm747, %v755, %v757
  %v759 = vrot.slane %v63, 1
  %v760 = vsel %vm747, %v757, %v759
  %v761 = vrot.slane %v64, 1
  %v762 = vsel %vm747, %v759, %v761
  %v763 = vrot.slane %v65, 1
  %v764 = vsel %vm747, %v761, %v763
  %v765 = vrot.slane %v66, 1
  %v766 = vsel %vm747, %v763, %v765
  %v767 = vrot.slane %v67, 1
  %v768 = vsel %vm747, %v765, %v767
  %v769 = vrot.slane %v68, 1
  %v770 = vsel %vm747, %v767, %v769
  %v771 = vrot.slane %v69, 1
  %v772 = vsel %vm747, %v769, %v771
  %v773 = vrot.slane %v70, 1
  %v774 = vsel %vm747, %v771, %v773
  %v775 = vrot.slane %v71, 1
  %v776 = vsel %vm747, %v773, %v775
  %v777 = vrot.slane %v72, 1
  %v778 = vsel %vm747, %v775, %v777
  %v783 = vunpack.c.l.b16 %v727
  %v784 = vunpack.c.h.b16 %v727
  %v785 = vunpack.c.l.b16 %v728
  %v786 = vunpack.c.h.b16 %v728
  %v787 = vunpack.c.l.b16 %v729
  %v788 = vunpack.c.h.b16 %v729
  %v789 = vunpack.c.l.b16 %v730
  %v790 = vunpack.c.h.b16 %v730
  %v791 = vpack.c.b16 %v785, %v783
  %v792 = vpack.c.b16 %v786, %v784
  %v793 = vpack.c.b16 %v789, %v787
  %v794 = vpack.c.b16 %v790, %v788
  %v798 = vsel %vm228, %v750, 0
  %v801 = vsel %vm228, %v752, 0
  %v804 = vsel %vm228, %v754, 0
  %v807 = vsel %vm228, %v756, 0
  %v810 = vsel %vm228, %v758, 0
  %v813 = vsel %vm228, %v760, 0
  %v816 = vsel %vm228, %v762, 0
  %v819 = vsel %vm228, %v764, 0
  %v822 = vsel %vm228, %v766, 0
  %v825 = vsel %vm228, %v768, 0
  %v828 = vsel %vm228, %v770, 0
  %v831 = vsel %vm228, %v772, 0
  %v834 = vsel %vm228, %v774, 0
  %v837 = vsel %vm228, %v776, 0
  %v840 = vsel %vm228, %v778, 0
  %v843 = vsel %vm228, %v777, 0
  %v846 = vsel %vm277, %v793, 0
  %v849 = vsel %vm277, %v794, 0
  %851 = vmatprep.subr.bf16.mxu0 %v792
  %852 = vmatpush1.bf16.msra.mxu0 %v791
  %853 = vmatprep.subr.bf16.mxu0 %v849
  %854 = vmatpush1.bf16.msra.mxu0 %v846
  %855 = vmatprep.subr.bf16.mxu0 0
  %856 = vmatpush1.bf16.msra.mxu0 0
  %857 = vmatprep.subr.bf16.mxu0 0
  %858 = vmatpush1.bf16.msra.mxu0 0
  %859 = vmatprep.subr.bf16.mxu0 0
  %860 = vmatpush1.bf16.msra.mxu0 0
  %861 = vmatprep.subr.bf16.mxu0 0
  %862 = vmatpush1.bf16.msra.mxu0 0
  %863 = vmatprep.subr.bf16.mxu0 0
  %864 = vmatpush1.bf16.msra.mxu0 0
  %865 = vmatprep.subr.bf16.mxu0 0
  %866 = vmatpush1.bf16.msra.mxu0 0
  %867 = vmatprep.subr.bf16.mxu0 0
  %868 = vmatpush1.bf16.msra.mxu0 0
  %869 = vmatprep.subr.bf16.mxu0 0
  %870 = vmatpush1.bf16.msra.mxu0 0
  %871 = vmatprep.subr.bf16.mxu0 0
  %872 = vmatpush1.bf16.msra.mxu0 0
  %873 = vmatprep.subr.bf16.mxu0 0
  %874 = vmatpush1.bf16.msra.mxu0 0
  %875 = vmatprep.subr.bf16.mxu0 0
  %876 = vmatpush1.bf16.msra.mxu0 0
  %877 = vmatprep.subr.bf16.mxu0 0
  %878 = vmatpush1.bf16.msra.mxu0 0
  %879 = vmatprep.subr.bf16.mxu0 0
  %880 = vmatpush1.bf16.msra.mxu0 0
  %881 = vmatprep.subr.bf16.mxu0 0
  %882 = vmatpush1.bf16.msra.mxu0 0
  %883 = vmatprep.mubr.bf16.mxu0 0
  %884 = vmatmul.mubr.bf16.gmra.mrb[0].mxu0 %v798
  %v885 = vpop.f32.mrb[0].mxu0
  %v886 = vadd.f32 0.0, %v885
  %v887 = vpop.f32.mrb[0].mxu0
  %v888 = vadd.f32 0.0, %v887
  %v889 = vpop.f32.mrb[0].mxu0
  %v890 = vadd.f32 0.0, %v889
  %v891 = vpop.f32.mrb[0].mxu0
  %v892 = vadd.f32 0.0, %v891
  %893 = vmatprep.mubr.bf16.mxu0 0
  %894 = vmatmul.mubr.bf16.gmra.mrb[0].mxu0 %v801
  %v895 = vpop.f32.mrb[0].mxu0
  %v896 = vadd.f32 0.0, %v895
  %v897 = vpop.f32.mrb[0].mxu0
  %v898 = vadd.f32 0.0, %v897
  %v899 = vpop.f32.mrb[0].mxu0
  %v900 = vadd.f32 0.0, %v899
  %v901 = vpop.f32.mrb[0].mxu0
  %v902 = vadd.f32 0.0, %v901
  %903 = vmatprep.mubr.bf16.mxu0 0
  %904 = vmatmul.mubr.bf16.gmra.mrb[0].mxu0 %v804
  %v905 = vpop.f32.mrb[0].mxu0
  %v906 = vadd.f32 0.0, %v905
  %v907 = vpop.f32.mrb[0].mxu0
  %v908 = vadd.f32 0.0, %v907
  %v909 = vpop.f32.mrb[0].mxu0
  %v910 = vadd.f32 0.0, %v909
  %v911 = vpop.f32.mrb[0].mxu0
  %v912 = vadd.f32 0.0, %v911
  %913 = vmatprep.mubr.bf16.mxu0 0
  %914 = vmatmul.mubr.bf16.gmra.mrb[0].mxu0 %v807
  %v915 = vpop.f32.mrb[0].mxu0
  %v916 = vadd.f32 0.0, %v915
  %v917 = vpop.f32.mrb[0].mxu0
  %v918 = vadd.f32 0.0, %v917
  %v919 = vpop.f32.mrb[0].mxu0
  %v920 = vadd.f32 0.0, %v919
  %v921 = vpop.f32.mrb[0].mxu0
  %v922 = vadd.f32 0.0, %v921
  %923 = vmatprep.mubr.bf16.mxu0 0
  %924 = vmatmul.mubr.bf16.gmra.mrb[0].mxu0 %v810
  %v925 = vpop.f32.mrb[0].mxu0
  %v926 = vadd.f32 0.0, %v925
  %v927 = vpop.f32.mrb[0].mxu0
  %v928 = vadd.f32 0.0, %v927
  %v929 = vpop.f32.mrb[0].mxu0
  %v930 = vadd.f32 0.0, %v929
  %v931 = vpop.f32.mrb[0].mxu0
  %v932 = vadd.f32 0.0, %v931
  %933 = vmatprep.mubr.bf16.mxu0 0
  %934 = vmatmul.mubr.bf16.gmra.mrb[0].mxu0 %v813
  %v935 = vpop.f32.mrb[0].mxu0
  %v936 = vadd.f32 0.0, %v935
  %v937 = vpop.f32.mrb[0].mxu0
  %v938 = vadd.f32 0.0, %v937
  %v939 = vpop.f32.mrb[0].mxu0
  %v940 = vadd.f32 0.0, %v939
  %v941 = vpop.f32.mrb[0].mxu0
  %v942 = vadd.f32 0.0, %v941
  %943 = vmatprep.mubr.bf16.mxu0 0
  %944 = vmatmul.mubr.bf16.gmra.mrb[0].mxu0 %v816
  %v945 = vpop.f32.mrb[0].mxu0
  %v946 = vadd.f32 0.0, %v945
  %v947 = vpop.f32.mrb[0].mxu0
  %v948 = vadd.f32 0.0, %v947
  %v949 = vpop.f32.mrb[0].mxu0
  %v950 = vadd.f32 0.0, %v949
  %v951 = vpop.f32.mrb[0].mxu0
  %v952 = vadd.f32 0.0, %v951
  %953 = vmatprep.mubr.bf16.mxu0 0
  %954 = vmatmul.mubr.bf16.gmra.mrb[0].mxu0 %v819
  %v955 = vpop.f32.mrb[0].mxu0
  %v956 = vadd.f32 0.0, %v955
  %v957 = vpop.f32.mrb[0].mxu0
  %v958 = vadd.f32 0.0, %v957
  %v959 = vpop.f32.mrb[0].mxu0
  %v960 = vadd.f32 0.0, %v959
  %v961 = vpop.f32.mrb[0].mxu0
  %v962 = vadd.f32 0.0, %v961
  %963 = vmatprep.mubr.bf16.mxu0 0
  %964 = vmatmul.mubr.bf16.gmra.mrb[0].mxu0 %v822
  %v965 = vpop.f32.mrb[0].mxu0
  %v966 = vadd.f32 0.0, %v965
  %v967 = vpop.f32.mrb[0].mxu0
  %v968 = vadd.f32 0.0, %v967
  %v969 = vpop.f32.mrb[0].mxu0
  %v970 = vadd.f32 0.0, %v969
  %v971 = vpop.f32.mrb[0].mxu0
  %v972 = vadd.f32 0.0, %v971
  %973 = vmatprep.mubr.bf16.mxu0 0
  %974 = vmatmul.mubr.bf16.gmra.mrb[0].mxu0 %v825
  %v975 = vpop.f32.mrb[0].mxu0
  %v976 = vadd.f32 0.0, %v975
  %v977 = vpop.f32.mrb[0].mxu0
  %v978 = vadd.f32 0.0, %v977
  %v979 = vpop.f32.mrb[0].mxu0
  %v980 = vadd.f32 0.0, %v979
  %v981 = vpop.f32.mrb[0].mxu0
  %v982 = vadd.f32 0.0, %v981
  %983 = vmatprep.mubr.bf16.mxu0 0
  %984 = vmatmul.mubr.bf16.gmra.mrb[0].mxu0 %v828
  %v985 = vpop.f32.mrb[0].mxu0
  %v986 = vadd.f32 0.0, %v985
  %v987 = vpop.f32.mrb[0].mxu0
  %v988 = vadd.f32 0.0, %v987
  %v989 = vpop.f32.mrb[0].mxu0
  %v990 = vadd.f32 0.0, %v989
  %v991 = vpop.f32.mrb[0].mxu0
  %v992 = vadd.f32 0.0, %v991
  %993 = vmatprep.mubr.bf16.mxu0 0
  %994 = vmatmul.mubr.bf16.gmra.mrb[0].mxu0 %v831
  %v995 = vpop.f32.mrb[0].mxu0
  %v996 = vadd.f32 0.0, %v995
  %v997 = vpop.f32.mrb[0].mxu0
  %v998 = vadd.f32 0.0, %v997
  %v999 = vpop.f32.mrb[0].mxu0
  %v1000 = vadd.f32 0.0, %v999
  %v1001 = vpop.f32.mrb[0].mxu0
  %v1002 = vadd.f32 0.0, %v1001
  %1003 = vmatprep.mubr.bf16.mxu0 0
  %1004 = vmatmul.mubr.bf16.gmra.mrb[0].mxu0 %v834
  %v1005 = vpop.f32.mrb[0].mxu0
  %v1006 = vadd.f32 0.0, %v1005
  %v1007 = vpop.f32.mrb[0].mxu0
  %v1008 = vadd.f32 0.0, %v1007
  %v1009 = vpop.f32.mrb[0].mxu0
  %v1010 = vadd.f32 0.0, %v1009
  %v1011 = vpop.f32.mrb[0].mxu0
  %v1012 = vadd.f32 0.0, %v1011
  %1013 = vmatprep.mubr.bf16.mxu0 0
  %1014 = vmatmul.mubr.bf16.gmra.mrb[0].mxu0 %v837
  %v1015 = vpop.f32.mrb[0].mxu0
  %v1016 = vadd.f32 0.0, %v1015
  %v1017 = vpop.f32.mrb[0].mxu0
  %v1018 = vadd.f32 0.0, %v1017
  %v1019 = vpop.f32.mrb[0].mxu0
  %v1020 = vadd.f32 0.0, %v1019
  %v1021 = vpop.f32.mrb[0].mxu0
  %v1022 = vadd.f32 0.0, %v1021
  %1023 = vmatprep.mubr.bf16.mxu0 0
  %1024 = vmatmul.mubr.bf16.gmra.mrb[0].mxu0 %v840
  %v1025 = vpop.f32.mrb[0].mxu0
  %v1026 = vadd.f32 0.0, %v1025
  %v1027 = vpop.f32.mrb[0].mxu0
  %v1028 = vadd.f32 0.0, %v1027
  %v1029 = vpop.f32.mrb[0].mxu0
  %v1030 = vadd.f32 0.0, %v1029
  %v1031 = vpop.f32.mrb[0].mxu0
  %v1032 = vadd.f32 0.0, %v1031
  %1033 = vmatprep.mubr.bf16.mxu0 0
  %1034 = vmatmul.mubr.bf16.gmra.mrb[0].mxu0 %v843
  %v1035 = vpop.f32.mrb[0].mxu0
  %v1036 = vadd.f32 0.0, %v1035
  %v1037 = vpop.f32.mrb[0].mxu0
  %v1038 = vadd.f32 0.0, %v1037
  %v1039 = vpop.f32.mrb[0].mxu0
  %v1040 = vadd.f32 0.0, %v1039
  %v1041 = vpop.f32.mrb[0].mxu0
  %v1042 = vadd.f32 0.0, %v1041
  %1043 = vdwg.mxu0
  %v1044 = vadd.f32 %v568, %v886
  %v1045 = vadd.f32 %v570, %v888
  %v1046 = vadd.f32 %v572, %v890
  %v1047 = vadd.f32 %v574, %v892
  %v1048 = vadd.f32 %v578, %v896
  %v1049 = vadd.f32 %v580, %v898
  %v1050 = vadd.f32 %v582, %v900
  %v1051 = vadd.f32 %v584, %v902
  %v1052 = vadd.f32 %v588, %v906
  %v1053 = vadd.f32 %v590, %v908
  %v1054 = vadd.f32 %v592, %v910
  %v1055 = vadd.f32 %v594, %v912
  %v1056 = vadd.f32 %v598, %v916
  %v1057 = vadd.f32 %v600, %v918
  %v1058 = vadd.f32 %v602, %v920
  %v1059 = vadd.f32 %v604, %v922
  %v1060 = vadd.f32 %v608, %v926
  %v1061 = vadd.f32 %v610, %v928
  %v1062 = vadd.f32 %v612, %v930
  %v1063 = vadd.f32 %v614, %v932
  %v1064 = vadd.f32 %v618, %v936
  %v1065 = vadd.f32 %v620, %v938
  %v1066 = vadd.f32 %v622, %v940
  %v1067 = vadd.f32 %v624, %v942
  %v1068 = vadd.f32 %v628, %v946
  %v1069 = vadd.f32 %v630, %v948
  %v1070 = vadd.f32 %v632, %v950
  %v1071 = vadd.f32 %v634, %v952
  %v1072 = vadd.f32 %v638, %v956
  %v1073 = vadd.f32 %v640, %v958
  %v1074 = vadd.f32 %v642, %v960
  %v1075 = vadd.f32 %v644, %v962
  %v1076 = vadd.f32 %v648, %v966
  %v1077 = vadd.f32 %v650, %v968
  %v1078 = vadd.f32 %v652, %v970
  %v1079 = vadd.f32 %v654, %v972
  %v1080 = vadd.f32 %v658, %v976
  %v1081 = vadd.f32 %v660, %v978
  %v1082 = vadd.f32 %v662, %v980
  %v1083 = vadd.f32 %v664, %v982
  %v1084 = vadd.f32 %v668, %v986
  %v1085 = vadd.f32 %v670, %v988
  %v1086 = vadd.f32 %v672, %v990
  %v1087 = vadd.f32 %v674, %v992
  %v1088 = vadd.f32 %v678, %v996
  %v1089 = vadd.f32 %v680, %v998
  %v1090 = vadd.f32 %v682, %v1000
  %v1091 = vadd.f32 %v684, %v1002
  %v1092 = vadd.f32 %v688, %v1006
  %v1093 = vadd.f32 %v690, %v1008
  %v1094 = vadd.f32 %v692, %v1010
  %v1095 = vadd.f32 %v694, %v1012
  %v1096 = vadd.f32 %v698, %v1016
  %v1097 = vadd.f32 %v700, %v1018
  %v1098 = vadd.f32 %v702, %v1020
  %v1099 = vadd.f32 %v704, %v1022
  %v1100 = vadd.f32 %v708, %v1026
  %v1101 = vadd.f32 %v710, %v1028
  %v1102 = vadd.f32 %v712, %v1030
  %v1103 = vadd.f32 %v714, %v1032
  %v1104 = vadd.f32 %v718, %v1036
  %v1105 = vadd.f32 %v720, %v1038
  %v1106 = vadd.f32 %v722, %v1040
  %v1107 = vadd.f32 %v724, %v1042
  %s1108 = scalar_lea.vmem %s1, 96
  %v1109 = vld [vmem:[%s1108] sm:$0xff]
  %v1110 = vld [vmem:[%s1108 + $0x8] sm:$0xff]
  %v1111 = vld [vmem:[%s1108 + $0x10] sm:$0xff]
  %v1112 = vld [vmem:[%s1108 + $0x18] sm:$0x33]
  %vm1113 = vsmask.f32 6400
  %v1114 = vrot.slane %v84, 1
  %v1115 = vrot.slane %v86, 2
  %v1116 = vor.u32 %v1114, %v1115
  %v1117 = vrot.slane %v95, 1
  %v1118 = vrot.slane %v91, 2
  %v1119 = vor.u32 %v1117, %v1118
  %v1120 = vsel %vm1113, %v1116, %v1119
  %v1121 = vrot.slane %v103, 1
  %v1122 = vrot.slane %v99, 2
  %v1123 = vor.u32 %v1121, %v1122
  %v1124 = vsel %vm1113, %v1119, %v1123
  %v1125 = vrot.slane %v111, 1
  %v1126 = vrot.slane %v107, 2
  %v1127 = vor.u32 %v1125, %v1126
  %v1128 = vsel %vm1113, %v1123, %v1127
  %v1129 = vrot.slane %v119, 1
  %v1130 = vrot.slane %v115, 2
  %v1131 = vor.u32 %v1129, %v1130
  %v1132 = vsel %vm1113, %v1127, %v1131
  %v1133 = vrot.slane %v127, 1
  %v1134 = vrot.slane %v123, 2
  %v1135 = vor.u32 %v1133, %v1134
  %v1136 = vsel %vm1113, %v1131, %v1135
  %v1137 = vrot.slane %v135, 1
  %v1138 = vrot.slane %v131, 2
  %v1139 = vor.u32 %v1137, %v1138
  %v1140 = vsel %vm1113, %v1135, %v1139
  %v1141 = vrot.slane %v143, 1
  %v1142 = vrot.slane %v139, 2
  %v1143 = vor.u32 %v1141, %v1142
  %v1144 = vsel %vm1113, %v1139, %v1143
  %v1145 = vrot.slane %v151, 1
  %v1146 = vrot.slane %v147, 2
  %v1147 = vor.u32 %v1145, %v1146
  %v1148 = vsel %vm1113, %v1143, %v1147
  %v1149 = vrot.slane %v159, 1
  %v1150 = vrot.slane %v155, 2
  %v1151 = vor.u32 %v1149, %v1150
  %v1152 = vsel %vm1113, %v1147, %v1151
  %v1153 = vrot.slane %v167, 1
  %v1154 = vrot.slane %v163, 2
  %v1155 = vor.u32 %v1153, %v1154
  %v1156 = vsel %vm1113, %v1151, %v1155
  %v1157 = vrot.slane %v175, 1
  %v1158 = vrot.slane %v171, 2
  %v1159 = vor.u32 %v1157, %v1158
  %v1160 = vsel %vm1113, %v1155, %v1159
  %v1161 = vrot.slane %v183, 1
  %v1162 = vrot.slane %v179, 2
  %v1163 = vor.u32 %v1161, %v1162
  %v1164 = vsel %vm1113, %v1159, %v1163
  %v1165 = vrot.slane %v191, 1
  %v1166 = vrot.slane %v187, 2
  %v1167 = vor.u32 %v1165, %v1166
  %v1168 = vsel %vm1113, %v1163, %v1167
  %v1169 = vrot.slane %v199, 1
  %v1170 = vrot.slane %v195, 2
  %v1171 = vor.u32 %v1169, %v1170
  %v1172 = vsel %vm1113, %v1167, %v1171
  %v1173 = vrot.slane %v207, 1
  %v1174 = vrot.slane %v203, 2
  %v1175 = vor.u32 %v1173, %v1174
  %v1176 = vsel %vm1113, %v1171, %v1175
  %v1181 = vunpack.c.l.b16 %v1109
  %v1182 = vunpack.c.h.b16 %v1109
  %v1183 = vunpack.c.l.b16 %v1110
  %v1184 = vunpack.c.h.b16 %v1110
  %v1185 = vunpack.c.l.b16 %v1111
  %v1186 = vunpack.c.h.b16 %v1111
  %v1187 = vunpack.c.l.b16 %v1112
  %v1188 = vunpack.c.h.b16 %v1112
  %v1189 = vpack.c.b16 %v1183, %v1181
  %v1190 = vpack.c.b16 %v1184, %v1182
  %v1191 = vpack.c.b16 %v1187, %v1185
  %v1192 = vpack.c.b16 %v1188, %v1186
  %v1196 = vsel %vm228, %v1120, 0
  %v1199 = vsel %vm228, %v1124, 0
  %v1202 = vsel %vm228, %v1128, 0
  %v1205 = vsel %vm228, %v1132, 0
  %v1208 = vsel %vm228, %v1136, 0
  %v1211 = vsel %vm228, %v1140, 0
  %v1214 = vsel %vm228, %v1144, 0
  %v1217 = vsel %vm228, %v1148, 0
  %v1220 = vsel %vm228, %v1152, 0
  %v1223 = vsel %vm228, %v1156, 0
  %v1226 = vsel %vm228, %v1160, 0
  %v1229 = vsel %vm228, %v1164, 0
  %v1232 = vsel %vm228, %v1168, 0
  %v1235 = vsel %vm228, %v1172, 0
  %v1238 = vsel %vm228, %v1176, 0
  %v1241 = vsel %vm228, %v1175, 0
  %v1244 = vsel %vm277, %v1191, 0
  %v1247 = vsel %vm277, %v1192, 0
  %1249 = vmatprep.subr.bf16.mxu0 %v1190
  %1250 = vmatpush1.bf16.msra.mxu0 %v1189
  %1251 = vmatprep.subr.bf16.mxu0 %v1247
  %1252 = vmatpush1.bf16.msra.mxu0 %v1244
  %1253 = vmatprep.subr.bf16.mxu0 0
  %1254 = vmatpush1.bf16.msra.mxu0 0
  %1255 = vmatprep.subr.bf16.mxu0 0
  %1256 = vmatpush1.bf16.msra.mxu0 0
  %1257 = vmatprep.subr.bf16.mxu0 0
  %1258 = vmatpush1.bf16.msra.mxu0 0
  %1259 = vmatprep.subr.bf16.mxu0 0
  %1260 = vmatpush1.bf16.msra.mxu0 0
  %1261 = vmatprep.subr.bf16.mxu0 0
  %1262 = vmatpush1.bf16.msra.mxu0 0
  %1263 = vmatprep.subr.bf16.mxu0 0
  %1264 = vmatpush1.bf16.msra.mxu0 0
  %1265 = vmatprep.subr.bf16.mxu0 0
  %1266 = vmatpush1.bf16.msra.mxu0 0
  %1267 = vmatprep.subr.bf16.mxu0 0
  %1268 = vmatpush1.bf16.msra.mxu0 0
  %1269 = vmatprep.subr.bf16.mxu0 0
  %1270 = vmatpush1.bf16.msra.mxu0 0
  %1271 = vmatprep.subr.bf16.mxu0 0
  %1272 = vmatpush1.bf16.msra.mxu0 0
  %1273 = vmatprep.subr.bf16.mxu0 0
  %1274 = vmatpush1.bf16.msra.mxu0 0
  %1275 = vmatprep.subr.bf16.mxu0 0
  %1276 = vmatpush1.bf16.msra.mxu0 0
  %1277 = vmatprep.subr.bf16.mxu0 0
  %1278 = vmatpush1.bf16.msra.mxu0 0
  %1279 = vmatprep.subr.bf16.mxu0 0
  %1280 = vmatpush1.bf16.msra.mxu0 0
  %1281 = vmatprep.mubr.bf16.mxu0 0
  %1282 = vmatmul.mubr.bf16.gmra.mrb[0].mxu0 %v1196
  %v1283 = vpop.f32.mrb[0].mxu0
  %v1284 = vadd.f32 0.0, %v1283
  %v1285 = vpop.f32.mrb[0].mxu0
  %v1286 = vadd.f32 0.0, %v1285
  %v1287 = vpop.f32.mrb[0].mxu0
  %v1288 = vadd.f32 0.0, %v1287
  %v1289 = vpop.f32.mrb[0].mxu0
  %v1290 = vadd.f32 0.0, %v1289
  %1291 = vmatprep.mubr.bf16.mxu0 0
  %1292 = vmatmul.mubr.bf16.gmra.mrb[0].mxu0 %v1199
  %v1293 = vpop.f32.mrb[0].mxu0
  %v1294 = vadd.f32 0.0, %v1293
  %v1295 = vpop.f32.mrb[0].mxu0
  %v1296 = vadd.f32 0.0, %v1295
  %v1297 = vpop.f32.mrb[0].mxu0
  %v1298 = vadd.f32 0.0, %v1297
  %v1299 = vpop.f32.mrb[0].mxu0
  %v1300 = vadd.f32 0.0, %v1299
  %1301 = vmatprep.mubr.bf16.mxu0 0
  %1302 = vmatmul.mubr.bf16.gmra.mrb[0].mxu0 %v1202
  %v1303 = vpop.f32.mrb[0].mxu0
  %v1304 = vadd.f32 0.0, %v1303
  %v1305 = vpop.f32.mrb[0].mxu0
  %v1306 = vadd.f32 0.0, %v1305
  %v1307 = vpop.f32.mrb[0].mxu0
  %v1308 = vadd.f32 0.0, %v1307
  %v1309 = vpop.f32.mrb[0].mxu0
  %v1310 = vadd.f32 0.0, %v1309
  %1311 = vmatprep.mubr.bf16.mxu0 0
  %1312 = vmatmul.mubr.bf16.gmra.mrb[0].mxu0 %v1205
  %v1313 = vpop.f32.mrb[0].mxu0
  %v1314 = vadd.f32 0.0, %v1313
  %v1315 = vpop.f32.mrb[0].mxu0
  %v1316 = vadd.f32 0.0, %v1315
  %v1317 = vpop.f32.mrb[0].mxu0
  %v1318 = vadd.f32 0.0, %v1317
  %v1319 = vpop.f32.mrb[0].mxu0
  %v1320 = vadd.f32 0.0, %v1319
  %1321 = vmatprep.mubr.bf16.mxu0 0
  %1322 = vmatmul.mubr.bf16.gmra.mrb[0].mxu0 %v1208
  %v1323 = vpop.f32.mrb[0].mxu0
  %v1324 = vadd.f32 0.0, %v1323
  %v1325 = vpop.f32.mrb[0].mxu0
  %v1326 = vadd.f32 0.0, %v1325
  %v1327 = vpop.f32.mrb[0].mxu0
  %v1328 = vadd.f32 0.0, %v1327
  %v1329 = vpop.f32.mrb[0].mxu0
  %v1330 = vadd.f32 0.0, %v1329
  %1331 = vmatprep.mubr.bf16.mxu0 0
  %1332 = vmatmul.mubr.bf16.gmra.mrb[0].mxu0 %v1211
  %v1333 = vpop.f32.mrb[0].mxu0
  %v1334 = vadd.f32 0.0, %v1333
  %v1335 = vpop.f32.mrb[0].mxu0
  %v1336 = vadd.f32 0.0, %v1335
  %v1337 = vpop.f32.mrb[0].mxu0
  %v1338 = vadd.f32 0.0, %v1337
  %v1339 = vpop.f32.mrb[0].mxu0
  %v1340 = vadd.f32 0.0, %v1339
  %1341 = vmatprep.mubr.bf16.mxu0 0
  %1342 = vmatmul.mubr.bf16.gmra.mrb[0].mxu0 %v1214
  %v1343 = vpop.f32.mrb[0].mxu0
  %v1344 = vadd.f32 0.0, %v1343
  %v1345 = vpop.f32.mrb[0].mxu0
  %v1346 = vadd.f32 0.0, %v1345
  %v1347 = vpop.f32.mrb[0].mxu0
  %v1348 = vadd.f32 0.0, %v1347
  %v1349 = vpop.f32.mrb[0].mxu0
  %v1350 = vadd.f32 0.0, %v1349
  %1351 = vmatprep.mubr.bf16.mxu0 0
  %1352 = vmatmul.mubr.bf16.gmra.mrb[0].mxu0 %v1217
  %v1353 = vpop.f32.mrb[0].mxu0
  %v1354 = vadd.f32 0.0, %v1353
  %v1355 = vpop.f32.mrb[0].mxu0
  %v1356 = vadd.f32 0.0, %v1355
  %v1357 = vpop.f32.mrb[0].mxu0
  %v1358 = vadd.f32 0.0, %v1357
  %v1359 = vpop.f32.mrb[0].mxu0
  %v1360 = vadd.f32 0.0, %v1359
  %1361 = vmatprep.mubr.bf16.mxu0 0
  %1362 = vmatmul.mubr.bf16.gmra.mrb[0].mxu0 %v1220
  %v1363 = vpop.f32.mrb[0].mxu0
  %v1364 = vadd.f32 0.0, %v1363
  %v1365 = vpop.f32.mrb[0].mxu0
  %v1366 = vadd.f32 0.0, %v1365
  %v1367 = vpop.f32.mrb[0].mxu0
  %v1368 = vadd.f32 0.0, %v1367
  %v1369 = vpop.f32.mrb[0].mxu0
  %v1370 = vadd.f32 0.0, %v1369
  %1371 = vmatprep.mubr.bf16.mxu0 0
  %1372 = vmatmul.mubr.bf16.gmra.mrb[0].mxu0 %v1223
  %v1373 = vpop.f32.mrb[0].mxu0
  %v1374 = vadd.f32 0.0, %v1373
  %v1375 = vpop.f32.mrb[0].mxu0
  %v1376 = vadd.f32 0.0, %v1375
  %v1377 = vpop.f32.mrb[0].mxu0
  %v1378 = vadd.f32 0.0, %v1377
  %v1379 = vpop.f32.mrb[0].mxu0
  %v1380 = vadd.f32 0.0, %v1379
  %1381 = vmatprep.mubr.bf16.mxu0 0
  %1382 = vmatmul.mubr.bf16.gmra.mrb[0].mxu0 %v1226
  %v1383 = vpop.f32.mrb[0].mxu0
  %v1384 = vadd.f32 0.0, %v1383
  %v1385 = vpop.f32.mrb[0].mxu0
  %v1386 = vadd.f32 0.0, %v1385
  %v1387 = vpop.f32.mrb[0].mxu0
  %v1388 = vadd.f32 0.0, %v1387
  %v1389 = vpop.f32.mrb[0].mxu0
  %v1390 = vadd.f32 0.0, %v1389
  %1391 = vmatprep.mubr.bf16.mxu0 0
  %1392 = vmatmul.mubr.bf16.gmra.mrb[0].mxu0 %v1229
  %v1393 = vpop.f32.mrb[0].mxu0
  %v1394 = vadd.f32 0.0, %v1393
  %v1395 = vpop.f32.mrb[0].mxu0
  %v1396 = vadd.f32 0.0, %v1395
  %v1397 = vpop.f32.mrb[0].mxu0
  %v1398 = vadd.f32 0.0, %v1397
  %v1399 = vpop.f32.mrb[0].mxu0
  %v1400 = vadd.f32 0.0, %v1399
  %1401 = vmatprep.mubr.bf16.mxu0 0
  %1402 = vmatmul.mubr.bf16.gmra.mrb[0].mxu0 %v1232
  %v1403 = vpop.f32.mrb[0].mxu0
  %v1404 = vadd.f32 0.0, %v1403
  %v1405 = vpop.f32.mrb[0].mxu0
  %v1406 = vadd.f32 0.0, %v1405
  %v1407 = vpop.f32.mrb[0].mxu0
  %v1408 = vadd.f32 0.0, %v1407
  %v1409 = vpop.f32.mrb[0].mxu0
  %v1410 = vadd.f32 0.0, %v1409
  %1411 = vmatprep.mubr.bf16.mxu0 0
  %1412 = vmatmul.mubr.bf16.gmra.mrb[0].mxu0 %v1235
  %v1413 = vpop.f32.mrb[0].mxu0
  %v1414 = vadd.f32 0.0, %v1413
  %v1415 = vpop.f32.mrb[0].mxu0
  %v1416 = vadd.f32 0.0, %v1415
  %v1417 = vpop.f32.mrb[0].mxu0
  %v1418 = vadd.f32 0.0, %v1417
  %v1419 = vpop.f32.mrb[0].mxu0
  %v1420 = vadd.f32 0.0, %v1419
  %1421 = vmatprep.mubr.bf16.mxu0 0
  %1422 = vmatmul.mubr.bf16.gmra.mrb[0].mxu0 %v1238
  %v1423 = vpop.f32.mrb[0].mxu0
  %v1424 = vadd.f32 0.0, %v1423
  %v1425 = vpop.f32.mrb[0].mxu0
  %v1426 = vadd.f32 0.0, %v1425
  %v1427 = vpop.f32.mrb[0].mxu0
  %v1428 = vadd.f32 0.0, %v1427
  %v1429 = vpop.f32.mrb[0].mxu0
  %v1430 = vadd.f32 0.0, %v1429
  %1431 = vmatprep.mubr.bf16.mxu0 0
  %1432 = vmatmul.mubr.bf16.gmra.mrb[0].mxu0 %v1241
  %v1433 = vpop.f32.mrb[0].mxu0
  %v1434 = vadd.f32 0.0, %v1433
  %v1435 = vpop.f32.mrb[0].mxu0
  %v1436 = vadd.f32 0.0, %v1435
  %v1437 = vpop.f32.mrb[0].mxu0
  %v1438 = vadd.f32 0.0, %v1437
  %v1439 = vpop.f32.mrb[0].mxu0
  %v1440 = vadd.f32 0.0, %v1439
  %1441 = vdwg.mxu0
  %v1442 = vadd.f32 %v1044, %v1284
  %v1443 = vadd.f32 %v1045, %v1286
  %v1444 = vadd.f32 %v1046, %v1288
  %v1445 = vadd.f32 %v1047, %v1290
  %v1446 = vadd.f32 %v1048, %v1294
  %v1447 = vadd.f32 %v1049, %v1296
  %v1448 = vadd.f32 %v1050, %v1298
  %v1449 = vadd.f32 %v1051, %v1300
  %v1450 = vadd.f32 %v1052, %v1304
  %v1451 = vadd.f32 %v1053, %v1306
  %v1452 = vadd.f32 %v1054, %v1308
  %v1453 = vadd.f32 %v1055, %v1310
  %v1454 = vadd.f32 %v1056, %v1314
  %v1455 = vadd.f32 %v1057, %v1316
  %v1456 = vadd.f32 %v1058, %v1318
  %v1457 = vadd.f32 %v1059, %v1320
  %v1458 = vadd.f32 %v1060, %v1324
  %v1459 = vadd.f32 %v1061, %v1326
  %v1460 = vadd.f32 %v1062, %v1328
  %v1461 = vadd.f32 %v1063, %v1330
  %v1462 = vadd.f32 %v1064, %v1334
  %v1463 = vadd.f32 %v1065, %v1336
  %v1464 = vadd.f32 %v1066, %v1338
  %v1465 = vadd.f32 %v1067, %v1340
  %v1466 = vadd.f32 %v1068, %v1344
  %v1467 = vadd.f32 %v1069, %v1346
  %v1468 = vadd.f32 %v1070, %v1348
  %v1469 = vadd.f32 %v1071, %v1350
  %v1470 = vadd.f32 %v1072, %v1354
  %v1471 = vadd.f32 %v1073, %v1356
  %v1472 = vadd.f32 %v1074, %v1358
  %v1473 = vadd.f32 %v1075, %v1360
  %v1474 = vadd.f32 %v1076, %v1364
  %v1475 = vadd.f32 %v1077, %v1366
  %v1476 = vadd.f32 %v1078, %v1368
  %v1477 = vadd.f32 %v1079, %v1370
  %v1478 = vadd.f32 %v1080, %v1374
  %v1479 = vadd.f32 %v1081, %v1376
  %v1480 = vadd.f32 %v1082, %v1378
  %v1481 = vadd.f32 %v1083, %v1380
  %v1482 = vadd.f32 %v1084, %v1384
  %v1483 = vadd.f32 %v1085, %v1386
  %v1484 = vadd.f32 %v1086, %v1388
  %v1485 = vadd.f32 %v1087, %v1390
  %v1486 = vadd.f32 %v1088, %v1394
  %v1487 = vadd.f32 %v1089, %v1396
  %v1488 = vadd.f32 %v1090, %v1398
  %v1489 = vadd.f32 %v1091, %v1400
  %v1490 = vadd.f32 %v1092, %v1404
  %v1491 = vadd.f32 %v1093, %v1406
  %v1492 = vadd.f32 %v1094, %v1408
  %v1493 = vadd.f32 %v1095, %v1410
  %v1494 = vadd.f32 %v1096, %v1414
  %v1495 = vadd.f32 %v1097, %v1416
  %v1496 = vadd.f32 %v1098, %v1418
  %v1497 = vadd.f32 %v1099, %v1420
  %v1498 = vadd.f32 %v1100, %v1424
  %v1499 = vadd.f32 %v1101, %v1426
  %v1500 = vadd.f32 %v1102, %v1428
  %v1501 = vadd.f32 %v1103, %v1430
  %v1502 = vadd.f32 %v1104, %v1434
  %v1503 = vadd.f32 %v1105, %v1436
  %v1504 = vadd.f32 %v1106, %v1438
  %v1505 = vadd.f32 %v1107, %v1440
  %s1506 = scalar_lea.vmem %s1, 128
  %v1507 = vld [vmem:[%s1506] sm:$0xff]
  %v1508 = vld [vmem:[%s1506 + $0x8] sm:$0xff]
  %v1509 = vld [vmem:[%s1506 + $0x10] sm:$0xff]
  %v1510 = vld [vmem:[%s1506 + $0x18] sm:$0x33]
  %vm1511 = vcmask 1045504
  %v1512 = vrot.slane %v57, 2
  %v1513 = vrot.slane %v58, 2
  %v1514 = vsel %vm1511, %v1512, %v1513
  %v1515 = vrot.slane %v59, 2
  %v1516 = vsel %vm1511, %v1513, %v1515
  %v1517 = vrot.slane %v60, 2
  %v1518 = vsel %vm1511, %v1515, %v1517
  %v1519 = vrot.slane %v61, 2
  %v1520 = vsel %vm1511, %v1517, %v1519
  %v1521 = vrot.slane %v62, 2
  %v1522 = vsel %vm1511, %v1519, %v1521
  %v1523 = vrot.slane %v63, 2
  %v1524 = vsel %vm1511, %v1521, %v1523
  %v1525 = vrot.slane %v64, 2
  %v1526 = vsel %vm1511, %v1523, %v1525
  %v1527 = vrot.slane %v65, 2
  %v1528 = vsel %vm1511, %v1525, %v1527
  %v1529 = vrot.slane %v66, 2
  %v1530 = vsel %vm1511, %v1527, %v1529
  %v1531 = vrot.slane %v67, 2
  %v1532 = vsel %vm1511, %v1529, %v1531
  %v1533 = vrot.slane %v68, 2
  %v1534 = vsel %vm1511, %v1531, %v1533
  %v1535 = vrot.slane %v69, 2
  %v1536 = vsel %vm1511, %v1533, %v1535
  %v1537 = vrot.slane %v70, 2
  %v1538 = vsel %vm1511, %v1535, %v1537
  %v1539 = vrot.slane %v71, 2
  %v1540 = vsel %vm1511, %v1537, %v1539
  %v1541 = vrot.slane %v72, 2
  %v1542 = vsel %vm1511, %v1539, %v1541
  %v1547 = vunpack.c.l.b16 %v1507
  %v1548 = vunpack.c.h.b16 %v1507
  %v1549 = vunpack.c.l.b16 %v1508
  %v1550 = vunpack.c.h.b16 %v1508
  %v1551 = vunpack.c.l.b16 %v1509
  %v1552 = vunpack.c.h.b16 %v1509
  %v1553 = vunpack.c.l.b16 %v1510
  %v1554 = vunpack.c.h.b16 %v1510
  %v1555 = vpack.c.b16 %v1549, %v1547
  %v1556 = vpack.c.b16 %v1550, %v1548
  %v1557 = vpack.c.b16 %v1553, %v1551
  %v1558 = vpack.c.b16 %v1554, %v1552
  %v1562 = vsel %vm228, %v1514, 0
  %v1565 = vsel %vm228, %v1516, 0
  %v1568 = vsel %vm228, %v1518, 0
  %v1571 = vsel %vm228, %v1520, 0
  %v1574 = vsel %vm228, %v1522, 0
  %v1577 = vsel %vm228, %v1524, 0
  %v1580 = vsel %vm228, %v1526, 0
  %v1583 = vsel %vm228, %v1528, 0
  %v1586 = vsel %vm228, %v1530, 0
  %v1589 = vsel %vm228, %v1532, 0
  %v1592 = vsel %vm228, %v1534, 0
  %v1595 = vsel %vm228, %v1536, 0
  %v1598 = vsel %vm228, %v1538, 0
  %v1601 = vsel %vm228, %v1540, 0
  %v1604 = vsel %vm228, %v1542, 0
  %v1607 = vsel %vm228, %v1541, 0
  %v1610 = vsel %vm277, %v1557, 0
  %v1613 = vsel %vm277, %v1558, 0
  %1615 = vmatprep.subr.bf16.mxu0 %v1556
  %1616 = vmatpush1.bf16.msra.mxu0 %v1555
  %1617 = vmatprep.subr.bf16.mxu0 %v1613
  %1618 = vmatpush1.bf16.msra.mxu0 %v1610
  %1619 = vmatprep.subr.bf16.mxu0 0
  %1620 = vmatpush1.bf16.msra.mxu0 0
  %1621 = vmatprep.subr.bf16.mxu0 0
  %1622 = vmatpush1.bf16.msra.mxu0 0
  %1623 = vmatprep.subr.bf16.mxu0 0
  %1624 = vmatpush1.bf16.msra.mxu0 0
  %1625 = vmatprep.subr.bf16.mxu0 0
  %1626 = vmatpush1.bf16.msra.mxu0 0
  %1627 = vmatprep.subr.bf16.mxu0 0
  %1628 = vmatpush1.bf16.msra.mxu0 0
  %1629 = vmatprep.subr.bf16.mxu0 0
  %1630 = vmatpush1.bf16.msra.mxu0 0
  %1631 = vmatprep.subr.bf16.mxu0 0
  %1632 = vmatpush1.bf16.msra.mxu0 0
  %1633 = vmatprep.subr.bf16.mxu0 0
  %1634 = vmatpush1.bf16.msra.mxu0 0
  %1635 = vmatprep.subr.bf16.mxu0 0
  %1636 = vmatpush1.bf16.msra.mxu0 0
  %1637 = vmatprep.subr.bf16.mxu0 0
  %1638 = vmatpush1.bf16.msra.mxu0 0
  %1639 = vmatprep.subr.bf16.mxu0 0
  %1640 = vmatpush1.bf16.msra.mxu0 0
  %1641 = vmatprep.subr.bf16.mxu0 0
  %1642 = vmatpush1.bf16.msra.mxu0 0
  %1643 = vmatprep.subr.bf16.mxu0 0
  %1644 = vmatpush1.bf16.msra.mxu0 0
  %1645 = vmatprep.subr.bf16.mxu0 0
  %1646 = vmatpush1.bf16.msra.mxu0 0
  %1647 = vmatprep.mubr.bf16.mxu0 0
  %1648 = vmatmul.mubr.bf16.gmra.mrb[0].mxu0 %v1562
  %v1649 = vpop.f32.mrb[0].mxu0
  %v1650 = vadd.f32 0.0, %v1649
  %v1651 = vpop.f32.mrb[0].mxu0
  %v1652 = vadd.f32 0.0, %v1651
  %v1653 = vpop.f32.mrb[0].mxu0
  %v1654 = vadd.f32 0.0, %v1653
  %v1655 = vpop.f32.mrb[0].mxu0
  %v1656 = vadd.f32 0.0, %v1655
  %1657 = vmatprep.mubr.bf16.mxu0 0
  %1658 = vmatmul.mubr.bf16.gmra.mrb[0].mxu0 %v1565
  %v1659 = vpop.f32.mrb[0].mxu0
  %v1660 = vadd.f32 0.0, %v1659
  %v1661 = vpop.f32.mrb[0].mxu0
  %v1662 = vadd.f32 0.0, %v1661
  %v1663 = vpop.f32.mrb[0].mxu0
  %v1664 = vadd.f32 0.0, %v1663
  %v1665 = vpop.f32.mrb[0].mxu0
  %v1666 = vadd.f32 0.0, %v1665
  %1667 = vmatprep.mubr.bf16.mxu0 0
  %1668 = vmatmul.mubr.bf16.gmra.mrb[0].mxu0 %v1568
  %v1669 = vpop.f32.mrb[0].mxu0
  %v1670 = vadd.f32 0.0, %v1669
  %v1671 = vpop.f32.mrb[0].mxu0
  %v1672 = vadd.f32 0.0, %v1671
  %v1673 = vpop.f32.mrb[0].mxu0
  %v1674 = vadd.f32 0.0, %v1673
  %v1675 = vpop.f32.mrb[0].mxu0
  %v1676 = vadd.f32 0.0, %v1675
  %1677 = vmatprep.mubr.bf16.mxu0 0
  %1678 = vmatmul.mubr.bf16.gmra.mrb[0].mxu0 %v1571
  %v1679 = vpop.f32.mrb[0].mxu0
  %v1680 = vadd.f32 0.0, %v1679
  %v1681 = vpop.f32.mrb[0].mxu0
  %v1682 = vadd.f32 0.0, %v1681
  %v1683 = vpop.f32.mrb[0].mxu0
  %v1684 = vadd.f32 0.0, %v1683
  %v1685 = vpop.f32.mrb[0].mxu0
  %v1686 = vadd.f32 0.0, %v1685
  %1687 = vmatprep.mubr.bf16.mxu0 0
  %1688 = vmatmul.mubr.bf16.gmra.mrb[0].mxu0 %v1574
  %v1689 = vpop.f32.mrb[0].mxu0
  %v1690 = vadd.f32 0.0, %v1689
  %v1691 = vpop.f32.mrb[0].mxu0
  %v1692 = vadd.f32 0.0, %v1691
  %v1693 = vpop.f32.mrb[0].mxu0
  %v1694 = vadd.f32 0.0, %v1693
  %v1695 = vpop.f32.mrb[0].mxu0
  %v1696 = vadd.f32 0.0, %v1695
  %1697 = vmatprep.mubr.bf16.mxu0 0
  %1698 = vmatmul.mubr.bf16.gmra.mrb[0].mxu0 %v1577
  %v1699 = vpop.f32.mrb[0].mxu0
  %v1700 = vadd.f32 0.0, %v1699
  %v1701 = vpop.f32.mrb[0].mxu0
  %v1702 = vadd.f32 0.0, %v1701
  %v1703 = vpop.f32.mrb[0].mxu0
  %v1704 = vadd.f32 0.0, %v1703
  %v1705 = vpop.f32.mrb[0].mxu0
  %v1706 = vadd.f32 0.0, %v1705
  %1707 = vmatprep.mubr.bf16.mxu0 0
  %1708 = vmatmul.mubr.bf16.gmra.mrb[0].mxu0 %v1580
  %v1709 = vpop.f32.mrb[0].mxu0
  %v1710 = vadd.f32 0.0, %v1709
  %v1711 = vpop.f32.mrb[0].mxu0
  %v1712 = vadd.f32 0.0, %v1711
  %v1713 = vpop.f32.mrb[0].mxu0
  %v1714 = vadd.f32 0.0, %v1713
  %v1715 = vpop.f32.mrb[0].mxu0
  %v1716 = vadd.f32 0.0, %v1715
  %1717 = vmatprep.mubr.bf16.mxu0 0
  %1718 = vmatmul.mubr.bf16.gmra.mrb[0].mxu0 %v1583
  %v1719 = vpop.f32.mrb[0].mxu0
  %v1720 = vadd.f32 0.0, %v1719
  %v1721 = vpop.f32.mrb[0].mxu0
  %v1722 = vadd.f32 0.0, %v1721
  %v1723 = vpop.f32.mrb[0].mxu0
  %v1724 = vadd.f32 0.0, %v1723
  %v1725 = vpop.f32.mrb[0].mxu0
  %v1726 = vadd.f32 0.0, %v1725
  %1727 = vmatprep.mubr.bf16.mxu0 0
  %1728 = vmatmul.mubr.bf16.gmra.mrb[0].mxu0 %v1586
  %v1729 = vpop.f32.mrb[0].mxu0
  %v1730 = vadd.f32 0.0, %v1729
  %v1731 = vpop.f32.mrb[0].mxu0
  %v1732 = vadd.f32 0.0, %v1731
  %v1733 = vpop.f32.mrb[0].mxu0
  %v1734 = vadd.f32 0.0, %v1733
  %v1735 = vpop.f32.mrb[0].mxu0
  %v1736 = vadd.f32 0.0, %v1735
  %1737 = vmatprep.mubr.bf16.mxu0 0
  %1738 = vmatmul.mubr.bf16.gmra.mrb[0].mxu0 %v1589
  %v1739 = vpop.f32.mrb[0].mxu0
  %v1740 = vadd.f32 0.0, %v1739
  %v1741 = vpop.f32.mrb[0].mxu0
  %v1742 = vadd.f32 0.0, %v1741
  %v1743 = vpop.f32.mrb[0].mxu0
  %v1744 = vadd.f32 0.0, %v1743
  %v1745 = vpop.f32.mrb[0].mxu0
  %v1746 = vadd.f32 0.0, %v1745
  %1747 = vmatprep.mubr.bf16.mxu0 0
  %1748 = vmatmul.mubr.bf16.gmra.mrb[0].mxu0 %v1592
  %v1749 = vpop.f32.mrb[0].mxu0
  %v1750 = vadd.f32 0.0, %v1749
  %v1751 = vpop.f32.mrb[0].mxu0
  %v1752 = vadd.f32 0.0, %v1751
  %v1753 = vpop.f32.mrb[0].mxu0
  %v1754 = vadd.f32 0.0, %v1753
  %v1755 = vpop.f32.mrb[0].mxu0
  %v1756 = vadd.f32 0.0, %v1755
  %1757 = vmatprep.mubr.bf16.mxu0 0
  %1758 = vmatmul.mubr.bf16.gmra.mrb[0].mxu0 %v1595
  %v1759 = vpop.f32.mrb[0].mxu0
  %v1760 = vadd.f32 0.0, %v1759
  %v1761 = vpop.f32.mrb[0].mxu0
  %v1762 = vadd.f32 0.0, %v1761
  %v1763 = vpop.f32.mrb[0].mxu0
  %v1764 = vadd.f32 0.0, %v1763
  %v1765 = vpop.f32.mrb[0].mxu0
  %v1766 = vadd.f32 0.0, %v1765
  %1767 = vmatprep.mubr.bf16.mxu0 0
  %1768 = vmatmul.mubr.bf16.gmra.mrb[0].mxu0 %v1598
  %v1769 = vpop.f32.mrb[0].mxu0
  %v1770 = vadd.f32 0.0, %v1769
  %v1771 = vpop.f32.mrb[0].mxu0
  %v1772 = vadd.f32 0.0, %v1771
  %v1773 = vpop.f32.mrb[0].mxu0
  %v1774 = vadd.f32 0.0, %v1773
  %v1775 = vpop.f32.mrb[0].mxu0
  %v1776 = vadd.f32 0.0, %v1775
  %1777 = vmatprep.mubr.bf16.mxu0 0
  %1778 = vmatmul.mubr.bf16.gmra.mrb[0].mxu0 %v1601
  %v1779 = vpop.f32.mrb[0].mxu0
  %v1780 = vadd.f32 0.0, %v1779
  %v1781 = vpop.f32.mrb[0].mxu0
  %v1782 = vadd.f32 0.0, %v1781
  %v1783 = vpop.f32.mrb[0].mxu0
  %v1784 = vadd.f32 0.0, %v1783
  %v1785 = vpop.f32.mrb[0].mxu0
  %v1786 = vadd.f32 0.0, %v1785
  %1787 = vmatprep.mubr.bf16.mxu0 0
  %1788 = vmatmul.mubr.bf16.gmra.mrb[0].mxu0 %v1604
  %v1789 = vpop.f32.mrb[0].mxu0
  %v1790 = vadd.f32 0.0, %v1789
  %v1791 = vpop.f32.mrb[0].mxu0
  %v1792 = vadd.f32 0.0, %v1791
  %v1793 = vpop.f32.mrb[0].mxu0
  %v1794 = vadd.f32 0.0, %v1793
  %v1795 = vpop.f32.mrb[0].mxu0
  %v1796 = vadd.f32 0.0, %v1795
  %1797 = vmatprep.mubr.bf16.mxu0 0
  %1798 = vmatmul.mubr.bf16.gmra.mrb[0].mxu0 %v1607
  %v1799 = vpop.f32.mrb[0].mxu0
  %v1800 = vadd.f32 0.0, %v1799
  %v1801 = vpop.f32.mrb[0].mxu0
  %v1802 = vadd.f32 0.0, %v1801
  %v1803 = vpop.f32.mrb[0].mxu0
  %v1804 = vadd.f32 0.0, %v1803
  %v1805 = vpop.f32.mrb[0].mxu0
  %v1806 = vadd.f32 0.0, %v1805
  %1807 = vdwg.mxu0
  %v1808 = vadd.f32 %v1442, %v1650
  %v1809 = vadd.f32 %v1443, %v1652
  %v1810 = vadd.f32 %v1444, %v1654
  %v1811 = vadd.f32 %v1445, %v1656
  %v1812 = vadd.f32 %v1446, %v1660
  %v1813 = vadd.f32 %v1447, %v1662
  %v1814 = vadd.f32 %v1448, %v1664
  %v1815 = vadd.f32 %v1449, %v1666
  %v1816 = vadd.f32 %v1450, %v1670
  %v1817 = vadd.f32 %v1451, %v1672
  %v1818 = vadd.f32 %v1452, %v1674
  %v1819 = vadd.f32 %v1453, %v1676
  %v1820 = vadd.f32 %v1454, %v1680
  %v1821 = vadd.f32 %v1455, %v1682
  %v1822 = vadd.f32 %v1456, %v1684
  %v1823 = vadd.f32 %v1457, %v1686
  %v1824 = vadd.f32 %v1458, %v1690
  %v1825 = vadd.f32 %v1459, %v1692
  %v1826 = vadd.f32 %v1460, %v1694
  %v1827 = vadd.f32 %v1461, %v1696
  %v1828 = vadd.f32 %v1462, %v1700
  %v1829 = vadd.f32 %v1463, %v1702
  %v1830 = vadd.f32 %v1464, %v1704
  %v1831 = vadd.f32 %v1465, %v1706
  %v1832 = vadd.f32 %v1466, %v1710
  %v1833 = vadd.f32 %v1467, %v1712
  %v1834 = vadd.f32 %v1468, %v1714
  %v1835 = vadd.f32 %v1469, %v1716
  %v1836 = vadd.f32 %v1470, %v1720
  %v1837 = vadd.f32 %v1471, %v1722
  %v1838 = vadd.f32 %v1472, %v1724
  %v1839 = vadd.f32 %v1473, %v1726
  %v1840 = vadd.f32 %v1474, %v1730
  %v1841 = vadd.f32 %v1475, %v1732
  %v1842 = vadd.f32 %v1476, %v1734
  %v1843 = vadd.f32 %v1477, %v1736
  %v1844 = vadd.f32 %v1478, %v1740
  %v1845 = vadd.f32 %v1479, %v1742
  %v1846 = vadd.f32 %v1480, %v1744
  %v1847 = vadd.f32 %v1481, %v1746
  %v1848 = vadd.f32 %v1482, %v1750
  %v1849 = vadd.f32 %v1483, %v1752
  %v1850 = vadd.f32 %v1484, %v1754
  %v1851 = vadd.f32 %v1485, %v1756
  %v1852 = vadd.f32 %v1486, %v1760
  %v1853 = vadd.f32 %v1487, %v1762
  %v1854 = vadd.f32 %v1488, %v1764
  %v1855 = vadd.f32 %v1489, %v1766
  %v1856 = vadd.f32 %v1490, %v1770
  %v1857 = vadd.f32 %v1491, %v1772
  %v1858 = vadd.f32 %v1492, %v1774
  %v1859 = vadd.f32 %v1493, %v1776
  %v1860 = vadd.f32 %v1494, %v1780
  %v1861 = vadd.f32 %v1495, %v1782
  %v1862 = vadd.f32 %v1496, %v1784
  %v1863 = vadd.f32 %v1497, %v1786
  %v1864 = vadd.f32 %v1498, %v1790
  %v1865 = vadd.f32 %v1499, %v1792
  %v1866 = vadd.f32 %v1500, %v1794
  %v1867 = vadd.f32 %v1501, %v1796
  %v1868 = vadd.f32 %v1502, %v1800
  %v1869 = vadd.f32 %v1503, %v1802
  %v1870 = vadd.f32 %v1504, %v1804
  %v1871 = vadd.f32 %v1505, %v1806
  %v1872 = vmax.f32 %v1808, %v1809
  %v1873 = vmax.f32 %v1810, %v1811
  %v1874 = vmax.f32 %v1812, %v1813
  %v1875 = vmax.f32 %v1814, %v1815
  %v1876 = vmax.f32 %v1816, %v1817
  %v1877 = vmax.f32 %v1818, %v1819
  %v1878 = vmax.f32 %v1820, %v1821
  %v1879 = vmax.f32 %v1822, %v1823
  %v1880 = vmax.f32 %v1824, %v1825
  %v1881 = vmax.f32 %v1826, %v1827
  %v1882 = vmax.f32 %v1828, %v1829
  %v1883 = vmax.f32 %v1830, %v1831
  %v1884 = vmax.f32 %v1832, %v1833
  %v1885 = vmax.f32 %v1834, %v1835
  %v1886 = vmax.f32 %v1836, %v1837
  %v1887 = vmax.f32 %v1838, %v1839
  %v1888 = vmax.f32 %v1840, %v1841
  %v1889 = vmax.f32 %v1842, %v1843
  %v1890 = vmax.f32 %v1844, %v1845
  %v1891 = vmax.f32 %v1846, %v1847
  %v1892 = vmax.f32 %v1848, %v1849
  %v1893 = vmax.f32 %v1850, %v1851
  %v1894 = vmax.f32 %v1852, %v1853
  %v1895 = vmax.f32 %v1854, %v1855
  %v1896 = vmax.f32 %v1856, %v1857
  %v1897 = vmax.f32 %v1858, %v1859
  %v1898 = vmax.f32 %v1860, %v1861
  %v1899 = vmax.f32 %v1862, %v1863
  %v1900 = vmax.f32 %v1864, %v1865
  %v1901 = vmax.f32 %v1866, %v1867
  %v1902 = vmax.f32 %v1868, %v1869
  %v1903 = vmax.f32 %v1870, %v1871
  %vm1936 = vcmask 1046528
  %v1937 = vrot.slane %v1872, 1
  %v1938 = vrot.slane %v1873, 1
  %v1939 = vsel %vm1936, %v1937, %v1938
  %v1940 = vrot.slane %v1874, 1
  %v1941 = vsel %vm1936, %v1938, %v1940
  %v1942 = vrot.slane %v1875, 1
  %v1943 = vsel %vm1936, %v1940, %v1942
  %v1944 = vrot.slane %v1876, 1
  %v1945 = vsel %vm1936, %v1942, %v1944
  %v1946 = vrot.slane %v1877, 1
  %v1947 = vsel %vm1936, %v1944, %v1946
  %v1948 = vrot.slane %v1878, 1
  %v1949 = vsel %vm1936, %v1946, %v1948
  %v1950 = vrot.slane %v1879, 1
  %v1951 = vsel %vm1936, %v1948, %v1950
  %v1952 = vrot.slane %v1880, 1
  %v1953 = vsel %vm1936, %v1950, %v1952
  %v1954 = vrot.slane %v1881, 1
  %v1955 = vsel %vm1936, %v1952, %v1954
  %v1956 = vrot.slane %v1882, 1
  %v1957 = vsel %vm1936, %v1954, %v1956
  %v1958 = vrot.slane %v1883, 1
  %v1959 = vsel %vm1936, %v1956, %v1958
  %v1960 = vrot.slane %v1884, 1
  %v1961 = vsel %vm1936, %v1958, %v1960
  %v1962 = vrot.slane %v1885, 1
  %v1963 = vsel %vm1936, %v1960, %v1962
  %v1964 = vrot.slane %v1886, 1
  %v1965 = vsel %vm1936, %v1962, %v1964
  %v1966 = vrot.slane %v1887, 1
  %v1967 = vsel %vm1936, %v1964, %v1966
  %v1968 = vrot.slane %v1888, 1
  %v1969 = vsel %vm1936, %v1966, %v1968
  %v1970 = vrot.slane %v1889, 1
  %v1971 = vsel %vm1936, %v1968, %v1970
  %v1972 = vrot.slane %v1890, 1
  %v1973 = vsel %vm1936, %v1970, %v1972
  %v1974 = vrot.slane %v1891, 1
  %v1975 = vsel %vm1936, %v1972, %v1974
  %v1976 = vrot.slane %v1892, 1
  %v1977 = vsel %vm1936, %v1974, %v1976
  %v1978 = vrot.slane %v1893, 1
  %v1979 = vsel %vm1936, %v1976, %v1978
  %v1980 = vrot.slane %v1894, 1
  %v1981 = vsel %vm1936, %v1978, %v1980
  %v1982 = vrot.slane %v1895, 1
  %v1983 = vsel %vm1936, %v1980, %v1982
  %v1984 = vrot.slane %v1896, 1
  %v1985 = vsel %vm1936, %v1982, %v1984
  %v1986 = vrot.slane %v1897, 1
  %v1987 = vsel %vm1936, %v1984, %v1986
  %v1988 = vrot.slane %v1898, 1
  %v1989 = vsel %vm1936, %v1986, %v1988
  %v1990 = vrot.slane %v1899, 1
  %v1991 = vsel %vm1936, %v1988, %v1990
  %v1992 = vrot.slane %v1900, 1
  %v1993 = vsel %vm1936, %v1990, %v1992
  %v1994 = vrot.slane %v1901, 1
  %v1995 = vsel %vm1936, %v1992, %v1994
  %v1996 = vrot.slane %v1902, 1
  %v1997 = vsel %vm1936, %v1994, %v1996
  %v1998 = vrot.slane %v1903, 1
  %v1999 = vsel %vm1936, %v1996, %v1998
  %v2032 = vmax.f32 %v1872, %v1939
  %v2033 = vmax.f32 %v1873, %v1941
  %v2034 = vmax.f32 %v1874, %v1943
  %v2035 = vmax.f32 %v1875, %v1945
  %v2036 = vmax.f32 %v1876, %v1947
  %v2037 = vmax.f32 %v1877, %v1949
  %v2038 = vmax.f32 %v1878, %v1951
  %v2039 = vmax.f32 %v1879, %v1953
  %v2040 = vmax.f32 %v1880, %v1955
  %v2041 = vmax.f32 %v1881, %v1957
  %v2042 = vmax.f32 %v1882, %v1959
  %v2043 = vmax.f32 %v1883, %v1961
  %v2044 = vmax.f32 %v1884, %v1963
  %v2045 = vmax.f32 %v1885, %v1965
  %v2046 = vmax.f32 %v1886, %v1967
  %v2047 = vmax.f32 %v1887, %v1969
  %v2048 = vmax.f32 %v1888, %v1971
  %v2049 = vmax.f32 %v1889, %v1973
  %v2050 = vmax.f32 %v1890, %v1975
  %v2051 = vmax.f32 %v1891, %v1977
  %v2052 = vmax.f32 %v1892, %v1979
  %v2053 = vmax.f32 %v1893, %v1981
  %v2054 = vmax.f32 %v1894, %v1983
  %v2055 = vmax.f32 %v1895, %v1985
  %v2056 = vmax.f32 %v1896, %v1987
  %v2057 = vmax.f32 %v1897, %v1989
  %v2058 = vmax.f32 %v1898, %v1991
  %v2059 = vmax.f32 %v1899, %v1993
  %v2060 = vmax.f32 %v1900, %v1995
  %v2061 = vmax.f32 %v1901, %v1997
  %v2062 = vmax.f32 %v1902, %v1999
  %v2063 = vmax.f32 %v1903, %v1998
  %v2064 = vlaneseq
  %v2065 = vshrl.u32 %v2064, 7
  %v2066 = vsub.s32 0, %v2065
  %v2067 = vrot.slane %v24, %v2066
  %v2068 = vadd.f32 %v2032, %v2067
  %v2069 = vadd.f32 %v2033, %v2067
  %v2070 = vadd.f32 %v2034, %v2067
  %v2071 = vadd.f32 %v2035, %v2067
  %v2072 = vadd.f32 %v2036, %v2067
  %v2073 = vadd.f32 %v2037, %v2067
  %v2074 = vadd.f32 %v2038, %v2067
  %v2075 = vadd.f32 %v2039, %v2067
  %v2076 = vadd.f32 %v2040, %v2067
  %v2077 = vadd.f32 %v2041, %v2067
  %v2078 = vadd.f32 %v2042, %v2067
  %v2079 = vadd.f32 %v2043, %v2067
  %v2080 = vadd.f32 %v2044, %v2067
  %v2081 = vadd.f32 %v2045, %v2067
  %v2082 = vadd.f32 %v2046, %v2067
  %v2083 = vadd.f32 %v2047, %v2067
  %v2084 = vadd.f32 %v2048, %v2067
  %v2085 = vadd.f32 %v2049, %v2067
  %v2086 = vadd.f32 %v2050, %v2067
  %v2087 = vadd.f32 %v2051, %v2067
  %v2088 = vadd.f32 %v2052, %v2067
  %v2089 = vadd.f32 %v2053, %v2067
  %v2090 = vadd.f32 %v2054, %v2067
  %v2091 = vadd.f32 %v2055, %v2067
  %v2092 = vadd.f32 %v2056, %v2067
  %v2093 = vadd.f32 %v2057, %v2067
  %v2094 = vadd.f32 %v2058, %v2067
  %v2095 = vadd.f32 %v2059, %v2067
  %v2096 = vadd.f32 %v2060, %v2067
  %v2097 = vadd.f32 %v2061, %v2067
  %v2098 = vadd.f32 %v2062, %v2067
  %v2099 = vadd.f32 %v2063, %v2067
  %v2100 = vmax.f32 %v2068, 0.0
  %v2101 = vmax.f32 %v2069, 0.0
  %v2102 = vmax.f32 %v2070, 0.0
  %v2103 = vmax.f32 %v2071, 0.0
  %v2104 = vmax.f32 %v2072, 0.0
  %v2105 = vmax.f32 %v2073, 0.0
  %v2106 = vmax.f32 %v2074, 0.0
  %v2107 = vmax.f32 %v2075, 0.0
  %v2108 = vmax.f32 %v2076, 0.0
  %v2109 = vmax.f32 %v2077, 0.0
  %v2110 = vmax.f32 %v2078, 0.0
  %v2111 = vmax.f32 %v2079, 0.0
  %v2112 = vmax.f32 %v2080, 0.0
  %v2113 = vmax.f32 %v2081, 0.0
  %v2114 = vmax.f32 %v2082, 0.0
  %v2115 = vmax.f32 %v2083, 0.0
  %v2116 = vmax.f32 %v2084, 0.0
  %v2117 = vmax.f32 %v2085, 0.0
  %v2118 = vmax.f32 %v2086, 0.0
  %v2119 = vmax.f32 %v2087, 0.0
  %v2120 = vmax.f32 %v2088, 0.0
  %v2121 = vmax.f32 %v2089, 0.0
  %v2122 = vmax.f32 %v2090, 0.0
  %v2123 = vmax.f32 %v2091, 0.0
  %v2124 = vmax.f32 %v2092, 0.0
  %v2125 = vmax.f32 %v2093, 0.0
  %v2126 = vmax.f32 %v2094, 0.0
  %v2127 = vmax.f32 %v2095, 0.0
  %v2128 = vmax.f32 %v2096, 0.0
  %v2129 = vmax.f32 %v2097, 0.0
  %v2130 = vmax.f32 %v2098, 0.0
  %v2131 = vmax.f32 %v2099, 0.0
  %v2132 = vpack.c.bf16 %v2101, %v2100
  %v2133 = vpack.c.bf16 %v2103, %v2102
  %v2134 = vpack.c.bf16 %v2105, %v2104
  %v2135 = vpack.c.bf16 %v2107, %v2106
  %v2136 = vpack.c.bf16 %v2109, %v2108
  %v2137 = vpack.c.bf16 %v2111, %v2110
  %v2138 = vpack.c.bf16 %v2113, %v2112
  %v2139 = vpack.c.bf16 %v2115, %v2114
  %v2140 = vpack.c.bf16 %v2117, %v2116
  %v2141 = vpack.c.bf16 %v2119, %v2118
  %v2142 = vpack.c.bf16 %v2121, %v2120
  %v2143 = vpack.c.bf16 %v2123, %v2122
  %v2144 = vpack.c.bf16 %v2125, %v2124
  %v2145 = vpack.c.bf16 %v2127, %v2126
  %v2146 = vpack.c.bf16 %v2129, %v2128
  %v2147 = vpack.c.bf16 %v2130, %v2130
  %v2148 = vld [vmem:[%s2] sm:$0xff]
  %v2149 = vld [vmem:[%s2 + $0x8] sm:$0xff]
  %v2150 = vld [vmem:[%s2 + $0x10] sm:$0xff]
  %v2151 = vld [vmem:[%s2 + $0x18] sm:$0xff]
  %v2152 = vld [vmem:[%s2 + $0x20] sm:$0xff]
  %v2153 = vld [vmem:[%s2 + $0x28] sm:$0xff]
  %v2154 = vld [vmem:[%s2 + $0x30] sm:$0xff]
  %v2155 = vld [vmem:[%s2 + $0x38] sm:$0xff]
  %v2156 = vld [vmem:[%s2 + $0x40] sm:$0xff]
  %v2157 = vld [vmem:[%s2 + $0x48] sm:$0xff]
  %v2158 = vld [vmem:[%s2 + $0x50] sm:$0xff]
  %v2159 = vld [vmem:[%s2 + $0x58] sm:$0xff]
  %v2160 = vld [vmem:[%s2 + $0x60] sm:$0xff]
  %v2161 = vld [vmem:[%s2 + $0x68] sm:$0xff]
  %v2162 = vld [vmem:[%s2 + $0x70] sm:$0xff]
  %v2163 = vld [vmem:[%s2 + $0x78] sm:$0xff]
  %s2164 = scalar_lea.vmem %s2, 128
  %v2165 = vld [vmem:[%s2164] sm:$0xff]
  %v2166 = vld [vmem:[%s2164 + $0x8] sm:$0xff]
  %v2167 = vld [vmem:[%s2164 + $0x10] sm:$0xff]
  %v2168 = vld [vmem:[%s2164 + $0x18] sm:$0xff]
  %v2169 = vld [vmem:[%s2164 + $0x20] sm:$0xff]
  %v2170 = vld [vmem:[%s2164 + $0x28] sm:$0xff]
  %v2171 = vld [vmem:[%s2164 + $0x30] sm:$0xff]
  %v2172 = vld [vmem:[%s2164 + $0x38] sm:$0xff]
  %v2173 = vld [vmem:[%s2164 + $0x40] sm:$0xff]
  %v2174 = vld [vmem:[%s2164 + $0x48] sm:$0xff]
  %v2175 = vld [vmem:[%s2164 + $0x50] sm:$0xff]
  %v2176 = vld [vmem:[%s2164 + $0x58] sm:$0xff]
  %v2177 = vld [vmem:[%s2164 + $0x60] sm:$0xff]
  %v2178 = vld [vmem:[%s2164 + $0x68] sm:$0xff]
  %v2179 = vld [vmem:[%s2164 + $0x70] sm:$0xff]
  %v2180 = vld [vmem:[%s2164 + $0x78] sm:$0xff]
  %v2197 = vrot.slane %v2132, 1
  %v2198 = vrot.slane %v2133, 1
  %v2199 = vsel %vm747, %v2197, %v2198
  %v2200 = vrot.slane %v2134, 1
  %v2201 = vsel %vm747, %v2198, %v2200
  %v2202 = vrot.slane %v2135, 1
  %v2203 = vsel %vm747, %v2200, %v2202
  %v2204 = vrot.slane %v2136, 1
  %v2205 = vsel %vm747, %v2202, %v2204
  %v2206 = vrot.slane %v2137, 1
  %v2207 = vsel %vm747, %v2204, %v2206
  %v2208 = vrot.slane %v2138, 1
  %v2209 = vsel %vm747, %v2206, %v2208
  %v2210 = vrot.slane %v2139, 1
  %v2211 = vsel %vm747, %v2208, %v2210
  %v2212 = vrot.slane %v2140, 1
  %v2213 = vsel %vm747, %v2210, %v2212
  %v2214 = vrot.slane %v2141, 1
  %v2215 = vsel %vm747, %v2212, %v2214
  %v2216 = vrot.slane %v2142, 1
  %v2217 = vsel %vm747, %v2214, %v2216
  %v2218 = vrot.slane %v2143, 1
  %v2219 = vsel %vm747, %v2216, %v2218
  %v2220 = vrot.slane %v2144, 1
  %v2221 = vsel %vm747, %v2218, %v2220
  %v2222 = vrot.slane %v2145, 1
  %v2223 = vsel %vm747, %v2220, %v2222
  %v2224 = vrot.slane %v2146, 1
  %v2225 = vsel %vm747, %v2222, %v2224
  %v2226 = vrot.slane %v2147, 1
  %v2227 = vsel %vm747, %v2224, %v2226
  %v2260 = vunpack.c.l.b16 %v2165
  %v2261 = vunpack.c.h.b16 %v2165
  %v2262 = vunpack.c.l.b16 %v2166
  %v2263 = vunpack.c.h.b16 %v2166
  %v2264 = vunpack.c.l.b16 %v2167
  %v2265 = vunpack.c.h.b16 %v2167
  %v2266 = vunpack.c.l.b16 %v2168
  %v2267 = vunpack.c.h.b16 %v2168
  %v2268 = vunpack.c.l.b16 %v2169
  %v2269 = vunpack.c.h.b16 %v2169
  %v2270 = vunpack.c.l.b16 %v2170
  %v2271 = vunpack.c.h.b16 %v2170
  %v2272 = vunpack.c.l.b16 %v2171
  %v2273 = vunpack.c.h.b16 %v2171
  %v2274 = vunpack.c.l.b16 %v2172
  %v2275 = vunpack.c.h.b16 %v2172
  %v2276 = vunpack.c.l.b16 %v2173
  %v2277 = vunpack.c.h.b16 %v2173
  %v2278 = vunpack.c.l.b16 %v2174
  %v2279 = vunpack.c.h.b16 %v2174
  %v2280 = vunpack.c.l.b16 %v2175
  %v2281 = vunpack.c.h.b16 %v2175
  %v2282 = vunpack.c.l.b16 %v2176
  %v2283 = vunpack.c.h.b16 %v2176
  %v2284 = vunpack.c.l.b16 %v2177
  %v2285 = vunpack.c.h.b16 %v2177
  %v2286 = vunpack.c.l.b16 %v2178
  %v2287 = vunpack.c.h.b16 %v2178
  %v2288 = vunpack.c.l.b16 %v2179
  %v2289 = vunpack.c.h.b16 %v2179
  %v2290 = vunpack.c.l.b16 %v2180
  %v2291 = vunpack.c.h.b16 %v2180
  %v2292 = vpack.c.b16 %v2262, %v2260
  %v2293 = vpack.c.b16 %v2263, %v2261
  %v2294 = vpack.c.b16 %v2266, %v2264
  %v2295 = vpack.c.b16 %v2267, %v2265
  %v2296 = vpack.c.b16 %v2270, %v2268
  %v2297 = vpack.c.b16 %v2271, %v2269
  %v2298 = vpack.c.b16 %v2274, %v2272
  %v2299 = vpack.c.b16 %v2275, %v2273
  %v2300 = vpack.c.b16 %v2278, %v2276
  %v2301 = vpack.c.b16 %v2279, %v2277
  %v2302 = vpack.c.b16 %v2282, %v2280
  %v2303 = vpack.c.b16 %v2283, %v2281
  %v2304 = vpack.c.b16 %v2286, %v2284
  %v2305 = vpack.c.b16 %v2287, %v2285
  %v2306 = vpack.c.b16 %v2290, %v2288
  %v2307 = vpack.c.b16 %v2291, %v2289
  %2324 = vmatprep.subr.bf16.mxu0 %v2293
  %2325 = vmatpush1.bf16.msra.mxu0 %v2292
  %2326 = vmatprep.subr.bf16.mxu0 %v2295
  %2327 = vmatpush1.bf16.msra.mxu0 %v2294
  %2328 = vmatprep.subr.bf16.mxu0 %v2297
  %2329 = vmatpush1.bf16.msra.mxu0 %v2296
  %2330 = vmatprep.subr.bf16.mxu0 %v2299
  %2331 = vmatpush1.bf16.msra.mxu0 %v2298
  %2332 = vmatprep.subr.bf16.mxu0 %v2301
  %2333 = vmatpush1.bf16.msra.mxu0 %v2300
  %2334 = vmatprep.subr.bf16.mxu0 %v2303
  %2335 = vmatpush1.bf16.msra.mxu0 %v2302
  %2336 = vmatprep.subr.bf16.mxu0 %v2305
  %2337 = vmatpush1.bf16.msra.mxu0 %v2304
  %2338 = vmatprep.subr.bf16.mxu0 %v2307
  %2339 = vmatpush1.bf16.msra.mxu0 %v2306
  %2340 = vmatprep.subr.bf16.mxu0 0
  %2341 = vmatpush1.bf16.msra.mxu0 0
  %2342 = vmatprep.subr.bf16.mxu0 0
  %2343 = vmatpush1.bf16.msra.mxu0 0
  %2344 = vmatprep.subr.bf16.mxu0 0
  %2345 = vmatpush1.bf16.msra.mxu0 0
  %2346 = vmatprep.subr.bf16.mxu0 0
  %2347 = vmatpush1.bf16.msra.mxu0 0
  %2348 = vmatprep.subr.bf16.mxu0 0
  %2349 = vmatpush1.bf16.msra.mxu0 0
  %2350 = vmatprep.subr.bf16.mxu0 0
  %2351 = vmatpush1.bf16.msra.mxu0 0
  %2352 = vmatprep.subr.bf16.mxu0 0
  %2353 = vmatpush1.bf16.msra.mxu0 0
  %2354 = vmatprep.subr.bf16.mxu0 0
  %2355 = vmatpush1.bf16.msra.mxu0 0
  %2356 = vmatprep.mubr.bf16.mxu0 0
  %2357 = vmatmul.mubr.bf16.gmra.mrb[0].mxu0 %v2199
  %v2358 = vpop.f32.mrb[0].mxu0
  %v2359 = vadd.f32 0.0, %v2358
  %v2360 = vpop.f32.mrb[0].mxu0
  %v2361 = vadd.f32 0.0, %v2360
  %v2362 = vpop.f32.mrb[0].mxu0
  %v2363 = vadd.f32 0.0, %v2362
  %v2364 = vpop.f32.mrb[0].mxu0
  %v2365 = vadd.f32 0.0, %v2364
  %2366 = vmatprep.mubr.bf16.mxu0 0
  %2367 = vmatmul.mubr.bf16.gmra.mrb[0].mxu0 %v2201
  %v2368 = vpop.f32.mrb[0].mxu0
  %v2369 = vadd.f32 0.0, %v2368
  %v2370 = vpop.f32.mrb[0].mxu0
  %v2371 = vadd.f32 0.0, %v2370
  %v2372 = vpop.f32.mrb[0].mxu0
  %v2373 = vadd.f32 0.0, %v2372
  %v2374 = vpop.f32.mrb[0].mxu0
  %v2375 = vadd.f32 0.0, %v2374
  %2376 = vmatprep.mubr.bf16.mxu0 0
  %2377 = vmatmul.mubr.bf16.gmra.mrb[0].mxu0 %v2203
  %v2378 = vpop.f32.mrb[0].mxu0
  %v2379 = vadd.f32 0.0, %v2378
  %v2380 = vpop.f32.mrb[0].mxu0
  %v2381 = vadd.f32 0.0, %v2380
  %v2382 = vpop.f32.mrb[0].mxu0
  %v2383 = vadd.f32 0.0, %v2382
  %v2384 = vpop.f32.mrb[0].mxu0
  %v2385 = vadd.f32 0.0, %v2384
  %2386 = vmatprep.mubr.bf16.mxu0 0
  %2387 = vmatmul.mubr.bf16.gmra.mrb[0].mxu0 %v2205
  %v2388 = vpop.f32.mrb[0].mxu0
  %v2389 = vadd.f32 0.0, %v2388
  %v2390 = vpop.f32.mrb[0].mxu0
  %v2391 = vadd.f32 0.0, %v2390
  %v2392 = vpop.f32.mrb[0].mxu0
  %v2393 = vadd.f32 0.0, %v2392
  %v2394 = vpop.f32.mrb[0].mxu0
  %v2395 = vadd.f32 0.0, %v2394
  %2396 = vmatprep.mubr.bf16.mxu0 0
  %2397 = vmatmul.mubr.bf16.gmra.mrb[0].mxu0 %v2207
  %v2398 = vpop.f32.mrb[0].mxu0
  %v2399 = vadd.f32 0.0, %v2398
  %v2400 = vpop.f32.mrb[0].mxu0
  %v2401 = vadd.f32 0.0, %v2400
  %v2402 = vpop.f32.mrb[0].mxu0
  %v2403 = vadd.f32 0.0, %v2402
  %v2404 = vpop.f32.mrb[0].mxu0
  %v2405 = vadd.f32 0.0, %v2404
  %2406 = vmatprep.mubr.bf16.mxu0 0
  %2407 = vmatmul.mubr.bf16.gmra.mrb[0].mxu0 %v2209
  %v2408 = vpop.f32.mrb[0].mxu0
  %v2409 = vadd.f32 0.0, %v2408
  %v2410 = vpop.f32.mrb[0].mxu0
  %v2411 = vadd.f32 0.0, %v2410
  %v2412 = vpop.f32.mrb[0].mxu0
  %v2413 = vadd.f32 0.0, %v2412
  %v2414 = vpop.f32.mrb[0].mxu0
  %v2415 = vadd.f32 0.0, %v2414
  %2416 = vmatprep.mubr.bf16.mxu0 0
  %2417 = vmatmul.mubr.bf16.gmra.mrb[0].mxu0 %v2211
  %v2418 = vpop.f32.mrb[0].mxu0
  %v2419 = vadd.f32 0.0, %v2418
  %v2420 = vpop.f32.mrb[0].mxu0
  %v2421 = vadd.f32 0.0, %v2420
  %v2422 = vpop.f32.mrb[0].mxu0
  %v2423 = vadd.f32 0.0, %v2422
  %v2424 = vpop.f32.mrb[0].mxu0
  %v2425 = vadd.f32 0.0, %v2424
  %2426 = vmatprep.mubr.bf16.mxu0 0
  %2427 = vmatmul.mubr.bf16.gmra.mrb[0].mxu0 %v2213
  %v2428 = vpop.f32.mrb[0].mxu0
  %v2429 = vadd.f32 0.0, %v2428
  %v2430 = vpop.f32.mrb[0].mxu0
  %v2431 = vadd.f32 0.0, %v2430
  %v2432 = vpop.f32.mrb[0].mxu0
  %v2433 = vadd.f32 0.0, %v2432
  %v2434 = vpop.f32.mrb[0].mxu0
  %v2435 = vadd.f32 0.0, %v2434
  %2436 = vmatprep.mubr.bf16.mxu0 0
  %2437 = vmatmul.mubr.bf16.gmra.mrb[0].mxu0 %v2215
  %v2438 = vpop.f32.mrb[0].mxu0
  %v2439 = vadd.f32 0.0, %v2438
  %v2440 = vpop.f32.mrb[0].mxu0
  %v2441 = vadd.f32 0.0, %v2440
  %v2442 = vpop.f32.mrb[0].mxu0
  %v2443 = vadd.f32 0.0, %v2442
  %v2444 = vpop.f32.mrb[0].mxu0
  %v2445 = vadd.f32 0.0, %v2444
  %2446 = vmatprep.mubr.bf16.mxu0 0
  %2447 = vmatmul.mubr.bf16.gmra.mrb[0].mxu0 %v2217
  %v2448 = vpop.f32.mrb[0].mxu0
  %v2449 = vadd.f32 0.0, %v2448
  %v2450 = vpop.f32.mrb[0].mxu0
  %v2451 = vadd.f32 0.0, %v2450
  %v2452 = vpop.f32.mrb[0].mxu0
  %v2453 = vadd.f32 0.0, %v2452
  %v2454 = vpop.f32.mrb[0].mxu0
  %v2455 = vadd.f32 0.0, %v2454
  %2456 = vmatprep.mubr.bf16.mxu0 0
  %2457 = vmatmul.mubr.bf16.gmra.mrb[0].mxu0 %v2219
  %v2458 = vpop.f32.mrb[0].mxu0
  %v2459 = vadd.f32 0.0, %v2458
  %v2460 = vpop.f32.mrb[0].mxu0
  %v2461 = vadd.f32 0.0, %v2460
  %v2462 = vpop.f32.mrb[0].mxu0
  %v2463 = vadd.f32 0.0, %v2462
  %v2464 = vpop.f32.mrb[0].mxu0
  %v2465 = vadd.f32 0.0, %v2464
  %2466 = vmatprep.mubr.bf16.mxu0 0
  %2467 = vmatmul.mubr.bf16.gmra.mrb[0].mxu0 %v2221
  %v2468 = vpop.f32.mrb[0].mxu0
  %v2469 = vadd.f32 0.0, %v2468
  %v2470 = vpop.f32.mrb[0].mxu0
  %v2471 = vadd.f32 0.0, %v2470
  %v2472 = vpop.f32.mrb[0].mxu0
  %v2473 = vadd.f32 0.0, %v2472
  %v2474 = vpop.f32.mrb[0].mxu0
  %v2475 = vadd.f32 0.0, %v2474
  %2476 = vmatprep.mubr.bf16.mxu0 0
  %2477 = vmatmul.mubr.bf16.gmra.mrb[0].mxu0 %v2223
  %v2478 = vpop.f32.mrb[0].mxu0
  %v2479 = vadd.f32 0.0, %v2478
  %v2480 = vpop.f32.mrb[0].mxu0
  %v2481 = vadd.f32 0.0, %v2480
  %v2482 = vpop.f32.mrb[0].mxu0
  %v2483 = vadd.f32 0.0, %v2482
  %v2484 = vpop.f32.mrb[0].mxu0
  %v2485 = vadd.f32 0.0, %v2484
  %2486 = vmatprep.mubr.bf16.mxu0 0
  %2487 = vmatmul.mubr.bf16.gmra.mrb[0].mxu0 %v2225
  %v2488 = vpop.f32.mrb[0].mxu0
  %v2489 = vadd.f32 0.0, %v2488
  %v2490 = vpop.f32.mrb[0].mxu0
  %v2491 = vadd.f32 0.0, %v2490
  %v2492 = vpop.f32.mrb[0].mxu0
  %v2493 = vadd.f32 0.0, %v2492
  %v2494 = vpop.f32.mrb[0].mxu0
  %v2495 = vadd.f32 0.0, %v2494
  %2496 = vmatprep.mubr.bf16.mxu0 0
  %2497 = vmatmul.mubr.bf16.gmra.mrb[0].mxu0 %v2227
  %v2498 = vpop.f32.mrb[0].mxu0
  %v2499 = vadd.f32 0.0, %v2498
  %v2500 = vpop.f32.mrb[0].mxu0
  %v2501 = vadd.f32 0.0, %v2500
  %v2502 = vpop.f32.mrb[0].mxu0
  %v2503 = vadd.f32 0.0, %v2502
  %v2504 = vpop.f32.mrb[0].mxu0
  %v2505 = vadd.f32 0.0, %v2504
  %2506 = vmatprep.mubr.bf16.mxu0 0
  %2507 = vmatmul.mubr.bf16.gmra.mrb[0].mxu0 %v2226
  %v2508 = vpop.f32.mrb[0].mxu0
  %v2509 = vadd.f32 0.0, %v2508
  %v2510 = vpop.f32.mrb[0].mxu0
  %v2511 = vadd.f32 0.0, %v2510
  %v2512 = vpop.f32.mrb[0].mxu0
  %v2513 = vpop.f32.mrb[0].mxu0
  %2514 = vdwg.mxu0
  %v2531 = vunpack.c.l.b16 %v2148
  %v2532 = vunpack.c.h.b16 %v2148
  %v2533 = vunpack.c.l.b16 %v2149
  %v2534 = vunpack.c.h.b16 %v2149
  %v2535 = vunpack.c.l.b16 %v2150
  %v2536 = vunpack.c.h.b16 %v2150
  %v2537 = vunpack.c.l.b16 %v2151
  %v2538 = vunpack.c.h.b16 %v2151
  %v2539 = vunpack.c.l.b16 %v2152
  %v2540 = vunpack.c.h.b16 %v2152
  %v2541 = vunpack.c.l.b16 %v2153
  %v2542 = vunpack.c.h.b16 %v2153
  %v2543 = vunpack.c.l.b16 %v2154
  %v2544 = vunpack.c.h.b16 %v2154
  %v2545 = vunpack.c.l.b16 %v2155
  %v2546 = vunpack.c.h.b16 %v2155
  %v2547 = vunpack.c.l.b16 %v2156
  %v2548 = vunpack.c.h.b16 %v2156
  %v2549 = vunpack.c.l.b16 %v2157
  %v2550 = vunpack.c.h.b16 %v2157
  %v2551 = vunpack.c.l.b16 %v2158
  %v2552 = vunpack.c.h.b16 %v2158
  %v2553 = vunpack.c.l.b16 %v2159
  %v2554 = vunpack.c.h.b16 %v2159
  %v2555 = vunpack.c.l.b16 %v2160
  %v2556 = vunpack.c.h.b16 %v2160
  %v2557 = vunpack.c.l.b16 %v2161
  %v2558 = vunpack.c.h.b16 %v2161
  %v2559 = vunpack.c.l.b16 %v2162
  %v2560 = vunpack.c.h.b16 %v2162
  %v2561 = vunpack.c.l.b16 %v2163
  %v2562 = vunpack.c.h.b16 %v2163
  %v2563 = vpack.c.b16 %v2533, %v2531
  %v2564 = vpack.c.b16 %v2534, %v2532
  %v2565 = vpack.c.b16 %v2537, %v2535
  %v2566 = vpack.c.b16 %v2538, %v2536
  %v2567 = vpack.c.b16 %v2541, %v2539
  %v2568 = vpack.c.b16 %v2542, %v2540
  %v2569 = vpack.c.b16 %v2545, %v2543
  %v2570 = vpack.c.b16 %v2546, %v2544
  %v2571 = vpack.c.b16 %v2549, %v2547
  %v2572 = vpack.c.b16 %v2550, %v2548
  %v2573 = vpack.c.b16 %v2553, %v2551
  %v2574 = vpack.c.b16 %v2554, %v2552
  %v2575 = vpack.c.b16 %v2557, %v2555
  %v2576 = vpack.c.b16 %v2558, %v2556
  %v2577 = vpack.c.b16 %v2561, %v2559
  %v2578 = vpack.c.b16 %v2562, %v2560
  %2595 = vmatprep.subr.bf16.mxu0 %v2564
  %2596 = vmatpush1.bf16.msra.mxu0 %v2563
  %2597 = vmatprep.subr.bf16.mxu0 %v2566
  %2598 = vmatpush1.bf16.msra.mxu0 %v2565
  %2599 = vmatprep.subr.bf16.mxu0 %v2568
  %2600 = vmatpush1.bf16.msra.mxu0 %v2567
  %2601 = vmatprep.subr.bf16.mxu0 %v2570
  %2602 = vmatpush1.bf16.msra.mxu0 %v2569
  %2603 = vmatprep.subr.bf16.mxu0 %v2572
  %2604 = vmatpush1.bf16.msra.mxu0 %v2571
  %2605 = vmatprep.subr.bf16.mxu0 %v2574
  %2606 = vmatpush1.bf16.msra.mxu0 %v2573
  %2607 = vmatprep.subr.bf16.mxu0 %v2576
  %2608 = vmatpush1.bf16.msra.mxu0 %v2575
  %2609 = vmatprep.subr.bf16.mxu0 %v2578
  %2610 = vmatpush1.bf16.msra.mxu0 %v2577
  %2611 = vmatprep.subr.bf16.mxu0 0
  %2612 = vmatpush1.bf16.msra.mxu0 0
  %2613 = vmatprep.subr.bf16.mxu0 0
  %2614 = vmatpush1.bf16.msra.mxu0 0
  %2615 = vmatprep.subr.bf16.mxu0 0
  %2616 = vmatpush1.bf16.msra.mxu0 0
  %2617 = vmatprep.subr.bf16.mxu0 0
  %2618 = vmatpush1.bf16.msra.mxu0 0
  %2619 = vmatprep.subr.bf16.mxu0 0
  %2620 = vmatpush1.bf16.msra.mxu0 0
  %2621 = vmatprep.subr.bf16.mxu0 0
  %2622 = vmatpush1.bf16.msra.mxu0 0
  %2623 = vmatprep.subr.bf16.mxu0 0
  %2624 = vmatpush1.bf16.msra.mxu0 0
  %2625 = vmatprep.subr.bf16.mxu0 0
  %2626 = vmatpush1.bf16.msra.mxu0 0
  %2627 = vmatprep.mubr.bf16.mxu0 0
  %2628 = vmatmul.mubr.bf16.gmra.mrb[0].mxu0 %v2132
  %v2629 = vpop.f32.mrb[0].mxu0
  %v2630 = vadd.f32 %v2359, %v2629
  %v2631 = vpop.f32.mrb[0].mxu0
  %v2632 = vadd.f32 %v2361, %v2631
  %v2633 = vpop.f32.mrb[0].mxu0
  %v2634 = vadd.f32 %v2363, %v2633
  %v2635 = vpop.f32.mrb[0].mxu0
  %v2636 = vadd.f32 %v2365, %v2635
  %2637 = vmatprep.mubr.bf16.mxu0 0
  %2638 = vmatmul.mubr.bf16.gmra.mrb[0].mxu0 %v2133
  %v2639 = vpop.f32.mrb[0].mxu0
  %v2640 = vadd.f32 %v2369, %v2639
  %v2641 = vpop.f32.mrb[0].mxu0
  %v2642 = vadd.f32 %v2371, %v2641
  %v2643 = vpop.f32.mrb[0].mxu0
  %v2644 = vadd.f32 %v2373, %v2643
  %v2645 = vpop.f32.mrb[0].mxu0
  %v2646 = vadd.f32 %v2375, %v2645
  %2647 = vmatprep.mubr.bf16.mxu0 0
  %2648 = vmatmul.mubr.bf16.gmra.mrb[0].mxu0 %v2134
  %v2649 = vpop.f32.mrb[0].mxu0
  %v2650 = vadd.f32 %v2379, %v2649
  %v2651 = vpop.f32.mrb[0].mxu0
  %v2652 = vadd.f32 %v2381, %v2651
  %v2653 = vpop.f32.mrb[0].mxu0
  %v2654 = vadd.f32 %v2383, %v2653
  %v2655 = vpop.f32.mrb[0].mxu0
  %v2656 = vadd.f32 %v2385, %v2655
  %2657 = vmatprep.mubr.bf16.mxu0 0
  %2658 = vmatmul.mubr.bf16.gmra.mrb[0].mxu0 %v2135
  %v2659 = vpop.f32.mrb[0].mxu0
  %v2660 = vadd.f32 %v2389, %v2659
  %v2661 = vpop.f32.mrb[0].mxu0
  %v2662 = vadd.f32 %v2391, %v2661
  %v2663 = vpop.f32.mrb[0].mxu0
  %v2664 = vadd.f32 %v2393, %v2663
  %v2665 = vpop.f32.mrb[0].mxu0
  %v2666 = vadd.f32 %v2395, %v2665
  %2667 = vmatprep.mubr.bf16.mxu0 0
  %2668 = vmatmul.mubr.bf16.gmra.mrb[0].mxu0 %v2136
  %v2669 = vpop.f32.mrb[0].mxu0
  %v2670 = vadd.f32 %v2399, %v2669
  %v2671 = vpop.f32.mrb[0].mxu0
  %v2672 = vadd.f32 %v2401, %v2671
  %v2673 = vpop.f32.mrb[0].mxu0
  %v2674 = vadd.f32 %v2403, %v2673
  %v2675 = vpop.f32.mrb[0].mxu0
  %v2676 = vadd.f32 %v2405, %v2675
  %2677 = vmatprep.mubr.bf16.mxu0 0
  %2678 = vmatmul.mubr.bf16.gmra.mrb[0].mxu0 %v2137
  %v2679 = vpop.f32.mrb[0].mxu0
  %v2680 = vadd.f32 %v2409, %v2679
  %v2681 = vpop.f32.mrb[0].mxu0
  %v2682 = vadd.f32 %v2411, %v2681
  %v2683 = vpop.f32.mrb[0].mxu0
  %v2684 = vadd.f32 %v2413, %v2683
  %v2685 = vpop.f32.mrb[0].mxu0
  %v2686 = vadd.f32 %v2415, %v2685
  %2687 = vmatprep.mubr.bf16.mxu0 0
  %2688 = vmatmul.mubr.bf16.gmra.mrb[0].mxu0 %v2138
  %v2689 = vpop.f32.mrb[0].mxu0
  %v2690 = vadd.f32 %v2419, %v2689
  %v2691 = vpop.f32.mrb[0].mxu0
  %v2692 = vadd.f32 %v2421, %v2691
  %v2693 = vpop.f32.mrb[0].mxu0
  %v2694 = vadd.f32 %v2423, %v2693
  %v2695 = vpop.f32.mrb[0].mxu0
  %v2696 = vadd.f32 %v2425, %v2695
  %2697 = vmatprep.mubr.bf16.mxu0 0
  %2698 = vmatmul.mubr.bf16.gmra.mrb[0].mxu0 %v2139
  %v2699 = vpop.f32.mrb[0].mxu0
  %v2700 = vadd.f32 %v2429, %v2699
  %v2701 = vpop.f32.mrb[0].mxu0
  %v2702 = vadd.f32 %v2431, %v2701
  %v2703 = vpop.f32.mrb[0].mxu0
  %v2704 = vadd.f32 %v2433, %v2703
  %v2705 = vpop.f32.mrb[0].mxu0
  %v2706 = vadd.f32 %v2435, %v2705
  %2707 = vmatprep.mubr.bf16.mxu0 0
  %2708 = vmatmul.mubr.bf16.gmra.mrb[0].mxu0 %v2140
  %v2709 = vpop.f32.mrb[0].mxu0
  %v2710 = vadd.f32 %v2439, %v2709
  %v2711 = vpop.f32.mrb[0].mxu0
  %v2712 = vadd.f32 %v2441, %v2711
  %v2713 = vpop.f32.mrb[0].mxu0
  %v2714 = vadd.f32 %v2443, %v2713
  %v2715 = vpop.f32.mrb[0].mxu0
  %v2716 = vadd.f32 %v2445, %v2715
  %2717 = vmatprep.mubr.bf16.mxu0 0
  %2718 = vmatmul.mubr.bf16.gmra.mrb[0].mxu0 %v2141
  %v2719 = vpop.f32.mrb[0].mxu0
  %v2720 = vadd.f32 %v2449, %v2719
  %v2721 = vpop.f32.mrb[0].mxu0
  %v2722 = vadd.f32 %v2451, %v2721
  %v2723 = vpop.f32.mrb[0].mxu0
  %v2724 = vadd.f32 %v2453, %v2723
  %v2725 = vpop.f32.mrb[0].mxu0
  %v2726 = vadd.f32 %v2455, %v2725
  %2727 = vmatprep.mubr.bf16.mxu0 0
  %2728 = vmatmul.mubr.bf16.gmra.mrb[0].mxu0 %v2142
  %v2729 = vpop.f32.mrb[0].mxu0
  %v2730 = vadd.f32 %v2459, %v2729
  %v2731 = vpop.f32.mrb[0].mxu0
  %v2732 = vadd.f32 %v2461, %v2731
  %v2733 = vpop.f32.mrb[0].mxu0
  %v2734 = vadd.f32 %v2463, %v2733
  %v2735 = vpop.f32.mrb[0].mxu0
  %v2736 = vadd.f32 %v2465, %v2735
  %2737 = vmatprep.mubr.bf16.mxu0 0
  %2738 = vmatmul.mubr.bf16.gmra.mrb[0].mxu0 %v2143
  %v2739 = vpop.f32.mrb[0].mxu0
  %v2740 = vadd.f32 %v2469, %v2739
  %v2741 = vpop.f32.mrb[0].mxu0
  %v2742 = vadd.f32 %v2471, %v2741
  %v2743 = vpop.f32.mrb[0].mxu0
  %v2744 = vadd.f32 %v2473, %v2743
  %v2745 = vpop.f32.mrb[0].mxu0
  %v2746 = vadd.f32 %v2475, %v2745
  %2747 = vmatprep.mubr.bf16.mxu0 0
  %2748 = vmatmul.mubr.bf16.gmra.mrb[0].mxu0 %v2144
  %v2749 = vpop.f32.mrb[0].mxu0
  %v2750 = vadd.f32 %v2479, %v2749
  %v2751 = vpop.f32.mrb[0].mxu0
  %v2752 = vadd.f32 %v2481, %v2751
  %v2753 = vpop.f32.mrb[0].mxu0
  %v2754 = vadd.f32 %v2483, %v2753
  %v2755 = vpop.f32.mrb[0].mxu0
  %v2756 = vadd.f32 %v2485, %v2755
  %2757 = vmatprep.mubr.bf16.mxu0 0
  %2758 = vmatmul.mubr.bf16.gmra.mrb[0].mxu0 %v2145
  %v2759 = vpop.f32.mrb[0].mxu0
  %v2760 = vadd.f32 %v2489, %v2759
  %v2761 = vpop.f32.mrb[0].mxu0
  %v2762 = vadd.f32 %v2491, %v2761
  %v2763 = vpop.f32.mrb[0].mxu0
  %v2764 = vadd.f32 %v2493, %v2763
  %v2765 = vpop.f32.mrb[0].mxu0
  %v2766 = vadd.f32 %v2495, %v2765
  %2767 = vmatprep.mubr.bf16.mxu0 0
  %2768 = vmatmul.mubr.bf16.gmra.mrb[0].mxu0 %v2146
  %v2769 = vpop.f32.mrb[0].mxu0
  %v2770 = vadd.f32 %v2499, %v2769
  %v2771 = vpop.f32.mrb[0].mxu0
  %v2772 = vadd.f32 %v2501, %v2771
  %v2773 = vpop.f32.mrb[0].mxu0
  %v2774 = vadd.f32 %v2503, %v2773
  %v2775 = vpop.f32.mrb[0].mxu0
  %v2776 = vadd.f32 %v2505, %v2775
  %2777 = vmatprep.mubr.bf16.mxu0 0
  %2778 = vmatmul.mubr.bf16.gmra.mrb[0].mxu0 %v2147
  %v2779 = vpop.f32.mrb[0].mxu0
  %v2780 = vadd.f32 %v2509, %v2779
  %v2781 = vpop.f32.mrb[0].mxu0
  %v2782 = vadd.f32 %v2511, %v2781
  %v2783 = vpop.f32.mrb[0].mxu0
  %v2784 = vpop.f32.mrb[0].mxu0
  %2785 = vdwg.mxu0
  %s2786 = scalar_lea.vmem %s2, 256
  %v2787 = vld [vmem:[%s2786] sm:$0xff]
  %v2788 = vld [vmem:[%s2786 + $0x8] sm:$0xff]
  %v2789 = vld [vmem:[%s2786 + $0x10] sm:$0xff]
  %v2790 = vld [vmem:[%s2786 + $0x18] sm:$0xff]
  %v2791 = vld [vmem:[%s2786 + $0x20] sm:$0xff]
  %v2792 = vld [vmem:[%s2786 + $0x28] sm:$0xff]
  %v2793 = vld [vmem:[%s2786 + $0x30] sm:$0xff]
  %v2794 = vld [vmem:[%s2786 + $0x38] sm:$0xff]
  %v2795 = vld [vmem:[%s2786 + $0x40] sm:$0xff]
  %v2796 = vld [vmem:[%s2786 + $0x48] sm:$0xff]
  %v2797 = vld [vmem:[%s2786 + $0x50] sm:$0xff]
  %v2798 = vld [vmem:[%s2786 + $0x58] sm:$0xff]
  %v2799 = vld [vmem:[%s2786 + $0x60] sm:$0xff]
  %v2800 = vld [vmem:[%s2786 + $0x68] sm:$0xff]
  %v2801 = vld [vmem:[%s2786 + $0x70] sm:$0xff]
  %v2802 = vld [vmem:[%s2786 + $0x78] sm:$0xff]
  %v2803 = vrot.slane %v2132, 2
  %v2804 = vrot.slane %v2133, 2
  %v2805 = vsel %vm1511, %v2803, %v2804
  %v2806 = vrot.slane %v2134, 2
  %v2807 = vsel %vm1511, %v2804, %v2806
  %v2808 = vrot.slane %v2135, 2
  %v2809 = vsel %vm1511, %v2806, %v2808
  %v2810 = vrot.slane %v2136, 2
  %v2811 = vsel %vm1511, %v2808, %v2810
  %v2812 = vrot.slane %v2137, 2
  %v2813 = vsel %vm1511, %v2810, %v2812
  %v2814 = vrot.slane %v2138, 2
  %v2815 = vsel %vm1511, %v2812, %v2814
  %v2816 = vrot.slane %v2139, 2
  %v2817 = vsel %vm1511, %v2814, %v2816
  %v2818 = vrot.slane %v2140, 2
  %v2819 = vsel %vm1511, %v2816, %v2818
  %v2820 = vrot.slane %v2141, 2
  %v2821 = vsel %vm1511, %v2818, %v2820
  %v2822 = vrot.slane %v2142, 2
  %v2823 = vsel %vm1511, %v2820, %v2822
  %v2824 = vrot.slane %v2143, 2
  %v2825 = vsel %vm1511, %v2822, %v2824
  %v2826 = vrot.slane %v2144, 2
  %v2827 = vsel %vm1511, %v2824, %v2826
  %v2828 = vrot.slane %v2145, 2
  %v2829 = vsel %vm1511, %v2826, %v2828
  %v2830 = vrot.slane %v2146, 2
  %v2831 = vsel %vm1511, %v2828, %v2830
  %v2832 = vrot.slane %v2147, 2
  %v2833 = vsel %vm1511, %v2830, %v2832
  %v2866 = vunpack.c.l.b16 %v2787
  %v2867 = vunpack.c.h.b16 %v2787
  %v2868 = vunpack.c.l.b16 %v2788
  %v2869 = vunpack.c.h.b16 %v2788
  %v2870 = vunpack.c.l.b16 %v2789
  %v2871 = vunpack.c.h.b16 %v2789
  %v2872 = vunpack.c.l.b16 %v2790
  %v2873 = vunpack.c.h.b16 %v2790
  %v2874 = vunpack.c.l.b16 %v2791
  %v2875 = vunpack.c.h.b16 %v2791
  %v2876 = vunpack.c.l.b16 %v2792
  %v2877 = vunpack.c.h.b16 %v2792
  %v2878 = vunpack.c.l.b16 %v2793
  %v2879 = vunpack.c.h.b16 %v2793
  %v2880 = vunpack.c.l.b16 %v2794
  %v2881 = vunpack.c.h.b16 %v2794
  %v2882 = vunpack.c.l.b16 %v2795
  %v2883 = vunpack.c.h.b16 %v2795
  %v2884 = vunpack.c.l.b16 %v2796
  %v2885 = vunpack.c.h.b16 %v2796
  %v2886 = vunpack.c.l.b16 %v2797
  %v2887 = vunpack.c.h.b16 %v2797
  %v2888 = vunpack.c.l.b16 %v2798
  %v2889 = vunpack.c.h.b16 %v2798
  %v2890 = vunpack.c.l.b16 %v2799
  %v2891 = vunpack.c.h.b16 %v2799
  %v2892 = vunpack.c.l.b16 %v2800
  %v2893 = vunpack.c.h.b16 %v2800
  %v2894 = vunpack.c.l.b16 %v2801
  %v2895 = vunpack.c.h.b16 %v2801
  %v2896 = vunpack.c.l.b16 %v2802
  %v2897 = vunpack.c.h.b16 %v2802
  %v2898 = vpack.c.b16 %v2868, %v2866
  %v2899 = vpack.c.b16 %v2869, %v2867
  %v2900 = vpack.c.b16 %v2872, %v2870
  %v2901 = vpack.c.b16 %v2873, %v2871
  %v2902 = vpack.c.b16 %v2876, %v2874
  %v2903 = vpack.c.b16 %v2877, %v2875
  %v2904 = vpack.c.b16 %v2880, %v2878
  %v2905 = vpack.c.b16 %v2881, %v2879
  %v2906 = vpack.c.b16 %v2884, %v2882
  %v2907 = vpack.c.b16 %v2885, %v2883
  %v2908 = vpack.c.b16 %v2888, %v2886
  %v2909 = vpack.c.b16 %v2889, %v2887
  %v2910 = vpack.c.b16 %v2892, %v2890
  %v2911 = vpack.c.b16 %v2893, %v2891
  %v2912 = vpack.c.b16 %v2896, %v2894
  %v2913 = vpack.c.b16 %v2897, %v2895
  %2930 = vmatprep.subr.bf16.mxu0 %v2899
  %2931 = vmatpush1.bf16.msra.mxu0 %v2898
  %2932 = vmatprep.subr.bf16.mxu0 %v2901
  %2933 = vmatpush1.bf16.msra.mxu0 %v2900
  %2934 = vmatprep.subr.bf16.mxu0 %v2903
  %2935 = vmatpush1.bf16.msra.mxu0 %v2902
  %2936 = vmatprep.subr.bf16.mxu0 %v2905
  %2937 = vmatpush1.bf16.msra.mxu0 %v2904
  %2938 = vmatprep.subr.bf16.mxu0 %v2907
  %2939 = vmatpush1.bf16.msra.mxu0 %v2906
  %2940 = vmatprep.subr.bf16.mxu0 %v2909
  %2941 = vmatpush1.bf16.msra.mxu0 %v2908
  %2942 = vmatprep.subr.bf16.mxu0 %v2911
  %2943 = vmatpush1.bf16.msra.mxu0 %v2910
  %2944 = vmatprep.subr.bf16.mxu0 %v2913
  %2945 = vmatpush1.bf16.msra.mxu0 %v2912
  %2946 = vmatprep.subr.bf16.mxu0 0
  %2947 = vmatpush1.bf16.msra.mxu0 0
  %2948 = vmatprep.subr.bf16.mxu0 0
  %2949 = vmatpush1.bf16.msra.mxu0 0
  %2950 = vmatprep.subr.bf16.mxu0 0
  %2951 = vmatpush1.bf16.msra.mxu0 0
  %2952 = vmatprep.subr.bf16.mxu0 0
  %2953 = vmatpush1.bf16.msra.mxu0 0
  %2954 = vmatprep.subr.bf16.mxu0 0
  %2955 = vmatpush1.bf16.msra.mxu0 0
  %2956 = vmatprep.subr.bf16.mxu0 0
  %2957 = vmatpush1.bf16.msra.mxu0 0
  %2958 = vmatprep.subr.bf16.mxu0 0
  %2959 = vmatpush1.bf16.msra.mxu0 0
  %2960 = vmatprep.subr.bf16.mxu0 0
  %2961 = vmatpush1.bf16.msra.mxu0 0
  %2962 = vmatprep.mubr.bf16.mxu0 0
  %2963 = vmatmul.mubr.bf16.gmra.mrb[0].mxu0 %v2805
  %v2964 = vpop.f32.mrb[0].mxu0
  %v2965 = vadd.f32 0.0, %v2964
  %v2966 = vpop.f32.mrb[0].mxu0
  %v2967 = vadd.f32 0.0, %v2966
  %v2968 = vpop.f32.mrb[0].mxu0
  %v2969 = vadd.f32 0.0, %v2968
  %v2970 = vpop.f32.mrb[0].mxu0
  %v2971 = vadd.f32 0.0, %v2970
  %2972 = vmatprep.mubr.bf16.mxu0 0
  %2973 = vmatmul.mubr.bf16.gmra.mrb[0].mxu0 %v2807
  %v2974 = vpop.f32.mrb[0].mxu0
  %v2975 = vadd.f32 0.0, %v2974
  %v2976 = vpop.f32.mrb[0].mxu0
  %v2977 = vadd.f32 0.0, %v2976
  %v2978 = vpop.f32.mrb[0].mxu0
  %v2979 = vadd.f32 0.0, %v2978
  %v2980 = vpop.f32.mrb[0].mxu0
  %v2981 = vadd.f32 0.0, %v2980
  %2982 = vmatprep.mubr.bf16.mxu0 0
  %2983 = vmatmul.mubr.bf16.gmra.mrb[0].mxu0 %v2809
  %v2984 = vpop.f32.mrb[0].mxu0
  %v2985 = vadd.f32 0.0, %v2984
  %v2986 = vpop.f32.mrb[0].mxu0
  %v2987 = vadd.f32 0.0, %v2986
  %v2988 = vpop.f32.mrb[0].mxu0
  %v2989 = vadd.f32 0.0, %v2988
  %v2990 = vpop.f32.mrb[0].mxu0
  %v2991 = vadd.f32 0.0, %v2990
  %2992 = vmatprep.mubr.bf16.mxu0 0
  %2993 = vmatmul.mubr.bf16.gmra.mrb[0].mxu0 %v2811
  %v2994 = vpop.f32.mrb[0].mxu0
  %v2995 = vadd.f32 0.0, %v2994
  %v2996 = vpop.f32.mrb[0].mxu0
  %v2997 = vadd.f32 0.0, %v2996
  %v2998 = vpop.f32.mrb[0].mxu0
  %v2999 = vadd.f32 0.0, %v2998
  %v3000 = vpop.f32.mrb[0].mxu0
  %v3001 = vadd.f32 0.0, %v3000
  %3002 = vmatprep.mubr.bf16.mxu0 0
  %3003 = vmatmul.mubr.bf16.gmra.mrb[0].mxu0 %v2813
  %v3004 = vpop.f32.mrb[0].mxu0
  %v3005 = vadd.f32 0.0, %v3004
  %v3006 = vpop.f32.mrb[0].mxu0
  %v3007 = vadd.f32 0.0, %v3006
  %v3008 = vpop.f32.mrb[0].mxu0
  %v3009 = vadd.f32 0.0, %v3008
  %v3010 = vpop.f32.mrb[0].mxu0
  %v3011 = vadd.f32 0.0, %v3010
  %3012 = vmatprep.mubr.bf16.mxu0 0
  %3013 = vmatmul.mubr.bf16.gmra.mrb[0].mxu0 %v2815
  %v3014 = vpop.f32.mrb[0].mxu0
  %v3015 = vadd.f32 0.0, %v3014
  %v3016 = vpop.f32.mrb[0].mxu0
  %v3017 = vadd.f32 0.0, %v3016
  %v3018 = vpop.f32.mrb[0].mxu0
  %v3019 = vadd.f32 0.0, %v3018
  %v3020 = vpop.f32.mrb[0].mxu0
  %v3021 = vadd.f32 0.0, %v3020
  %3022 = vmatprep.mubr.bf16.mxu0 0
  %3023 = vmatmul.mubr.bf16.gmra.mrb[0].mxu0 %v2817
  %v3024 = vpop.f32.mrb[0].mxu0
  %v3025 = vadd.f32 0.0, %v3024
  %v3026 = vpop.f32.mrb[0].mxu0
  %v3027 = vadd.f32 0.0, %v3026
  %v3028 = vpop.f32.mrb[0].mxu0
  %v3029 = vadd.f32 0.0, %v3028
  %v3030 = vpop.f32.mrb[0].mxu0
  %v3031 = vadd.f32 0.0, %v3030
  %3032 = vmatprep.mubr.bf16.mxu0 0
  %3033 = vmatmul.mubr.bf16.gmra.mrb[0].mxu0 %v2819
  %v3034 = vpop.f32.mrb[0].mxu0
  %v3035 = vadd.f32 0.0, %v3034
  %v3036 = vpop.f32.mrb[0].mxu0
  %v3037 = vadd.f32 0.0, %v3036
  %v3038 = vpop.f32.mrb[0].mxu0
  %v3039 = vadd.f32 0.0, %v3038
  %v3040 = vpop.f32.mrb[0].mxu0
  %v3041 = vadd.f32 0.0, %v3040
  %3042 = vmatprep.mubr.bf16.mxu0 0
  %3043 = vmatmul.mubr.bf16.gmra.mrb[0].mxu0 %v2821
  %v3044 = vpop.f32.mrb[0].mxu0
  %v3045 = vadd.f32 0.0, %v3044
  %v3046 = vpop.f32.mrb[0].mxu0
  %v3047 = vadd.f32 0.0, %v3046
  %v3048 = vpop.f32.mrb[0].mxu0
  %v3049 = vadd.f32 0.0, %v3048
  %v3050 = vpop.f32.mrb[0].mxu0
  %v3051 = vadd.f32 0.0, %v3050
  %3052 = vmatprep.mubr.bf16.mxu0 0
  %3053 = vmatmul.mubr.bf16.gmra.mrb[0].mxu0 %v2823
  %v3054 = vpop.f32.mrb[0].mxu0
  %v3055 = vadd.f32 0.0, %v3054
  %v3056 = vpop.f32.mrb[0].mxu0
  %v3057 = vadd.f32 0.0, %v3056
  %v3058 = vpop.f32.mrb[0].mxu0
  %v3059 = vadd.f32 0.0, %v3058
  %v3060 = vpop.f32.mrb[0].mxu0
  %v3061 = vadd.f32 0.0, %v3060
  %3062 = vmatprep.mubr.bf16.mxu0 0
  %3063 = vmatmul.mubr.bf16.gmra.mrb[0].mxu0 %v2825
  %v3064 = vpop.f32.mrb[0].mxu0
  %v3065 = vadd.f32 0.0, %v3064
  %v3066 = vpop.f32.mrb[0].mxu0
  %v3067 = vadd.f32 0.0, %v3066
  %v3068 = vpop.f32.mrb[0].mxu0
  %v3069 = vadd.f32 0.0, %v3068
  %v3070 = vpop.f32.mrb[0].mxu0
  %v3071 = vadd.f32 0.0, %v3070
  %3072 = vmatprep.mubr.bf16.mxu0 0
  %3073 = vmatmul.mubr.bf16.gmra.mrb[0].mxu0 %v2827
  %v3074 = vpop.f32.mrb[0].mxu0
  %v3075 = vadd.f32 0.0, %v3074
  %v3076 = vpop.f32.mrb[0].mxu0
  %v3077 = vadd.f32 0.0, %v3076
  %v3078 = vpop.f32.mrb[0].mxu0
  %v3079 = vadd.f32 0.0, %v3078
  %v3080 = vpop.f32.mrb[0].mxu0
  %v3081 = vadd.f32 0.0, %v3080
  %3082 = vmatprep.mubr.bf16.mxu0 0
  %3083 = vmatmul.mubr.bf16.gmra.mrb[0].mxu0 %v2829
  %v3084 = vpop.f32.mrb[0].mxu0
  %v3085 = vadd.f32 0.0, %v3084
  %v3086 = vpop.f32.mrb[0].mxu0
  %v3087 = vadd.f32 0.0, %v3086
  %v3088 = vpop.f32.mrb[0].mxu0
  %v3089 = vadd.f32 0.0, %v3088
  %v3090 = vpop.f32.mrb[0].mxu0
  %v3091 = vadd.f32 0.0, %v3090
  %3092 = vmatprep.mubr.bf16.mxu0 0
  %3093 = vmatmul.mubr.bf16.gmra.mrb[0].mxu0 %v2831
  %v3094 = vpop.f32.mrb[0].mxu0
  %v3095 = vadd.f32 0.0, %v3094
  %v3096 = vpop.f32.mrb[0].mxu0
  %v3097 = vadd.f32 0.0, %v3096
  %v3098 = vpop.f32.mrb[0].mxu0
  %v3099 = vadd.f32 0.0, %v3098
  %v3100 = vpop.f32.mrb[0].mxu0
  %v3101 = vadd.f32 0.0, %v3100
  %3102 = vmatprep.mubr.bf16.mxu0 0
  %3103 = vmatmul.mubr.bf16.gmra.mrb[0].mxu0 %v2833
  %v3104 = vpop.f32.mrb[0].mxu0
  %v3105 = vadd.f32 0.0, %v3104
  %v3106 = vpop.f32.mrb[0].mxu0
  %v3107 = vadd.f32 0.0, %v3106
  %v3108 = vpop.f32.mrb[0].mxu0
  %v3109 = vadd.f32 0.0, %v3108
  %v3110 = vpop.f32.mrb[0].mxu0
  %v3111 = vadd.f32 0.0, %v3110
  %3112 = vmatprep.mubr.bf16.mxu0 0
  %3113 = vmatmul.mubr.bf16.gmra.mrb[0].mxu0 %v2832
  %v3114 = vpop.f32.mrb[0].mxu0
  %v3115 = vadd.f32 0.0, %v3114
  %v3116 = vpop.f32.mrb[0].mxu0
  %v3117 = vadd.f32 0.0, %v3116
  %v3118 = vpop.f32.mrb[0].mxu0
  %v3119 = vpop.f32.mrb[0].mxu0
  %3120 = vdwg.mxu0
  %v3121 = vadd.f32 %v2630, %v2965
  %v3122 = vadd.f32 %v2632, %v2967
  %v3123 = vadd.f32 %v2634, %v2969
  %v3124 = vadd.f32 %v2636, %v2971
  %v3125 = vadd.f32 %v2640, %v2975
  %v3126 = vadd.f32 %v2642, %v2977
  %v3127 = vadd.f32 %v2644, %v2979
  %v3128 = vadd.f32 %v2646, %v2981
  %v3129 = vadd.f32 %v2650, %v2985
  %v3130 = vadd.f32 %v2652, %v2987
  %v3131 = vadd.f32 %v2654, %v2989
  %v3132 = vadd.f32 %v2656, %v2991
  %v3133 = vadd.f32 %v2660, %v2995
  %v3134 = vadd.f32 %v2662, %v2997
  %v3135 = vadd.f32 %v2664, %v2999
  %v3136 = vadd.f32 %v2666, %v3001
  %v3137 = vadd.f32 %v2670, %v3005
  %v3138 = vadd.f32 %v2672, %v3007
  %v3139 = vadd.f32 %v2674, %v3009
  %v3140 = vadd.f32 %v2676, %v3011
  %v3141 = vadd.f32 %v2680, %v3015
  %v3142 = vadd.f32 %v2682, %v3017
  %v3143 = vadd.f32 %v2684, %v3019
  %v3144 = vadd.f32 %v2686, %v3021
  %v3145 = vadd.f32 %v2690, %v3025
  %v3146 = vadd.f32 %v2692, %v3027
  %v3147 = vadd.f32 %v2694, %v3029
  %v3148 = vadd.f32 %v2696, %v3031
  %v3149 = vadd.f32 %v2700, %v3035
  %v3150 = vadd.f32 %v2702, %v3037
  %v3151 = vadd.f32 %v2704, %v3039
  %v3152 = vadd.f32 %v2706, %v3041
  %v3153 = vadd.f32 %v2710, %v3045
  %v3154 = vadd.f32 %v2712, %v3047
  %v3155 = vadd.f32 %v2714, %v3049
  %v3156 = vadd.f32 %v2716, %v3051
  %v3157 = vadd.f32 %v2720, %v3055
  %v3158 = vadd.f32 %v2722, %v3057
  %v3159 = vadd.f32 %v2724, %v3059
  %v3160 = vadd.f32 %v2726, %v3061
  %v3161 = vadd.f32 %v2730, %v3065
  %v3162 = vadd.f32 %v2732, %v3067
  %v3163 = vadd.f32 %v2734, %v3069
  %v3164 = vadd.f32 %v2736, %v3071
  %v3165 = vadd.f32 %v2740, %v3075
  %v3166 = vadd.f32 %v2742, %v3077
  %v3167 = vadd.f32 %v2744, %v3079
  %v3168 = vadd.f32 %v2746, %v3081
  %v3169 = vadd.f32 %v2750, %v3085
  %v3170 = vadd.f32 %v2752, %v3087
  %v3171 = vadd.f32 %v2754, %v3089
  %v3172 = vadd.f32 %v2756, %v3091
  %v3173 = vadd.f32 %v2760, %v3095
  %v3174 = vadd.f32 %v2762, %v3097
  %v3175 = vadd.f32 %v2764, %v3099
  %v3176 = vadd.f32 %v2766, %v3101
  %v3177 = vadd.f32 %v2770, %v3105
  %v3178 = vadd.f32 %v2772, %v3107
  %v3179 = vadd.f32 %v2774, %v3109
  %v3180 = vadd.f32 %v2776, %v3111
  %v3181 = vadd.f32 %v2780, %v3115
  %v3182 = vadd.f32 %v2782, %v3117
  %v3183 = vpack.c.bf16 %v2131, %v2130
  %s3184 = scalar_lea.vmem %s2, 384
  %v3185 = vld [vmem:[%s3184] sm:$0xff]
  %v3186 = vld [vmem:[%s3184 + $0x8] sm:$0xff]
  %v3187 = vld [vmem:[%s3184 + $0x10] sm:$0xff]
  %v3188 = vld [vmem:[%s3184 + $0x18] sm:$0xff]
  %v3189 = vld [vmem:[%s3184 + $0x20] sm:$0xff]
  %v3190 = vld [vmem:[%s3184 + $0x28] sm:$0xff]
  %v3191 = vld [vmem:[%s3184 + $0x30] sm:$0xff]
  %v3192 = vld [vmem:[%s3184 + $0x38] sm:$0xff]
  %v3193 = vld [vmem:[%s3184 + $0x40] sm:$0xff]
  %v3194 = vld [vmem:[%s3184 + $0x48] sm:$0xff]
  %v3195 = vld [vmem:[%s3184 + $0x50] sm:$0xff]
  %v3196 = vld [vmem:[%s3184 + $0x58] sm:$0xff]
  %v3197 = vld [vmem:[%s3184 + $0x60] sm:$0xff]
  %v3198 = vld [vmem:[%s3184 + $0x68] sm:$0xff]
  %v3199 = vld [vmem:[%s3184 + $0x70] sm:$0xff]
  %v3200 = vld [vmem:[%s3184 + $0x78] sm:$0xff]
  %vm3202 = vcmask 1044480
  %v3203 = vrot.slane %v2132, 3
  %v3204 = vrot.slane %v2133, 3
  %v3205 = vsel %vm3202, %v3203, %v3204
  %v3206 = vrot.slane %v2134, 3
  %v3207 = vsel %vm3202, %v3204, %v3206
  %v3208 = vrot.slane %v2135, 3
  %v3209 = vsel %vm3202, %v3206, %v3208
  %v3210 = vrot.slane %v2136, 3
  %v3211 = vsel %vm3202, %v3208, %v3210
  %v3212 = vrot.slane %v2137, 3
  %v3213 = vsel %vm3202, %v3210, %v3212
  %v3214 = vrot.slane %v2138, 3
  %v3215 = vsel %vm3202, %v3212, %v3214
  %v3216 = vrot.slane %v2139, 3
  %v3217 = vsel %vm3202, %v3214, %v3216
  %v3218 = vrot.slane %v2140, 3
  %v3219 = vsel %vm3202, %v3216, %v3218
  %v3220 = vrot.slane %v2141, 3
  %v3221 = vsel %vm3202, %v3218, %v3220
  %v3222 = vrot.slane %v2142, 3
  %v3223 = vsel %vm3202, %v3220, %v3222
  %v3224 = vrot.slane %v2143, 3
  %v3225 = vsel %vm3202, %v3222, %v3224
  %v3226 = vrot.slane %v2144, 3
  %v3227 = vsel %vm3202, %v3224, %v3226
  %v3228 = vrot.slane %v2145, 3
  %v3229 = vsel %vm3202, %v3226, %v3228
  %v3230 = vrot.slane %v2146, 3
  %v3231 = vsel %vm3202, %v3228, %v3230
  %v3232 = vrot.slane %v3183, 3
  %v3233 = vsel %vm3202, %v3230, %v3232
  %v3266 = vunpack.c.l.b16 %v3185
  %v3267 = vunpack.c.h.b16 %v3185
  %v3268 = vunpack.c.l.b16 %v3186
  %v3269 = vunpack.c.h.b16 %v3186
  %v3270 = vunpack.c.l.b16 %v3187
  %v3271 = vunpack.c.h.b16 %v3187
  %v3272 = vunpack.c.l.b16 %v3188
  %v3273 = vunpack.c.h.b16 %v3188
  %v3274 = vunpack.c.l.b16 %v3189
  %v3275 = vunpack.c.h.b16 %v3189
  %v3276 = vunpack.c.l.b16 %v3190
  %v3277 = vunpack.c.h.b16 %v3190
  %v3278 = vunpack.c.l.b16 %v3191
  %v3279 = vunpack.c.h.b16 %v3191
  %v3280 = vunpack.c.l.b16 %v3192
  %v3281 = vunpack.c.h.b16 %v3192
  %v3282 = vunpack.c.l.b16 %v3193
  %v3283 = vunpack.c.h.b16 %v3193
  %v3284 = vunpack.c.l.b16 %v3194
  %v3285 = vunpack.c.h.b16 %v3194
  %v3286 = vunpack.c.l.b16 %v3195
  %v3287 = vunpack.c.h.b16 %v3195
  %v3288 = vunpack.c.l.b16 %v3196
  %v3289 = vunpack.c.h.b16 %v3196
  %v3290 = vunpack.c.l.b16 %v3197
  %v3291 = vunpack.c.h.b16 %v3197
  %v3292 = vunpack.c.l.b16 %v3198
  %v3293 = vunpack.c.h.b16 %v3198
  %v3294 = vunpack.c.l.b16 %v3199
  %v3295 = vunpack.c.h.b16 %v3199
  %v3296 = vunpack.c.l.b16 %v3200
  %v3297 = vunpack.c.h.b16 %v3200
  %v3298 = vpack.c.b16 %v3268, %v3266
  %v3299 = vpack.c.b16 %v3269, %v3267
  %v3300 = vpack.c.b16 %v3272, %v3270
  %v3301 = vpack.c.b16 %v3273, %v3271
  %v3302 = vpack.c.b16 %v3276, %v3274
  %v3303 = vpack.c.b16 %v3277, %v3275
  %v3304 = vpack.c.b16 %v3280, %v3278
  %v3305 = vpack.c.b16 %v3281, %v3279
  %v3306 = vpack.c.b16 %v3284, %v3282
  %v3307 = vpack.c.b16 %v3285, %v3283
  %v3308 = vpack.c.b16 %v3288, %v3286
  %v3309 = vpack.c.b16 %v3289, %v3287
  %v3310 = vpack.c.b16 %v3292, %v3290
  %v3311 = vpack.c.b16 %v3293, %v3291
  %v3312 = vpack.c.b16 %v3296, %v3294
  %v3313 = vpack.c.b16 %v3297, %v3295
  %3330 = vmatprep.subr.bf16.mxu0 %v3299
  %3331 = vmatpush1.bf16.msra.mxu0 %v3298
  %3332 = vmatprep.subr.bf16.mxu0 %v3301
  %3333 = vmatpush1.bf16.msra.mxu0 %v3300
  %3334 = vmatprep.subr.bf16.mxu0 %v3303
  %3335 = vmatpush1.bf16.msra.mxu0 %v3302
  %3336 = vmatprep.subr.bf16.mxu0 %v3305
  %3337 = vmatpush1.bf16.msra.mxu0 %v3304
  %3338 = vmatprep.subr.bf16.mxu0 %v3307
  %3339 = vmatpush1.bf16.msra.mxu0 %v3306
  %3340 = vmatprep.subr.bf16.mxu0 %v3309
  %3341 = vmatpush1.bf16.msra.mxu0 %v3308
  %3342 = vmatprep.subr.bf16.mxu0 %v3311
  %3343 = vmatpush1.bf16.msra.mxu0 %v3310
  %3344 = vmatprep.subr.bf16.mxu0 %v3313
  %3345 = vmatpush1.bf16.msra.mxu0 %v3312
  %3346 = vmatprep.subr.bf16.mxu0 0
  %3347 = vmatpush1.bf16.msra.mxu0 0
  %3348 = vmatprep.subr.bf16.mxu0 0
  %3349 = vmatpush1.bf16.msra.mxu0 0
  %3350 = vmatprep.subr.bf16.mxu0 0
  %3351 = vmatpush1.bf16.msra.mxu0 0
  %3352 = vmatprep.subr.bf16.mxu0 0
  %3353 = vmatpush1.bf16.msra.mxu0 0
  %3354 = vmatprep.subr.bf16.mxu0 0
  %3355 = vmatpush1.bf16.msra.mxu0 0
  %3356 = vmatprep.subr.bf16.mxu0 0
  %3357 = vmatpush1.bf16.msra.mxu0 0
  %3358 = vmatprep.subr.bf16.mxu0 0
  %3359 = vmatpush1.bf16.msra.mxu0 0
  %3360 = vmatprep.subr.bf16.mxu0 0
  %3361 = vmatpush1.bf16.msra.mxu0 0
  %3362 = vmatprep.mubr.bf16.mxu0 0
  %3363 = vmatmul.mubr.bf16.gmra.mrb[0].mxu0 %v3205
  %v3364 = vpop.f32.mrb[0].mxu0
  %v3365 = vadd.f32 0.0, %v3364
  %v3366 = vpop.f32.mrb[0].mxu0
  %v3367 = vadd.f32 0.0, %v3366
  %v3368 = vpop.f32.mrb[0].mxu0
  %v3369 = vadd.f32 0.0, %v3368
  %v3370 = vpop.f32.mrb[0].mxu0
  %v3371 = vadd.f32 0.0, %v3370
  %3372 = vmatprep.mubr.bf16.mxu0 0
  %3373 = vmatmul.mubr.bf16.gmra.mrb[0].mxu0 %v3207
  %v3374 = vpop.f32.mrb[0].mxu0
  %v3375 = vadd.f32 0.0, %v3374
  %v3376 = vpop.f32.mrb[0].mxu0
  %v3377 = vadd.f32 0.0, %v3376
  %v3378 = vpop.f32.mrb[0].mxu0
  %v3379 = vadd.f32 0.0, %v3378
  %v3380 = vpop.f32.mrb[0].mxu0
  %v3381 = vadd.f32 0.0, %v3380
  %3382 = vmatprep.mubr.bf16.mxu0 0
  %3383 = vmatmul.mubr.bf16.gmra.mrb[0].mxu0 %v3209
  %v3384 = vpop.f32.mrb[0].mxu0
  %v3385 = vadd.f32 0.0, %v3384
  %v3386 = vpop.f32.mrb[0].mxu0
  %v3387 = vadd.f32 0.0, %v3386
  %v3388 = vpop.f32.mrb[0].mxu0
  %v3389 = vadd.f32 0.0, %v3388
  %v3390 = vpop.f32.mrb[0].mxu0
  %v3391 = vadd.f32 0.0, %v3390
  %3392 = vmatprep.mubr.bf16.mxu0 0
  %3393 = vmatmul.mubr.bf16.gmra.mrb[0].mxu0 %v3211
  %v3394 = vpop.f32.mrb[0].mxu0
  %v3395 = vadd.f32 0.0, %v3394
  %v3396 = vpop.f32.mrb[0].mxu0
  %v3397 = vadd.f32 0.0, %v3396
  %v3398 = vpop.f32.mrb[0].mxu0
  %v3399 = vadd.f32 0.0, %v3398
  %v3400 = vpop.f32.mrb[0].mxu0
  %v3401 = vadd.f32 0.0, %v3400
  %3402 = vmatprep.mubr.bf16.mxu0 0
  %3403 = vmatmul.mubr.bf16.gmra.mrb[0].mxu0 %v3213
  %v3404 = vpop.f32.mrb[0].mxu0
  %v3405 = vadd.f32 0.0, %v3404
  %v3406 = vpop.f32.mrb[0].mxu0
  %v3407 = vadd.f32 0.0, %v3406
  %v3408 = vpop.f32.mrb[0].mxu0
  %v3409 = vadd.f32 0.0, %v3408
  %v3410 = vpop.f32.mrb[0].mxu0
  %v3411 = vadd.f32 0.0, %v3410
  %3412 = vmatprep.mubr.bf16.mxu0 0
  %3413 = vmatmul.mubr.bf16.gmra.mrb[0].mxu0 %v3215
  %v3414 = vpop.f32.mrb[0].mxu0
  %v3415 = vadd.f32 0.0, %v3414
  %v3416 = vpop.f32.mrb[0].mxu0
  %v3417 = vadd.f32 0.0, %v3416
  %v3418 = vpop.f32.mrb[0].mxu0
  %v3419 = vadd.f32 0.0, %v3418
  %v3420 = vpop.f32.mrb[0].mxu0
  %v3421 = vadd.f32 0.0, %v3420
  %3422 = vmatprep.mubr.bf16.mxu0 0
  %3423 = vmatmul.mubr.bf16.gmra.mrb[0].mxu0 %v3217
  %v3424 = vpop.f32.mrb[0].mxu0
  %v3425 = vadd.f32 0.0, %v3424
  %v3426 = vpop.f32.mrb[0].mxu0
  %v3427 = vadd.f32 0.0, %v3426
  %v3428 = vpop.f32.mrb[0].mxu0
  %v3429 = vadd.f32 0.0, %v3428
  %v3430 = vpop.f32.mrb[0].mxu0
  %v3431 = vadd.f32 0.0, %v3430
  %3432 = vmatprep.mubr.bf16.mxu0 0
  %3433 = vmatmul.mubr.bf16.gmra.mrb[0].mxu0 %v3219
  %v3434 = vpop.f32.mrb[0].mxu0
  %v3435 = vadd.f32 0.0, %v3434
  %v3436 = vpop.f32.mrb[0].mxu0
  %v3437 = vadd.f32 0.0, %v3436
  %v3438 = vpop.f32.mrb[0].mxu0
  %v3439 = vadd.f32 0.0, %v3438
  %v3440 = vpop.f32.mrb[0].mxu0
  %v3441 = vadd.f32 0.0, %v3440
  %3442 = vmatprep.mubr.bf16.mxu0 0
  %3443 = vmatmul.mubr.bf16.gmra.mrb[0].mxu0 %v3221
  %v3444 = vpop.f32.mrb[0].mxu0
  %v3445 = vadd.f32 0.0, %v3444
  %v3446 = vpop.f32.mrb[0].mxu0
  %v3447 = vadd.f32 0.0, %v3446
  %v3448 = vpop.f32.mrb[0].mxu0
  %v3449 = vadd.f32 0.0, %v3448
  %v3450 = vpop.f32.mrb[0].mxu0
  %v3451 = vadd.f32 0.0, %v3450
  %3452 = vmatprep.mubr.bf16.mxu0 0
  %3453 = vmatmul.mubr.bf16.gmra.mrb[0].mxu0 %v3223
  %v3454 = vpop.f32.mrb[0].mxu0
  %v3455 = vadd.f32 0.0, %v3454
  %v3456 = vpop.f32.mrb[0].mxu0
  %v3457 = vadd.f32 0.0, %v3456
  %v3458 = vpop.f32.mrb[0].mxu0
  %v3459 = vadd.f32 0.0, %v3458
  %v3460 = vpop.f32.mrb[0].mxu0
  %v3461 = vadd.f32 0.0, %v3460
  %3462 = vmatprep.mubr.bf16.mxu0 0
  %3463 = vmatmul.mubr.bf16.gmra.mrb[0].mxu0 %v3225
  %v3464 = vpop.f32.mrb[0].mxu0
  %v3465 = vadd.f32 0.0, %v3464
  %v3466 = vpop.f32.mrb[0].mxu0
  %v3467 = vadd.f32 0.0, %v3466
  %v3468 = vpop.f32.mrb[0].mxu0
  %v3469 = vadd.f32 0.0, %v3468
  %v3470 = vpop.f32.mrb[0].mxu0
  %v3471 = vadd.f32 0.0, %v3470
  %3472 = vmatprep.mubr.bf16.mxu0 0
  %3473 = vmatmul.mubr.bf16.gmra.mrb[0].mxu0 %v3227
  %v3474 = vpop.f32.mrb[0].mxu0
  %v3475 = vadd.f32 0.0, %v3474
  %v3476 = vpop.f32.mrb[0].mxu0
  %v3477 = vadd.f32 0.0, %v3476
  %v3478 = vpop.f32.mrb[0].mxu0
  %v3479 = vadd.f32 0.0, %v3478
  %v3480 = vpop.f32.mrb[0].mxu0
  %v3481 = vadd.f32 0.0, %v3480
  %3482 = vmatprep.mubr.bf16.mxu0 0
  %3483 = vmatmul.mubr.bf16.gmra.mrb[0].mxu0 %v3229
  %v3484 = vpop.f32.mrb[0].mxu0
  %v3485 = vadd.f32 0.0, %v3484
  %v3486 = vpop.f32.mrb[0].mxu0
  %v3487 = vadd.f32 0.0, %v3486
  %v3488 = vpop.f32.mrb[0].mxu0
  %v3489 = vadd.f32 0.0, %v3488
  %v3490 = vpop.f32.mrb[0].mxu0
  %v3491 = vadd.f32 0.0, %v3490
  %3492 = vmatprep.mubr.bf16.mxu0 0
  %3493 = vmatmul.mubr.bf16.gmra.mrb[0].mxu0 %v3231
  %v3494 = vpop.f32.mrb[0].mxu0
  %v3495 = vadd.f32 0.0, %v3494
  %v3496 = vpop.f32.mrb[0].mxu0
  %v3497 = vadd.f32 0.0, %v3496
  %v3498 = vpop.f32.mrb[0].mxu0
  %v3499 = vadd.f32 0.0, %v3498
  %v3500 = vpop.f32.mrb[0].mxu0
  %v3501 = vadd.f32 0.0, %v3500
  %3502 = vmatprep.mubr.bf16.mxu0 0
  %3503 = vmatmul.mubr.bf16.gmra.mrb[0].mxu0 %v3233
  %v3504 = vpop.f32.mrb[0].mxu0
  %v3505 = vadd.f32 0.0, %v3504
  %v3506 = vpop.f32.mrb[0].mxu0
  %v3507 = vadd.f32 0.0, %v3506
  %v3508 = vpop.f32.mrb[0].mxu0
  %v3509 = vadd.f32 0.0, %v3508
  %v3510 = vpop.f32.mrb[0].mxu0
  %v3511 = vadd.f32 0.0, %v3510
  %3512 = vmatprep.mubr.bf16.mxu0 0
  %3513 = vmatmul.mubr.bf16.gmra.mrb[0].mxu0 %v3232
  %v3514 = vpop.f32.mrb[0].mxu0
  %v3515 = vadd.f32 0.0, %v3514
  %v3516 = vpop.f32.mrb[0].mxu0
  %v3517 = vadd.f32 0.0, %v3516
  %v3518 = vpop.f32.mrb[0].mxu0
  %v3519 = vpop.f32.mrb[0].mxu0
  %3520 = vdwg.mxu0
  %v3521 = vadd.f32 %v3121, %v3365
  %v3522 = vadd.f32 %v3122, %v3367
  %v3523 = vadd.f32 %v3123, %v3369
  %v3524 = vadd.f32 %v3124, %v3371
  %v3525 = vadd.f32 %v3125, %v3375
  %v3526 = vadd.f32 %v3126, %v3377
  %v3527 = vadd.f32 %v3127, %v3379
  %v3528 = vadd.f32 %v3128, %v3381
  %v3529 = vadd.f32 %v3129, %v3385
  %v3530 = vadd.f32 %v3130, %v3387
  %v3531 = vadd.f32 %v3131, %v3389
  %v3532 = vadd.f32 %v3132, %v3391
  %v3533 = vadd.f32 %v3133, %v3395
  %v3534 = vadd.f32 %v3134, %v3397
  %v3535 = vadd.f32 %v3135, %v3399
  %v3536 = vadd.f32 %v3136, %v3401
  %v3537 = vadd.f32 %v3137, %v3405
  %v3538 = vadd.f32 %v3138, %v3407
  %v3539 = vadd.f32 %v3139, %v3409
  %v3540 = vadd.f32 %v3140, %v3411
  %v3541 = vadd.f32 %v3141, %v3415
  %v3542 = vadd.f32 %v3142, %v3417
  %v3543 = vadd.f32 %v3143, %v3419
  %v3544 = vadd.f32 %v3144, %v3421
  %v3545 = vadd.f32 %v3145, %v3425
  %v3546 = vadd.f32 %v3146, %v3427
  %v3547 = vadd.f32 %v3147, %v3429
  %v3548 = vadd.f32 %v3148, %v3431
  %v3549 = vadd.f32 %v3149, %v3435
  %v3550 = vadd.f32 %v3150, %v3437
  %v3551 = vadd.f32 %v3151, %v3439
  %v3552 = vadd.f32 %v3152, %v3441
  %v3553 = vadd.f32 %v3153, %v3445
  %v3554 = vadd.f32 %v3154, %v3447
  %v3555 = vadd.f32 %v3155, %v3449
  %v3556 = vadd.f32 %v3156, %v3451
  %v3557 = vadd.f32 %v3157, %v3455
  %v3558 = vadd.f32 %v3158, %v3457
  %v3559 = vadd.f32 %v3159, %v3459
  %v3560 = vadd.f32 %v3160, %v3461
  %v3561 = vadd.f32 %v3161, %v3465
  %v3562 = vadd.f32 %v3162, %v3467
  %v3563 = vadd.f32 %v3163, %v3469
  %v3564 = vadd.f32 %v3164, %v3471
  %v3565 = vadd.f32 %v3165, %v3475
  %v3566 = vadd.f32 %v3166, %v3477
  %v3567 = vadd.f32 %v3167, %v3479
  %v3568 = vadd.f32 %v3168, %v3481
  %v3569 = vadd.f32 %v3169, %v3485
  %v3570 = vadd.f32 %v3170, %v3487
  %v3571 = vadd.f32 %v3171, %v3489
  %v3572 = vadd.f32 %v3172, %v3491
  %v3573 = vadd.f32 %v3173, %v3495
  %v3574 = vadd.f32 %v3174, %v3497
  %v3575 = vadd.f32 %v3175, %v3499
  %v3576 = vadd.f32 %v3176, %v3501
  %v3577 = vadd.f32 %v3177, %v3505
  %v3578 = vadd.f32 %v3178, %v3507
  %v3579 = vadd.f32 %v3179, %v3509
  %v3580 = vadd.f32 %v3180, %v3511
  %v3581 = vadd.f32 %v3181, %v3515
  %v3582 = vadd.f32 %v3182, %v3517
  %v3583 = vpack.c.bf16 %v2102, %v2101
  %v3584 = vpack.c.bf16 %v2104, %v2103
  %v3585 = vpack.c.bf16 %v2106, %v2105
  %v3586 = vpack.c.bf16 %v2108, %v2107
  %v3587 = vpack.c.bf16 %v2110, %v2109
  %v3588 = vpack.c.bf16 %v2112, %v2111
  %v3589 = vpack.c.bf16 %v2114, %v2113
  %v3590 = vpack.c.bf16 %v2116, %v2115
  %v3591 = vpack.c.bf16 %v2118, %v2117
  %v3592 = vpack.c.bf16 %v2120, %v2119
  %v3593 = vpack.c.bf16 %v2122, %v2121
  %v3594 = vpack.c.bf16 %v2124, %v2123
  %v3595 = vpack.c.bf16 %v2126, %v2125
  %v3596 = vpack.c.bf16 %v2128, %v2127
  %v3597 = vpack.c.bf16 %v2130, %v2129
  %v3598 = vpack.c.bf16 %v2131, %v2131
  %s3599 = scalar_lea.vmem %s2, 512
  %v3600 = vld [vmem:[%s3599] sm:$0xff]
  %v3601 = vld [vmem:[%s3599 + $0x8] sm:$0xff]
  %v3602 = vld [vmem:[%s3599 + $0x10] sm:$0xff]
  %v3603 = vld [vmem:[%s3599 + $0x18] sm:$0xff]
  %v3604 = vld [vmem:[%s3599 + $0x20] sm:$0xff]
  %v3605 = vld [vmem:[%s3599 + $0x28] sm:$0xff]
  %v3606 = vld [vmem:[%s3599 + $0x30] sm:$0xff]
  %v3607 = vld [vmem:[%s3599 + $0x38] sm:$0xff]
  %v3608 = vld [vmem:[%s3599 + $0x40] sm:$0xff]
  %v3609 = vld [vmem:[%s3599 + $0x48] sm:$0xff]
  %v3610 = vld [vmem:[%s3599 + $0x50] sm:$0xff]
  %v3611 = vld [vmem:[%s3599 + $0x58] sm:$0xff]
  %v3612 = vld [vmem:[%s3599 + $0x60] sm:$0xff]
  %v3613 = vld [vmem:[%s3599 + $0x68] sm:$0xff]
  %v3614 = vld [vmem:[%s3599 + $0x70] sm:$0xff]
  %v3615 = vld [vmem:[%s3599 + $0x78] sm:$0xff]
  %v3632 = vunpack.c.l.b16 %v3600
  %v3633 = vunpack.c.h.b16 %v3600
  %v3634 = vunpack.c.l.b16 %v3601
  %v3635 = vunpack.c.h.b16 %v3601
  %v3636 = vunpack.c.l.b16 %v3602
  %v3637 = vunpack.c.h.b16 %v3602
  %v3638 = vunpack.c.l.b16 %v3603
  %v3639 = vunpack.c.h.b16 %v3603
  %v3640 = vunpack.c.l.b16 %v3604
  %v3641 = vunpack.c.h.b16 %v3604
  %v3642 = vunpack.c.l.b16 %v3605
  %v3643 = vunpack.c.h.b16 %v3605
  %v3644 = vunpack.c.l.b16 %v3606
  %v3645 = vunpack.c.h.b16 %v3606
  %v3646 = vunpack.c.l.b16 %v3607
  %v3647 = vunpack.c.h.b16 %v3607
  %v3648 = vunpack.c.l.b16 %v3608
  %v3649 = vunpack.c.h.b16 %v3608
  %v3650 = vunpack.c.l.b16 %v3609
  %v3651 = vunpack.c.h.b16 %v3609
  %v3652 = vunpack.c.l.b16 %v3610
  %v3653 = vunpack.c.h.b16 %v3610
  %v3654 = vunpack.c.l.b16 %v3611
  %v3655 = vunpack.c.h.b16 %v3611
  %v3656 = vunpack.c.l.b16 %v3612
  %v3657 = vunpack.c.h.b16 %v3612
  %v3658 = vunpack.c.l.b16 %v3613
  %v3659 = vunpack.c.h.b16 %v3613
  %v3660 = vunpack.c.l.b16 %v3614
  %v3661 = vunpack.c.h.b16 %v3614
  %v3662 = vunpack.c.l.b16 %v3615
  %v3663 = vunpack.c.h.b16 %v3615
  %v3664 = vpack.c.b16 %v3634, %v3632
  %v3665 = vpack.c.b16 %v3635, %v3633
  %v3666 = vpack.c.b16 %v3638, %v3636
  %v3667 = vpack.c.b16 %v3639, %v3637
  %v3668 = vpack.c.b16 %v3642, %v3640
  %v3669 = vpack.c.b16 %v3643, %v3641
  %v3670 = vpack.c.b16 %v3646, %v3644
  %v3671 = vpack.c.b16 %v3647, %v3645
  %v3672 = vpack.c.b16 %v3650, %v3648
  %v3673 = vpack.c.b16 %v3651, %v3649
  %v3674 = vpack.c.b16 %v3654, %v3652
  %v3675 = vpack.c.b16 %v3655, %v3653
  %v3676 = vpack.c.b16 %v3658, %v3656
  %v3677 = vpack.c.b16 %v3659, %v3657
  %v3678 = vpack.c.b16 %v3662, %v3660
  %v3679 = vpack.c.b16 %v3663, %v3661
  %3696 = vmatprep.subr.bf16.mxu0 %v3665
  %3697 = vmatpush1.bf16.msra.mxu0 %v3664
  %3698 = vmatprep.subr.bf16.mxu0 %v3667
  %3699 = vmatpush1.bf16.msra.mxu0 %v3666
  %3700 = vmatprep.subr.bf16.mxu0 %v3669
  %3701 = vmatpush1.bf16.msra.mxu0 %v3668
  %3702 = vmatprep.subr.bf16.mxu0 %v3671
  %3703 = vmatpush1.bf16.msra.mxu0 %v3670
  %3704 = vmatprep.subr.bf16.mxu0 %v3673
  %3705 = vmatpush1.bf16.msra.mxu0 %v3672
  %3706 = vmatprep.subr.bf16.mxu0 %v3675
  %3707 = vmatpush1.bf16.msra.mxu0 %v3674
  %3708 = vmatprep.subr.bf16.mxu0 %v3677
  %3709 = vmatpush1.bf16.msra.mxu0 %v3676
  %3710 = vmatprep.subr.bf16.mxu0 %v3679
  %3711 = vmatpush1.bf16.msra.mxu0 %v3678
  %3712 = vmatprep.subr.bf16.mxu0 0
  %3713 = vmatpush1.bf16.msra.mxu0 0
  %3714 = vmatprep.subr.bf16.mxu0 0
  %3715 = vmatpush1.bf16.msra.mxu0 0
  %3716 = vmatprep.subr.bf16.mxu0 0
  %3717 = vmatpush1.bf16.msra.mxu0 0
  %3718 = vmatprep.subr.bf16.mxu0 0
  %3719 = vmatpush1.bf16.msra.mxu0 0
  %3720 = vmatprep.subr.bf16.mxu0 0
  %3721 = vmatpush1.bf16.msra.mxu0 0
  %3722 = vmatprep.subr.bf16.mxu0 0
  %3723 = vmatpush1.bf16.msra.mxu0 0
  %3724 = vmatprep.subr.bf16.mxu0 0
  %3725 = vmatpush1.bf16.msra.mxu0 0
  %3726 = vmatprep.subr.bf16.mxu0 0
  %3727 = vmatpush1.bf16.msra.mxu0 0
  %3728 = vmatprep.mubr.bf16.mxu0 0
  %3729 = vmatmul.mubr.bf16.gmra.mrb[0].mxu0 %v3583
  %v3730 = vpop.f32.mrb[0].mxu0
  %v3731 = vadd.f32 0.0, %v3730
  %v3732 = vpop.f32.mrb[0].mxu0
  %v3733 = vadd.f32 0.0, %v3732
  %v3734 = vpop.f32.mrb[0].mxu0
  %v3735 = vadd.f32 0.0, %v3734
  %v3736 = vpop.f32.mrb[0].mxu0
  %v3737 = vadd.f32 0.0, %v3736
  %3738 = vmatprep.mubr.bf16.mxu0 0
  %3739 = vmatmul.mubr.bf16.gmra.mrb[0].mxu0 %v3584
  %v3740 = vpop.f32.mrb[0].mxu0
  %v3741 = vadd.f32 0.0, %v3740
  %v3742 = vpop.f32.mrb[0].mxu0
  %v3743 = vadd.f32 0.0, %v3742
  %v3744 = vpop.f32.mrb[0].mxu0
  %v3745 = vadd.f32 0.0, %v3744
  %v3746 = vpop.f32.mrb[0].mxu0
  %v3747 = vadd.f32 0.0, %v3746
  %3748 = vmatprep.mubr.bf16.mxu0 0
  %3749 = vmatmul.mubr.bf16.gmra.mrb[0].mxu0 %v3585
  %v3750 = vpop.f32.mrb[0].mxu0
  %v3751 = vadd.f32 0.0, %v3750
  %v3752 = vpop.f32.mrb[0].mxu0
  %v3753 = vadd.f32 0.0, %v3752
  %v3754 = vpop.f32.mrb[0].mxu0
  %v3755 = vadd.f32 0.0, %v3754
  %v3756 = vpop.f32.mrb[0].mxu0
  %v3757 = vadd.f32 0.0, %v3756
  %3758 = vmatprep.mubr.bf16.mxu0 0
  %3759 = vmatmul.mubr.bf16.gmra.mrb[0].mxu0 %v3586
  %v3760 = vpop.f32.mrb[0].mxu0
  %v3761 = vadd.f32 0.0, %v3760
  %v3762 = vpop.f32.mrb[0].mxu0
  %v3763 = vadd.f32 0.0, %v3762
  %v3764 = vpop.f32.mrb[0].mxu0
  %v3765 = vadd.f32 0.0, %v3764
  %v3766 = vpop.f32.mrb[0].mxu0
  %v3767 = vadd.f32 0.0, %v3766
  %3768 = vmatprep.mubr.bf16.mxu0 0
  %3769 = vmatmul.mubr.bf16.gmra.mrb[0].mxu0 %v3587
  %v3770 = vpop.f32.mrb[0].mxu0
  %v3771 = vadd.f32 0.0, %v3770
  %v3772 = vpop.f32.mrb[0].mxu0
  %v3773 = vadd.f32 0.0, %v3772
  %v3774 = vpop.f32.mrb[0].mxu0
  %v3775 = vadd.f32 0.0, %v3774
  %v3776 = vpop.f32.mrb[0].mxu0
  %v3777 = vadd.f32 0.0, %v3776
  %3778 = vmatprep.mubr.bf16.mxu0 0
  %3779 = vmatmul.mubr.bf16.gmra.mrb[0].mxu0 %v3588
  %v3780 = vpop.f32.mrb[0].mxu0
  %v3781 = vadd.f32 0.0, %v3780
  %v3782 = vpop.f32.mrb[0].mxu0
  %v3783 = vadd.f32 0.0, %v3782
  %v3784 = vpop.f32.mrb[0].mxu0
  %v3785 = vadd.f32 0.0, %v3784
  %v3786 = vpop.f32.mrb[0].mxu0
  %v3787 = vadd.f32 0.0, %v3786
  %3788 = vmatprep.mubr.bf16.mxu0 0
  %3789 = vmatmul.mubr.bf16.gmra.mrb[0].mxu0 %v3589
  %v3790 = vpop.f32.mrb[0].mxu0
  %v3791 = vadd.f32 0.0, %v3790
  %v3792 = vpop.f32.mrb[0].mxu0
  %v3793 = vadd.f32 0.0, %v3792
  %v3794 = vpop.f32.mrb[0].mxu0
  %v3795 = vadd.f32 0.0, %v3794
  %v3796 = vpop.f32.mrb[0].mxu0
  %v3797 = vadd.f32 0.0, %v3796
  %3798 = vmatprep.mubr.bf16.mxu0 0
  %3799 = vmatmul.mubr.bf16.gmra.mrb[0].mxu0 %v3590
  %v3800 = vpop.f32.mrb[0].mxu0
  %v3801 = vadd.f32 0.0, %v3800
  %v3802 = vpop.f32.mrb[0].mxu0
  %v3803 = vadd.f32 0.0, %v3802
  %v3804 = vpop.f32.mrb[0].mxu0
  %v3805 = vadd.f32 0.0, %v3804
  %v3806 = vpop.f32.mrb[0].mxu0
  %v3807 = vadd.f32 0.0, %v3806
  %3808 = vmatprep.mubr.bf16.mxu0 0
  %3809 = vmatmul.mubr.bf16.gmra.mrb[0].mxu0 %v3591
  %v3810 = vpop.f32.mrb[0].mxu0
  %v3811 = vadd.f32 0.0, %v3810
  %v3812 = vpop.f32.mrb[0].mxu0
  %v3813 = vadd.f32 0.0, %v3812
  %v3814 = vpop.f32.mrb[0].mxu0
  %v3815 = vadd.f32 0.0, %v3814
  %v3816 = vpop.f32.mrb[0].mxu0
  %v3817 = vadd.f32 0.0, %v3816
  %3818 = vmatprep.mubr.bf16.mxu0 0
  %3819 = vmatmul.mubr.bf16.gmra.mrb[0].mxu0 %v3592
  %v3820 = vpop.f32.mrb[0].mxu0
  %v3821 = vadd.f32 0.0, %v3820
  %v3822 = vpop.f32.mrb[0].mxu0
  %v3823 = vadd.f32 0.0, %v3822
  %v3824 = vpop.f32.mrb[0].mxu0
  %v3825 = vadd.f32 0.0, %v3824
  %v3826 = vpop.f32.mrb[0].mxu0
  %v3827 = vadd.f32 0.0, %v3826
  %3828 = vmatprep.mubr.bf16.mxu0 0
  %3829 = vmatmul.mubr.bf16.gmra.mrb[0].mxu0 %v3593
  %v3830 = vpop.f32.mrb[0].mxu0
  %v3831 = vadd.f32 0.0, %v3830
  %v3832 = vpop.f32.mrb[0].mxu0
  %v3833 = vadd.f32 0.0, %v3832
  %v3834 = vpop.f32.mrb[0].mxu0
  %v3835 = vadd.f32 0.0, %v3834
  %v3836 = vpop.f32.mrb[0].mxu0
  %v3837 = vadd.f32 0.0, %v3836
  %3838 = vmatprep.mubr.bf16.mxu0 0
  %3839 = vmatmul.mubr.bf16.gmra.mrb[0].mxu0 %v3594
  %v3840 = vpop.f32.mrb[0].mxu0
  %v3841 = vadd.f32 0.0, %v3840
  %v3842 = vpop.f32.mrb[0].mxu0
  %v3843 = vadd.f32 0.0, %v3842
  %v3844 = vpop.f32.mrb[0].mxu0
  %v3845 = vadd.f32 0.0, %v3844
  %v3846 = vpop.f32.mrb[0].mxu0
  %v3847 = vadd.f32 0.0, %v3846
  %3848 = vmatprep.mubr.bf16.mxu0 0
  %3849 = vmatmul.mubr.bf16.gmra.mrb[0].mxu0 %v3595
  %v3850 = vpop.f32.mrb[0].mxu0
  %v3851 = vadd.f32 0.0, %v3850
  %v3852 = vpop.f32.mrb[0].mxu0
  %v3853 = vadd.f32 0.0, %v3852
  %v3854 = vpop.f32.mrb[0].mxu0
  %v3855 = vadd.f32 0.0, %v3854
  %v3856 = vpop.f32.mrb[0].mxu0
  %v3857 = vadd.f32 0.0, %v3856
  %3858 = vmatprep.mubr.bf16.mxu0 0
  %3859 = vmatmul.mubr.bf16.gmra.mrb[0].mxu0 %v3596
  %v3860 = vpop.f32.mrb[0].mxu0
  %v3861 = vadd.f32 0.0, %v3860
  %v3862 = vpop.f32.mrb[0].mxu0
  %v3863 = vadd.f32 0.0, %v3862
  %v3864 = vpop.f32.mrb[0].mxu0
  %v3865 = vadd.f32 0.0, %v3864
  %v3866 = vpop.f32.mrb[0].mxu0
  %v3867 = vadd.f32 0.0, %v3866
  %3868 = vmatprep.mubr.bf16.mxu0 0
  %3869 = vmatmul.mubr.bf16.gmra.mrb[0].mxu0 %v3597
  %v3870 = vpop.f32.mrb[0].mxu0
  %v3871 = vadd.f32 0.0, %v3870
  %v3872 = vpop.f32.mrb[0].mxu0
  %v3873 = vadd.f32 0.0, %v3872
  %v3874 = vpop.f32.mrb[0].mxu0
  %v3875 = vadd.f32 0.0, %v3874
  %v3876 = vpop.f32.mrb[0].mxu0
  %v3877 = vadd.f32 0.0, %v3876
  %3878 = vmatprep.mubr.bf16.mxu0 0
  %3879 = vmatmul.mubr.bf16.gmra.mrb[0].mxu0 %v3598
  %v3880 = vpop.f32.mrb[0].mxu0
  %v3881 = vadd.f32 0.0, %v3880
  %v3882 = vpop.f32.mrb[0].mxu0
  %v3883 = vadd.f32 0.0, %v3882
  %v3884 = vpop.f32.mrb[0].mxu0
  %v3885 = vpop.f32.mrb[0].mxu0
  %3886 = vdwg.mxu0
  %v3887 = vadd.f32 %v3521, %v3731
  %v3888 = vadd.f32 %v3522, %v3733
  %v3889 = vadd.f32 %v3523, %v3735
  %v3890 = vadd.f32 %v3524, %v3737
  %v3891 = vadd.f32 %v3525, %v3741
  %v3892 = vadd.f32 %v3526, %v3743
  %v3893 = vadd.f32 %v3527, %v3745
  %v3894 = vadd.f32 %v3528, %v3747
  %v3895 = vadd.f32 %v3529, %v3751
  %v3896 = vadd.f32 %v3530, %v3753
  %v3897 = vadd.f32 %v3531, %v3755
  %v3898 = vadd.f32 %v3532, %v3757
  %v3899 = vadd.f32 %v3533, %v3761
  %v3900 = vadd.f32 %v3534, %v3763
  %v3901 = vadd.f32 %v3535, %v3765
  %v3902 = vadd.f32 %v3536, %v3767
  %v3903 = vadd.f32 %v3537, %v3771
  %v3904 = vadd.f32 %v3538, %v3773
  %v3905 = vadd.f32 %v3539, %v3775
  %v3906 = vadd.f32 %v3540, %v3777
  %v3907 = vadd.f32 %v3541, %v3781
  %v3908 = vadd.f32 %v3542, %v3783
  %v3909 = vadd.f32 %v3543, %v3785
  %v3910 = vadd.f32 %v3544, %v3787
  %v3911 = vadd.f32 %v3545, %v3791
  %v3912 = vadd.f32 %v3546, %v3793
  %v3913 = vadd.f32 %v3547, %v3795
  %v3914 = vadd.f32 %v3548, %v3797
  %v3915 = vadd.f32 %v3549, %v3801
  %v3916 = vadd.f32 %v3550, %v3803
  %v3917 = vadd.f32 %v3551, %v3805
  %v3918 = vadd.f32 %v3552, %v3807
  %v3919 = vadd.f32 %v3553, %v3811
  %v3920 = vadd.f32 %v3554, %v3813
  %v3921 = vadd.f32 %v3555, %v3815
  %v3922 = vadd.f32 %v3556, %v3817
  %v3923 = vadd.f32 %v3557, %v3821
  %v3924 = vadd.f32 %v3558, %v3823
  %v3925 = vadd.f32 %v3559, %v3825
  %v3926 = vadd.f32 %v3560, %v3827
  %v3927 = vadd.f32 %v3561, %v3831
  %v3928 = vadd.f32 %v3562, %v3833
  %v3929 = vadd.f32 %v3563, %v3835
  %v3930 = vadd.f32 %v3564, %v3837
  %v3931 = vadd.f32 %v3565, %v3841
  %v3932 = vadd.f32 %v3566, %v3843
  %v3933 = vadd.f32 %v3567, %v3845
  %v3934 = vadd.f32 %v3568, %v3847
  %v3935 = vadd.f32 %v3569, %v3851
  %v3936 = vadd.f32 %v3570, %v3853
  %v3937 = vadd.f32 %v3571, %v3855
  %v3938 = vadd.f32 %v3572, %v3857
  %v3939 = vadd.f32 %v3573, %v3861
  %v3940 = vadd.f32 %v3574, %v3863
  %v3941 = vadd.f32 %v3575, %v3865
  %v3942 = vadd.f32 %v3576, %v3867
  %v3943 = vadd.f32 %v3577, %v3871
  %v3944 = vadd.f32 %v3578, %v3873
  %v3945 = vadd.f32 %v3579, %v3875
  %v3946 = vadd.f32 %v3580, %v3877
  %v3947 = vadd.f32 %v3581, %v3881
  %v3948 = vadd.f32 %v3582, %v3883
  %v3949 = vmax.f32 %v3887, %v3888
  %v3950 = vmax.f32 %v3889, %v3890
  %v3951 = vmax.f32 %v3891, %v3892
  %v3952 = vmax.f32 %v3893, %v3894
  %v3953 = vmax.f32 %v3895, %v3896
  %v3954 = vmax.f32 %v3897, %v3898
  %v3955 = vmax.f32 %v3899, %v3900
  %v3956 = vmax.f32 %v3901, %v3902
  %v3957 = vmax.f32 %v3903, %v3904
  %v3958 = vmax.f32 %v3905, %v3906
  %v3959 = vmax.f32 %v3907, %v3908
  %v3960 = vmax.f32 %v3909, %v3910
  %v3961 = vmax.f32 %v3911, %v3912
  %v3962 = vmax.f32 %v3913, %v3914
  %v3963 = vmax.f32 %v3915, %v3916
  %v3964 = vmax.f32 %v3917, %v3918
  %v3965 = vmax.f32 %v3919, %v3920
  %v3966 = vmax.f32 %v3921, %v3922
  %v3967 = vmax.f32 %v3923, %v3924
  %v3968 = vmax.f32 %v3925, %v3926
  %v3969 = vmax.f32 %v3927, %v3928
  %v3970 = vmax.f32 %v3929, %v3930
  %v3971 = vmax.f32 %v3931, %v3932
  %v3972 = vmax.f32 %v3933, %v3934
  %v3973 = vmax.f32 %v3935, %v3936
  %v3974 = vmax.f32 %v3937, %v3938
  %v3975 = vmax.f32 %v3939, %v3940
  %v3976 = vmax.f32 %v3941, %v3942
  %v3977 = vmax.f32 %v3943, %v3944
  %v3978 = vmax.f32 %v3945, %v3946
  %v3979 = vmax.f32 %v3947, %v3948
  %v4011 = vrot.slane %v3949, 2
  %v4012 = vrot.slane %v3950, 2
  %v4013 = vsel %vm277, %v4011, %v4012
  %v4014 = vrot.slane %v3951, 2
  %v4015 = vsel %vm277, %v4012, %v4014
  %v4016 = vrot.slane %v3952, 2
  %v4017 = vsel %vm277, %v4014, %v4016
  %v4018 = vrot.slane %v3953, 2
  %v4019 = vsel %vm277, %v4016, %v4018
  %v4020 = vrot.slane %v3954, 2
  %v4021 = vsel %vm277, %v4018, %v4020
  %v4022 = vrot.slane %v3955, 2
  %v4023 = vsel %vm277, %v4020, %v4022
  %v4024 = vrot.slane %v3956, 2
  %v4025 = vsel %vm277, %v4022, %v4024
  %v4026 = vrot.slane %v3957, 2
  %v4027 = vsel %vm277, %v4024, %v4026
  %v4028 = vrot.slane %v3958, 2
  %v4029 = vsel %vm277, %v4026, %v4028
  %v4030 = vrot.slane %v3959, 2
  %v4031 = vsel %vm277, %v4028, %v4030
  %v4032 = vrot.slane %v3960, 2
  %v4033 = vsel %vm277, %v4030, %v4032
  %v4034 = vrot.slane %v3961, 2
  %v4035 = vsel %vm277, %v4032, %v4034
  %v4036 = vrot.slane %v3962, 2
  %v4037 = vsel %vm277, %v4034, %v4036
  %v4038 = vrot.slane %v3963, 2
  %v4039 = vsel %vm277, %v4036, %v4038
  %v4040 = vrot.slane %v3964, 2
  %v4041 = vsel %vm277, %v4038, %v4040
  %v4042 = vrot.slane %v3965, 2
  %v4043 = vsel %vm277, %v4040, %v4042
  %v4044 = vrot.slane %v3966, 2
  %v4045 = vsel %vm277, %v4042, %v4044
  %v4046 = vrot.slane %v3967, 2
  %v4047 = vsel %vm277, %v4044, %v4046
  %v4048 = vrot.slane %v3968, 2
  %v4049 = vsel %vm277, %v4046, %v4048
  %v4050 = vrot.slane %v3969, 2
  %v4051 = vsel %vm277, %v4048, %v4050
  %v4052 = vrot.slane %v3970, 2
  %v4053 = vsel %vm277, %v4050, %v4052
  %v4054 = vrot.slane %v3971, 2
  %v4055 = vsel %vm277, %v4052, %v4054
  %v4056 = vrot.slane %v3972, 2
  %v4057 = vsel %vm277, %v4054, %v4056
  %v4058 = vrot.slane %v3973, 2
  %v4059 = vsel %vm277, %v4056, %v4058
  %v4060 = vrot.slane %v3974, 2
  %v4061 = vsel %vm277, %v4058, %v4060
  %v4062 = vrot.slane %v3975, 2
  %v4063 = vsel %vm277, %v4060, %v4062
  %v4064 = vrot.slane %v3976, 2
  %v4065 = vsel %vm277, %v4062, %v4064
  %v4066 = vrot.slane %v3977, 2
  %v4067 = vsel %vm277, %v4064, %v4066
  %v4068 = vrot.slane %v3978, 2
  %v4069 = vsel %vm277, %v4066, %v4068
  %v4070 = vrot.slane %v3979, 2
  %v4071 = vsel %vm277, %v4068, %v4070
  %v4103 = vmax.f32 %v3949, %v4013
  %v4104 = vmax.f32 %v3950, %v4015
  %v4105 = vmax.f32 %v3951, %v4017
  %v4106 = vmax.f32 %v3952, %v4019
  %v4107 = vmax.f32 %v3953, %v4021
  %v4108 = vmax.f32 %v3954, %v4023
  %v4109 = vmax.f32 %v3955, %v4025
  %v4110 = vmax.f32 %v3956, %v4027
  %v4111 = vmax.f32 %v3957, %v4029
  %v4112 = vmax.f32 %v3958, %v4031
  %v4113 = vmax.f32 %v3959, %v4033
  %v4114 = vmax.f32 %v3960, %v4035
  %v4115 = vmax.f32 %v3961, %v4037
  %v4116 = vmax.f32 %v3962, %v4039
  %v4117 = vmax.f32 %v3963, %v4041
  %v4118 = vmax.f32 %v3964, %v4043
  %v4119 = vmax.f32 %v3965, %v4045
  %v4120 = vmax.f32 %v3966, %v4047
  %v4121 = vmax.f32 %v3967, %v4049
  %v4122 = vmax.f32 %v3968, %v4051
  %v4123 = vmax.f32 %v3969, %v4053
  %v4124 = vmax.f32 %v3970, %v4055
  %v4125 = vmax.f32 %v3971, %v4057
  %v4126 = vmax.f32 %v3972, %v4059
  %v4127 = vmax.f32 %v3973, %v4061
  %v4128 = vmax.f32 %v3974, %v4063
  %v4129 = vmax.f32 %v3975, %v4065
  %v4130 = vmax.f32 %v3976, %v4067
  %v4131 = vmax.f32 %v3977, %v4069
  %v4132 = vmax.f32 %v3978, %v4071
  %v4133 = vmax.f32 %v3979, %v4070
  %v4134 = vlaneseq
  %v4135 = vshrl.u32 %v4134, 7
  %v4136 = vsub.s32 1, %v4135
  %v4137 = vrot.slane %v24, %v4136
  %v4138 = vadd.f32 %v4103, %v4137
  %v4139 = vadd.f32 %v4104, %v4137
  %v4140 = vadd.f32 %v4105, %v4137
  %v4141 = vadd.f32 %v4106, %v4137
  %v4142 = vadd.f32 %v4107, %v4137
  %v4143 = vadd.f32 %v4108, %v4137
  %v4144 = vadd.f32 %v4109, %v4137
  %v4145 = vadd.f32 %v4110, %v4137
  %v4146 = vadd.f32 %v4111, %v4137
  %v4147 = vadd.f32 %v4112, %v4137
  %v4148 = vadd.f32 %v4113, %v4137
  %v4149 = vadd.f32 %v4114, %v4137
  %v4150 = vadd.f32 %v4115, %v4137
  %v4151 = vadd.f32 %v4116, %v4137
  %v4152 = vadd.f32 %v4117, %v4137
  %v4153 = vadd.f32 %v4118, %v4137
  %v4154 = vadd.f32 %v4119, %v4137
  %v4155 = vadd.f32 %v4120, %v4137
  %v4156 = vadd.f32 %v4121, %v4137
  %v4157 = vadd.f32 %v4122, %v4137
  %v4158 = vadd.f32 %v4123, %v4137
  %v4159 = vadd.f32 %v4124, %v4137
  %v4160 = vadd.f32 %v4125, %v4137
  %v4161 = vadd.f32 %v4126, %v4137
  %v4162 = vadd.f32 %v4127, %v4137
  %v4163 = vadd.f32 %v4128, %v4137
  %v4164 = vadd.f32 %v4129, %v4137
  %v4165 = vadd.f32 %v4130, %v4137
  %v4166 = vadd.f32 %v4131, %v4137
  %v4167 = vadd.f32 %v4132, %v4137
  %v4168 = vadd.f32 %v4133, %v4137
  %v4169 = vmax.f32 %v4138, 0.0
  %v4170 = vmax.f32 %v4139, 0.0
  %v4171 = vmax.f32 %v4140, 0.0
  %v4172 = vmax.f32 %v4141, 0.0
  %v4173 = vmax.f32 %v4142, 0.0
  %v4174 = vmax.f32 %v4143, 0.0
  %v4175 = vmax.f32 %v4144, 0.0
  %v4176 = vmax.f32 %v4145, 0.0
  %v4177 = vmax.f32 %v4146, 0.0
  %v4178 = vmax.f32 %v4147, 0.0
  %v4179 = vmax.f32 %v4148, 0.0
  %v4180 = vmax.f32 %v4149, 0.0
  %v4181 = vmax.f32 %v4150, 0.0
  %v4182 = vmax.f32 %v4151, 0.0
  %v4183 = vmax.f32 %v4152, 0.0
  %v4184 = vmax.f32 %v4153, 0.0
  %v4185 = vmax.f32 %v4154, 0.0
  %v4186 = vmax.f32 %v4155, 0.0
  %v4187 = vmax.f32 %v4156, 0.0
  %v4188 = vmax.f32 %v4157, 0.0
  %v4189 = vmax.f32 %v4158, 0.0
  %v4190 = vmax.f32 %v4159, 0.0
  %v4191 = vmax.f32 %v4160, 0.0
  %v4192 = vmax.f32 %v4161, 0.0
  %v4193 = vmax.f32 %v4162, 0.0
  %v4194 = vmax.f32 %v4163, 0.0
  %v4195 = vmax.f32 %v4164, 0.0
  %v4196 = vmax.f32 %v4165, 0.0
  %v4197 = vmax.f32 %v4166, 0.0
  %v4198 = vmax.f32 %v4167, 0.0
  %v4199 = vmax.f32 %v4168, 0.0
  %v4200 = vpack.c.bf16 %v4170, %v4169
  %v4201 = vpack.c.bf16 %v4172, %v4171
  %v4202 = vpack.c.bf16 %v4174, %v4173
  %v4203 = vpack.c.bf16 %v4176, %v4175
  %v4204 = vpack.c.bf16 %v4178, %v4177
  %v4205 = vpack.c.bf16 %v4180, %v4179
  %v4206 = vpack.c.bf16 %v4182, %v4181
  %v4207 = vpack.c.bf16 %v4184, %v4183
  %v4208 = vpack.c.bf16 %v4186, %v4185
  %v4209 = vpack.c.bf16 %v4188, %v4187
  %v4210 = vpack.c.bf16 %v4190, %v4189
  %v4211 = vpack.c.bf16 %v4192, %v4191
  %v4212 = vpack.c.bf16 %v4194, %v4193
  %v4213 = vpack.c.bf16 %v4196, %v4195
  %v4214 = vpack.c.bf16 %v4198, %v4197
  %v4215 = vld [vmem:[%s3] sm:$0xff]
  %v4216 = vld [vmem:[%s3 + $0x8] sm:$0xff]
  %v4217 = vld [vmem:[%s3 + $0x10] sm:$0xff]
  %v4218 = vld [vmem:[%s3 + $0x18] sm:$0xff]
  %v4219 = vld [vmem:[%s3 + $0x20] sm:$0xff]
  %v4220 = vld [vmem:[%s3 + $0x28] sm:$0xff]
  %v4221 = vld [vmem:[%s3 + $0x30] sm:$0xff]
  %v4222 = vld [vmem:[%s3 + $0x38] sm:$0xff]
  %v4223 = vld [vmem:[%s3 + $0x40] sm:$0xff]
  %v4224 = vld [vmem:[%s3 + $0x48] sm:$0xff]
  %v4225 = vld [vmem:[%s3 + $0x50] sm:$0xff]
  %v4226 = vld [vmem:[%s3 + $0x58] sm:$0xff]
  %v4227 = vld [vmem:[%s3 + $0x60] sm:$0xff]
  %v4228 = vld [vmem:[%s3 + $0x68] sm:$0xff]
  %v4229 = vld [vmem:[%s3 + $0x70] sm:$0xff]
  %v4230 = vld [vmem:[%s3 + $0x78] sm:$0xff]
  %s4231 = scalar_lea.vmem %s3, 128
  %v4232 = vld [vmem:[%s4231] sm:$0xff]
  %v4233 = vld [vmem:[%s4231 + $0x8] sm:$0xff]
  %v4234 = vld [vmem:[%s4231 + $0x10] sm:$0xff]
  %v4235 = vld [vmem:[%s4231 + $0x18] sm:$0xff]
  %v4236 = vld [vmem:[%s4231 + $0x20] sm:$0xff]
  %v4237 = vld [vmem:[%s4231 + $0x28] sm:$0xff]
  %v4238 = vld [vmem:[%s4231 + $0x30] sm:$0xff]
  %v4239 = vld [vmem:[%s4231 + $0x38] sm:$0xff]
  %v4240 = vld [vmem:[%s4231 + $0x40] sm:$0xff]
  %v4241 = vld [vmem:[%s4231 + $0x48] sm:$0xff]
  %v4242 = vld [vmem:[%s4231 + $0x50] sm:$0xff]
  %v4243 = vld [vmem:[%s4231 + $0x58] sm:$0xff]
  %v4244 = vld [vmem:[%s4231 + $0x60] sm:$0xff]
  %v4245 = vld [vmem:[%s4231 + $0x68] sm:$0xff]
  %v4246 = vld [vmem:[%s4231 + $0x70] sm:$0xff]
  %v4247 = vld [vmem:[%s4231 + $0x78] sm:$0xff]
  %v4263 = vrot.slane %v4200, 2
  %v4264 = vrot.slane %v4201, 2
  %v4265 = vsel %vm1511, %v4263, %v4264
  %v4266 = vrot.slane %v4202, 2
  %v4267 = vsel %vm1511, %v4264, %v4266
  %v4268 = vrot.slane %v4203, 2
  %v4269 = vsel %vm1511, %v4266, %v4268
  %v4270 = vrot.slane %v4204, 2
  %v4271 = vsel %vm1511, %v4268, %v4270
  %v4272 = vrot.slane %v4205, 2
  %v4273 = vsel %vm1511, %v4270, %v4272
  %v4274 = vrot.slane %v4206, 2
  %v4275 = vsel %vm1511, %v4272, %v4274
  %v4276 = vrot.slane %v4207, 2
  %v4277 = vsel %vm1511, %v4274, %v4276
  %v4278 = vrot.slane %v4208, 2
  %v4279 = vsel %vm1511, %v4276, %v4278
  %v4280 = vrot.slane %v4209, 2
  %v4281 = vsel %vm1511, %v4278, %v4280
  %v4282 = vrot.slane %v4210, 2
  %v4283 = vsel %vm1511, %v4280, %v4282
  %v4284 = vrot.slane %v4211, 2
  %v4285 = vsel %vm1511, %v4282, %v4284
  %v4286 = vrot.slane %v4212, 2
  %v4287 = vsel %vm1511, %v4284, %v4286
  %v4288 = vrot.slane %v4213, 2
  %v4289 = vsel %vm1511, %v4286, %v4288
  %v4290 = vrot.slane %v4214, 2
  %v4291 = vsel %vm1511, %v4288, %v4290
  %v4323 = vunpack.c.l.b16 %v4232
  %v4324 = vunpack.c.h.b16 %v4232
  %v4325 = vunpack.c.l.b16 %v4233
  %v4326 = vunpack.c.h.b16 %v4233
  %v4327 = vunpack.c.l.b16 %v4234
  %v4328 = vunpack.c.h.b16 %v4234
  %v4329 = vunpack.c.l.b16 %v4235
  %v4330 = vunpack.c.h.b16 %v4235
  %v4331 = vunpack.c.l.b16 %v4236
  %v4332 = vunpack.c.h.b16 %v4236
  %v4333 = vunpack.c.l.b16 %v4237
  %v4334 = vunpack.c.h.b16 %v4237
  %v4335 = vunpack.c.l.b16 %v4238
  %v4336 = vunpack.c.h.b16 %v4238
  %v4337 = vunpack.c.l.b16 %v4239
  %v4338 = vunpack.c.h.b16 %v4239
  %v4339 = vunpack.c.l.b16 %v4240
  %v4340 = vunpack.c.h.b16 %v4240
  %v4341 = vunpack.c.l.b16 %v4241
  %v4342 = vunpack.c.h.b16 %v4241
  %v4343 = vunpack.c.l.b16 %v4242
  %v4344 = vunpack.c.h.b16 %v4242
  %v4345 = vunpack.c.l.b16 %v4243
  %v4346 = vunpack.c.h.b16 %v4243
  %v4347 = vunpack.c.l.b16 %v4244
  %v4348 = vunpack.c.h.b16 %v4244
  %v4349 = vunpack.c.l.b16 %v4245
  %v4350 = vunpack.c.h.b16 %v4245
  %v4351 = vunpack.c.l.b16 %v4246
  %v4352 = vunpack.c.h.b16 %v4246
  %v4353 = vunpack.c.l.b16 %v4247
  %v4354 = vunpack.c.h.b16 %v4247
  %v4355 = vpack.c.b16 %v4325, %v4323
  %v4356 = vpack.c.b16 %v4326, %v4324
  %v4357 = vpack.c.b16 %v4329, %v4327
  %v4358 = vpack.c.b16 %v4330, %v4328
  %v4359 = vpack.c.b16 %v4333, %v4331
  %v4360 = vpack.c.b16 %v4334, %v4332
  %v4361 = vpack.c.b16 %v4337, %v4335
  %v4362 = vpack.c.b16 %v4338, %v4336
  %v4363 = vpack.c.b16 %v4341, %v4339
  %v4364 = vpack.c.b16 %v4342, %v4340
  %v4365 = vpack.c.b16 %v4345, %v4343
  %v4366 = vpack.c.b16 %v4346, %v4344
  %v4367 = vpack.c.b16 %v4349, %v4347
  %v4368 = vpack.c.b16 %v4350, %v4348
  %v4369 = vpack.c.b16 %v4353, %v4351
  %v4370 = vpack.c.b16 %v4354, %v4352
  %4387 = vmatprep.subr.bf16.mxu0 %v4356
  %4388 = vmatpush1.bf16.msra.mxu0 %v4355
  %4389 = vmatprep.subr.bf16.mxu0 %v4358
  %4390 = vmatpush1.bf16.msra.mxu0 %v4357
  %4391 = vmatprep.subr.bf16.mxu0 %v4360
  %4392 = vmatpush1.bf16.msra.mxu0 %v4359
  %4393 = vmatprep.subr.bf16.mxu0 %v4362
  %4394 = vmatpush1.bf16.msra.mxu0 %v4361
  %4395 = vmatprep.subr.bf16.mxu0 %v4364
  %4396 = vmatpush1.bf16.msra.mxu0 %v4363
  %4397 = vmatprep.subr.bf16.mxu0 %v4366
  %4398 = vmatpush1.bf16.msra.mxu0 %v4365
  %4399 = vmatprep.subr.bf16.mxu0 %v4368
  %4400 = vmatpush1.bf16.msra.mxu0 %v4367
  %4401 = vmatprep.subr.bf16.mxu0 %v4370
  %4402 = vmatpush1.bf16.msra.mxu0 %v4369
  %4403 = vmatprep.subr.bf16.mxu0 0
  %4404 = vmatpush1.bf16.msra.mxu0 0
  %4405 = vmatprep.subr.bf16.mxu0 0
  %4406 = vmatpush1.bf16.msra.mxu0 0
  %4407 = vmatprep.subr.bf16.mxu0 0
  %4408 = vmatpush1.bf16.msra.mxu0 0
  %4409 = vmatprep.subr.bf16.mxu0 0
  %4410 = vmatpush1.bf16.msra.mxu0 0
  %4411 = vmatprep.subr.bf16.mxu0 0
  %4412 = vmatpush1.bf16.msra.mxu0 0
  %4413 = vmatprep.subr.bf16.mxu0 0
  %4414 = vmatpush1.bf16.msra.mxu0 0
  %4415 = vmatprep.subr.bf16.mxu0 0
  %4416 = vmatpush1.bf16.msra.mxu0 0
  %4417 = vmatprep.subr.bf16.mxu0 0
  %4418 = vmatpush1.bf16.msra.mxu0 0
  %4419 = vmatprep.mubr.bf16.mxu0 0
  %4420 = vmatmul.mubr.bf16.gmra.mrb[0].mxu0 %v4265
  %v4421 = vpop.f32.mrb[0].mxu0
  %v4422 = vadd.f32 0.0, %v4421
  %v4423 = vpop.f32.mrb[0].mxu0
  %v4424 = vadd.f32 0.0, %v4423
  %v4425 = vpop.f32.mrb[0].mxu0
  %v4426 = vadd.f32 0.0, %v4425
  %v4427 = vpop.f32.mrb[0].mxu0
  %v4428 = vadd.f32 0.0, %v4427
  %4429 = vmatprep.mubr.bf16.mxu0 0
  %4430 = vmatmul.mubr.bf16.gmra.mrb[0].mxu0 %v4267
  %v4431 = vpop.f32.mrb[0].mxu0
  %v4432 = vadd.f32 0.0, %v4431
  %v4433 = vpop.f32.mrb[0].mxu0
  %v4434 = vadd.f32 0.0, %v4433
  %v4435 = vpop.f32.mrb[0].mxu0
  %v4436 = vadd.f32 0.0, %v4435
  %v4437 = vpop.f32.mrb[0].mxu0
  %v4438 = vadd.f32 0.0, %v4437
  %4439 = vmatprep.mubr.bf16.mxu0 0
  %4440 = vmatmul.mubr.bf16.gmra.mrb[0].mxu0 %v4269
  %v4441 = vpop.f32.mrb[0].mxu0
  %v4442 = vadd.f32 0.0, %v4441
  %v4443 = vpop.f32.mrb[0].mxu0
  %v4444 = vadd.f32 0.0, %v4443
  %v4445 = vpop.f32.mrb[0].mxu0
  %v4446 = vadd.f32 0.0, %v4445
  %v4447 = vpop.f32.mrb[0].mxu0
  %v4448 = vadd.f32 0.0, %v4447
  %4449 = vmatprep.mubr.bf16.mxu0 0
  %4450 = vmatmul.mubr.bf16.gmra.mrb[0].mxu0 %v4271
  %v4451 = vpop.f32.mrb[0].mxu0
  %v4452 = vadd.f32 0.0, %v4451
  %v4453 = vpop.f32.mrb[0].mxu0
  %v4454 = vadd.f32 0.0, %v4453
  %v4455 = vpop.f32.mrb[0].mxu0
  %v4456 = vadd.f32 0.0, %v4455
  %v4457 = vpop.f32.mrb[0].mxu0
  %v4458 = vadd.f32 0.0, %v4457
  %4459 = vmatprep.mubr.bf16.mxu0 0
  %4460 = vmatmul.mubr.bf16.gmra.mrb[0].mxu0 %v4273
  %v4461 = vpop.f32.mrb[0].mxu0
  %v4462 = vadd.f32 0.0, %v4461
  %v4463 = vpop.f32.mrb[0].mxu0
  %v4464 = vadd.f32 0.0, %v4463
  %v4465 = vpop.f32.mrb[0].mxu0
  %v4466 = vadd.f32 0.0, %v4465
  %v4467 = vpop.f32.mrb[0].mxu0
  %v4468 = vadd.f32 0.0, %v4467
  %4469 = vmatprep.mubr.bf16.mxu0 0
  %4470 = vmatmul.mubr.bf16.gmra.mrb[0].mxu0 %v4275
  %v4471 = vpop.f32.mrb[0].mxu0
  %v4472 = vadd.f32 0.0, %v4471
  %v4473 = vpop.f32.mrb[0].mxu0
  %v4474 = vadd.f32 0.0, %v4473
  %v4475 = vpop.f32.mrb[0].mxu0
  %v4476 = vadd.f32 0.0, %v4475
  %v4477 = vpop.f32.mrb[0].mxu0
  %v4478 = vadd.f32 0.0, %v4477
  %4479 = vmatprep.mubr.bf16.mxu0 0
  %4480 = vmatmul.mubr.bf16.gmra.mrb[0].mxu0 %v4277
  %v4481 = vpop.f32.mrb[0].mxu0
  %v4482 = vadd.f32 0.0, %v4481
  %v4483 = vpop.f32.mrb[0].mxu0
  %v4484 = vadd.f32 0.0, %v4483
  %v4485 = vpop.f32.mrb[0].mxu0
  %v4486 = vadd.f32 0.0, %v4485
  %v4487 = vpop.f32.mrb[0].mxu0
  %v4488 = vadd.f32 0.0, %v4487
  %4489 = vmatprep.mubr.bf16.mxu0 0
  %4490 = vmatmul.mubr.bf16.gmra.mrb[0].mxu0 %v4279
  %v4491 = vpop.f32.mrb[0].mxu0
  %v4492 = vadd.f32 0.0, %v4491
  %v4493 = vpop.f32.mrb[0].mxu0
  %v4494 = vadd.f32 0.0, %v4493
  %v4495 = vpop.f32.mrb[0].mxu0
  %v4496 = vadd.f32 0.0, %v4495
  %v4497 = vpop.f32.mrb[0].mxu0
  %v4498 = vadd.f32 0.0, %v4497
  %4499 = vmatprep.mubr.bf16.mxu0 0
  %4500 = vmatmul.mubr.bf16.gmra.mrb[0].mxu0 %v4281
  %v4501 = vpop.f32.mrb[0].mxu0
  %v4502 = vadd.f32 0.0, %v4501
  %v4503 = vpop.f32.mrb[0].mxu0
  %v4504 = vadd.f32 0.0, %v4503
  %v4505 = vpop.f32.mrb[0].mxu0
  %v4506 = vadd.f32 0.0, %v4505
  %v4507 = vpop.f32.mrb[0].mxu0
  %v4508 = vadd.f32 0.0, %v4507
  %4509 = vmatprep.mubr.bf16.mxu0 0
  %4510 = vmatmul.mubr.bf16.gmra.mrb[0].mxu0 %v4283
  %v4511 = vpop.f32.mrb[0].mxu0
  %v4512 = vadd.f32 0.0, %v4511
  %v4513 = vpop.f32.mrb[0].mxu0
  %v4514 = vadd.f32 0.0, %v4513
  %v4515 = vpop.f32.mrb[0].mxu0
  %v4516 = vadd.f32 0.0, %v4515
  %v4517 = vpop.f32.mrb[0].mxu0
  %v4518 = vadd.f32 0.0, %v4517
  %4519 = vmatprep.mubr.bf16.mxu0 0
  %4520 = vmatmul.mubr.bf16.gmra.mrb[0].mxu0 %v4285
  %v4521 = vpop.f32.mrb[0].mxu0
  %v4522 = vadd.f32 0.0, %v4521
  %v4523 = vpop.f32.mrb[0].mxu0
  %v4524 = vadd.f32 0.0, %v4523
  %v4525 = vpop.f32.mrb[0].mxu0
  %v4526 = vadd.f32 0.0, %v4525
  %v4527 = vpop.f32.mrb[0].mxu0
  %v4528 = vadd.f32 0.0, %v4527
  %4529 = vmatprep.mubr.bf16.mxu0 0
  %4530 = vmatmul.mubr.bf16.gmra.mrb[0].mxu0 %v4287
  %v4531 = vpop.f32.mrb[0].mxu0
  %v4532 = vadd.f32 0.0, %v4531
  %v4533 = vpop.f32.mrb[0].mxu0
  %v4534 = vadd.f32 0.0, %v4533
  %v4535 = vpop.f32.mrb[0].mxu0
  %v4536 = vadd.f32 0.0, %v4535
  %v4537 = vpop.f32.mrb[0].mxu0
  %v4538 = vadd.f32 0.0, %v4537
  %4539 = vmatprep.mubr.bf16.mxu0 0
  %4540 = vmatmul.mubr.bf16.gmra.mrb[0].mxu0 %v4289
  %v4541 = vpop.f32.mrb[0].mxu0
  %v4542 = vadd.f32 0.0, %v4541
  %v4543 = vpop.f32.mrb[0].mxu0
  %v4544 = vadd.f32 0.0, %v4543
  %v4545 = vpop.f32.mrb[0].mxu0
  %v4546 = vadd.f32 0.0, %v4545
  %v4547 = vpop.f32.mrb[0].mxu0
  %v4548 = vadd.f32 0.0, %v4547
  %4549 = vmatprep.mubr.bf16.mxu0 0
  %4550 = vmatmul.mubr.bf16.gmra.mrb[0].mxu0 %v4291
  %v4551 = vpop.f32.mrb[0].mxu0
  %v4552 = vadd.f32 0.0, %v4551
  %v4553 = vpop.f32.mrb[0].mxu0
  %v4554 = vadd.f32 0.0, %v4553
  %v4555 = vpop.f32.mrb[0].mxu0
  %v4556 = vadd.f32 0.0, %v4555
  %v4557 = vpop.f32.mrb[0].mxu0
  %v4558 = vadd.f32 0.0, %v4557
  %4559 = vmatprep.mubr.bf16.mxu0 0
  %4560 = vmatmul.mubr.bf16.gmra.mrb[0].mxu0 %v4290
  %v4561 = vpop.f32.mrb[0].mxu0
  %v4562 = vadd.f32 0.0, %v4561
  %v4563 = vpop.f32.mrb[0].mxu0
  %v4564 = vadd.f32 0.0, %v4563
  %v4565 = vpop.f32.mrb[0].mxu0
  %v4566 = vadd.f32 0.0, %v4565
  %v4567 = vpop.f32.mrb[0].mxu0
  %v4568 = vadd.f32 0.0, %v4567
  %4569 = vdwg.mxu0
  %v4586 = vunpack.c.l.b16 %v4215
  %v4587 = vunpack.c.h.b16 %v4215
  %v4588 = vunpack.c.l.b16 %v4216
  %v4589 = vunpack.c.h.b16 %v4216
  %v4590 = vunpack.c.l.b16 %v4217
  %v4591 = vunpack.c.h.b16 %v4217
  %v4592 = vunpack.c.l.b16 %v4218
  %v4593 = vunpack.c.h.b16 %v4218
  %v4594 = vunpack.c.l.b16 %v4219
  %v4595 = vunpack.c.h.b16 %v4219
  %v4596 = vunpack.c.l.b16 %v4220
  %v4597 = vunpack.c.h.b16 %v4220
  %v4598 = vunpack.c.l.b16 %v4221
  %v4599 = vunpack.c.h.b16 %v4221
  %v4600 = vunpack.c.l.b16 %v4222
  %v4601 = vunpack.c.h.b16 %v4222
  %v4602 = vunpack.c.l.b16 %v4223
  %v4603 = vunpack.c.h.b16 %v4223
  %v4604 = vunpack.c.l.b16 %v4224
  %v4605 = vunpack.c.h.b16 %v4224
  %v4606 = vunpack.c.l.b16 %v4225
  %v4607 = vunpack.c.h.b16 %v4225
  %v4608 = vunpack.c.l.b16 %v4226
  %v4609 = vunpack.c.h.b16 %v4226
  %v4610 = vunpack.c.l.b16 %v4227
  %v4611 = vunpack.c.h.b16 %v4227
  %v4612 = vunpack.c.l.b16 %v4228
  %v4613 = vunpack.c.h.b16 %v4228
  %v4614 = vunpack.c.l.b16 %v4229
  %v4615 = vunpack.c.h.b16 %v4229
  %v4616 = vunpack.c.l.b16 %v4230
  %v4617 = vunpack.c.h.b16 %v4230
  %v4618 = vpack.c.b16 %v4588, %v4586
  %v4619 = vpack.c.b16 %v4589, %v4587
  %v4620 = vpack.c.b16 %v4592, %v4590
  %v4621 = vpack.c.b16 %v4593, %v4591
  %v4622 = vpack.c.b16 %v4596, %v4594
  %v4623 = vpack.c.b16 %v4597, %v4595
  %v4624 = vpack.c.b16 %v4600, %v4598
  %v4625 = vpack.c.b16 %v4601, %v4599
  %v4626 = vpack.c.b16 %v4604, %v4602
  %v4627 = vpack.c.b16 %v4605, %v4603
  %v4628 = vpack.c.b16 %v4608, %v4606
  %v4629 = vpack.c.b16 %v4609, %v4607
  %v4630 = vpack.c.b16 %v4612, %v4610
  %v4631 = vpack.c.b16 %v4613, %v4611
  %v4632 = vpack.c.b16 %v4616, %v4614
  %v4633 = vpack.c.b16 %v4617, %v4615
  %4650 = vmatprep.subr.bf16.mxu0 %v4619
  %4651 = vmatpush1.bf16.msra.mxu0 %v4618
  %4652 = vmatprep.subr.bf16.mxu0 %v4621
  %4653 = vmatpush1.bf16.msra.mxu0 %v4620
  %4654 = vmatprep.subr.bf16.mxu0 %v4623
  %4655 = vmatpush1.bf16.msra.mxu0 %v4622
  %4656 = vmatprep.subr.bf16.mxu0 %v4625
  %4657 = vmatpush1.bf16.msra.mxu0 %v4624
  %4658 = vmatprep.subr.bf16.mxu0 %v4627
  %4659 = vmatpush1.bf16.msra.mxu0 %v4626
  %4660 = vmatprep.subr.bf16.mxu0 %v4629
  %4661 = vmatpush1.bf16.msra.mxu0 %v4628
  %4662 = vmatprep.subr.bf16.mxu0 %v4631
  %4663 = vmatpush1.bf16.msra.mxu0 %v4630
  %4664 = vmatprep.subr.bf16.mxu0 %v4633
  %4665 = vmatpush1.bf16.msra.mxu0 %v4632
  %4666 = vmatprep.subr.bf16.mxu0 0
  %4667 = vmatpush1.bf16.msra.mxu0 0
  %4668 = vmatprep.subr.bf16.mxu0 0
  %4669 = vmatpush1.bf16.msra.mxu0 0
  %4670 = vmatprep.subr.bf16.mxu0 0
  %4671 = vmatpush1.bf16.msra.mxu0 0
  %4672 = vmatprep.subr.bf16.mxu0 0
  %4673 = vmatpush1.bf16.msra.mxu0 0
  %4674 = vmatprep.subr.bf16.mxu0 0
  %4675 = vmatpush1.bf16.msra.mxu0 0
  %4676 = vmatprep.subr.bf16.mxu0 0
  %4677 = vmatpush1.bf16.msra.mxu0 0
  %4678 = vmatprep.subr.bf16.mxu0 0
  %4679 = vmatpush1.bf16.msra.mxu0 0
  %4680 = vmatprep.subr.bf16.mxu0 0
  %4681 = vmatpush1.bf16.msra.mxu0 0
  %4682 = vmatprep.mubr.bf16.mxu0 0
  %4683 = vmatmul.mubr.bf16.gmra.mrb[0].mxu0 %v4200
  %v4684 = vpop.f32.mrb[0].mxu0
  %v4685 = vadd.f32 %v4422, %v4684
  %v4686 = vpop.f32.mrb[0].mxu0
  %v4687 = vadd.f32 %v4424, %v4686
  %v4688 = vpop.f32.mrb[0].mxu0
  %v4689 = vadd.f32 %v4426, %v4688
  %v4690 = vpop.f32.mrb[0].mxu0
  %v4691 = vadd.f32 %v4428, %v4690
  %4692 = vmatprep.mubr.bf16.mxu0 0
  %4693 = vmatmul.mubr.bf16.gmra.mrb[0].mxu0 %v4201
  %v4694 = vpop.f32.mrb[0].mxu0
  %v4695 = vadd.f32 %v4432, %v4694
  %v4696 = vpop.f32.mrb[0].mxu0
  %v4697 = vadd.f32 %v4434, %v4696
  %v4698 = vpop.f32.mrb[0].mxu0
  %v4699 = vadd.f32 %v4436, %v4698
  %v4700 = vpop.f32.mrb[0].mxu0
  %v4701 = vadd.f32 %v4438, %v4700
  %4702 = vmatprep.mubr.bf16.mxu0 0
  %4703 = vmatmul.mubr.bf16.gmra.mrb[0].mxu0 %v4202
  %v4704 = vpop.f32.mrb[0].mxu0
  %v4705 = vadd.f32 %v4442, %v4704
  %v4706 = vpop.f32.mrb[0].mxu0
  %v4707 = vadd.f32 %v4444, %v4706
  %v4708 = vpop.f32.mrb[0].mxu0
  %v4709 = vadd.f32 %v4446, %v4708
  %v4710 = vpop.f32.mrb[0].mxu0
  %v4711 = vadd.f32 %v4448, %v4710
  %4712 = vmatprep.mubr.bf16.mxu0 0
  %4713 = vmatmul.mubr.bf16.gmra.mrb[0].mxu0 %v4203
  %v4714 = vpop.f32.mrb[0].mxu0
  %v4715 = vadd.f32 %v4452, %v4714
  %v4716 = vpop.f32.mrb[0].mxu0
  %v4717 = vadd.f32 %v4454, %v4716
  %v4718 = vpop.f32.mrb[0].mxu0
  %v4719 = vadd.f32 %v4456, %v4718
  %v4720 = vpop.f32.mrb[0].mxu0
  %v4721 = vadd.f32 %v4458, %v4720
  %4722 = vmatprep.mubr.bf16.mxu0 0
  %4723 = vmatmul.mubr.bf16.gmra.mrb[0].mxu0 %v4204
  %v4724 = vpop.f32.mrb[0].mxu0
  %v4725 = vadd.f32 %v4462, %v4724
  %v4726 = vpop.f32.mrb[0].mxu0
  %v4727 = vadd.f32 %v4464, %v4726
  %v4728 = vpop.f32.mrb[0].mxu0
  %v4729 = vadd.f32 %v4466, %v4728
  %v4730 = vpop.f32.mrb[0].mxu0
  %v4731 = vadd.f32 %v4468, %v4730
  %4732 = vmatprep.mubr.bf16.mxu0 0
  %4733 = vmatmul.mubr.bf16.gmra.mrb[0].mxu0 %v4205
  %v4734 = vpop.f32.mrb[0].mxu0
  %v4735 = vadd.f32 %v4472, %v4734
  %v4736 = vpop.f32.mrb[0].mxu0
  %v4737 = vadd.f32 %v4474, %v4736
  %v4738 = vpop.f32.mrb[0].mxu0
  %v4739 = vadd.f32 %v4476, %v4738
  %v4740 = vpop.f32.mrb[0].mxu0
  %v4741 = vadd.f32 %v4478, %v4740
  %4742 = vmatprep.mubr.bf16.mxu0 0
  %4743 = vmatmul.mubr.bf16.gmra.mrb[0].mxu0 %v4206
  %v4744 = vpop.f32.mrb[0].mxu0
  %v4745 = vadd.f32 %v4482, %v4744
  %v4746 = vpop.f32.mrb[0].mxu0
  %v4747 = vadd.f32 %v4484, %v4746
  %v4748 = vpop.f32.mrb[0].mxu0
  %v4749 = vadd.f32 %v4486, %v4748
  %v4750 = vpop.f32.mrb[0].mxu0
  %v4751 = vadd.f32 %v4488, %v4750
  %4752 = vmatprep.mubr.bf16.mxu0 0
  %4753 = vmatmul.mubr.bf16.gmra.mrb[0].mxu0 %v4207
  %v4754 = vpop.f32.mrb[0].mxu0
  %v4755 = vadd.f32 %v4492, %v4754
  %v4756 = vpop.f32.mrb[0].mxu0
  %v4757 = vadd.f32 %v4494, %v4756
  %v4758 = vpop.f32.mrb[0].mxu0
  %v4759 = vadd.f32 %v4496, %v4758
  %v4760 = vpop.f32.mrb[0].mxu0
  %v4761 = vadd.f32 %v4498, %v4760
  %4762 = vmatprep.mubr.bf16.mxu0 0
  %4763 = vmatmul.mubr.bf16.gmra.mrb[0].mxu0 %v4208
  %v4764 = vpop.f32.mrb[0].mxu0
  %v4765 = vadd.f32 %v4502, %v4764
  %v4766 = vpop.f32.mrb[0].mxu0
  %v4767 = vadd.f32 %v4504, %v4766
  %v4768 = vpop.f32.mrb[0].mxu0
  %v4769 = vadd.f32 %v4506, %v4768
  %v4770 = vpop.f32.mrb[0].mxu0
  %v4771 = vadd.f32 %v4508, %v4770
  %4772 = vmatprep.mubr.bf16.mxu0 0
  %4773 = vmatmul.mubr.bf16.gmra.mrb[0].mxu0 %v4209
  %v4774 = vpop.f32.mrb[0].mxu0
  %v4775 = vadd.f32 %v4512, %v4774
  %v4776 = vpop.f32.mrb[0].mxu0
  %v4777 = vadd.f32 %v4514, %v4776
  %v4778 = vpop.f32.mrb[0].mxu0
  %v4779 = vadd.f32 %v4516, %v4778
  %v4780 = vpop.f32.mrb[0].mxu0
  %v4781 = vadd.f32 %v4518, %v4780
  %4782 = vmatprep.mubr.bf16.mxu0 0
  %4783 = vmatmul.mubr.bf16.gmra.mrb[0].mxu0 %v4210
  %v4784 = vpop.f32.mrb[0].mxu0
  %v4785 = vadd.f32 %v4522, %v4784
  %v4786 = vpop.f32.mrb[0].mxu0
  %v4787 = vadd.f32 %v4524, %v4786
  %v4788 = vpop.f32.mrb[0].mxu0
  %v4789 = vadd.f32 %v4526, %v4788
  %v4790 = vpop.f32.mrb[0].mxu0
  %v4791 = vadd.f32 %v4528, %v4790
  %4792 = vmatprep.mubr.bf16.mxu0 0
  %4793 = vmatmul.mubr.bf16.gmra.mrb[0].mxu0 %v4211
  %v4794 = vpop.f32.mrb[0].mxu0
  %v4795 = vadd.f32 %v4532, %v4794
  %v4796 = vpop.f32.mrb[0].mxu0
  %v4797 = vadd.f32 %v4534, %v4796
  %v4798 = vpop.f32.mrb[0].mxu0
  %v4799 = vadd.f32 %v4536, %v4798
  %v4800 = vpop.f32.mrb[0].mxu0
  %v4801 = vadd.f32 %v4538, %v4800
  %4802 = vmatprep.mubr.bf16.mxu0 0
  %4803 = vmatmul.mubr.bf16.gmra.mrb[0].mxu0 %v4212
  %v4804 = vpop.f32.mrb[0].mxu0
  %v4805 = vadd.f32 %v4542, %v4804
  %v4806 = vpop.f32.mrb[0].mxu0
  %v4807 = vadd.f32 %v4544, %v4806
  %v4808 = vpop.f32.mrb[0].mxu0
  %v4809 = vadd.f32 %v4546, %v4808
  %v4810 = vpop.f32.mrb[0].mxu0
  %v4811 = vadd.f32 %v4548, %v4810
  %4812 = vmatprep.mubr.bf16.mxu0 0
  %4813 = vmatmul.mubr.bf16.gmra.mrb[0].mxu0 %v4213
  %v4814 = vpop.f32.mrb[0].mxu0
  %v4815 = vadd.f32 %v4552, %v4814
  %v4816 = vpop.f32.mrb[0].mxu0
  %v4817 = vadd.f32 %v4554, %v4816
  %v4818 = vpop.f32.mrb[0].mxu0
  %v4819 = vadd.f32 %v4556, %v4818
  %v4820 = vpop.f32.mrb[0].mxu0
  %v4821 = vadd.f32 %v4558, %v4820
  %4822 = vmatprep.mubr.bf16.mxu0 0
  %4823 = vmatmul.mubr.bf16.gmra.mrb[0].mxu0 %v4214
  %v4824 = vpop.f32.mrb[0].mxu0
  %v4825 = vadd.f32 %v4562, %v4824
  %v4826 = vpop.f32.mrb[0].mxu0
  %v4827 = vadd.f32 %v4564, %v4826
  %v4828 = vpop.f32.mrb[0].mxu0
  %v4829 = vadd.f32 %v4566, %v4828
  %v4830 = vpop.f32.mrb[0].mxu0
  %v4831 = vadd.f32 %v4568, %v4830
  %4832 = vdwg.mxu0
  %v4833 = vpack.c.bf16 %v4171, %v4170
  %v4834 = vpack.c.bf16 %v4173, %v4172
  %v4835 = vpack.c.bf16 %v4175, %v4174
  %v4836 = vpack.c.bf16 %v4177, %v4176
  %v4837 = vpack.c.bf16 %v4179, %v4178
  %v4838 = vpack.c.bf16 %v4181, %v4180
  %v4839 = vpack.c.bf16 %v4183, %v4182
  %v4840 = vpack.c.bf16 %v4185, %v4184
  %v4841 = vpack.c.bf16 %v4187, %v4186
  %v4842 = vpack.c.bf16 %v4189, %v4188
  %v4843 = vpack.c.bf16 %v4191, %v4190
  %v4844 = vpack.c.bf16 %v4193, %v4192
  %v4845 = vpack.c.bf16 %v4195, %v4194
  %v4846 = vpack.c.bf16 %v4197, %v4196
  %v4847 = vpack.c.bf16 %v4199, %v4198
  %s4848 = scalar_lea.vmem %s3, 256
  %v4849 = vld [vmem:[%s4848] sm:$0xff]
  %v4850 = vld [vmem:[%s4848 + $0x8] sm:$0xff]
  %v4851 = vld [vmem:[%s4848 + $0x10] sm:$0xff]
  %v4852 = vld [vmem:[%s4848 + $0x18] sm:$0xff]
  %v4853 = vld [vmem:[%s4848 + $0x20] sm:$0xff]
  %v4854 = vld [vmem:[%s4848 + $0x28] sm:$0xff]
  %v4855 = vld [vmem:[%s4848 + $0x30] sm:$0xff]
  %v4856 = vld [vmem:[%s4848 + $0x38] sm:$0xff]
  %v4857 = vld [vmem:[%s4848 + $0x40] sm:$0xff]
  %v4858 = vld [vmem:[%s4848 + $0x48] sm:$0xff]
  %v4859 = vld [vmem:[%s4848 + $0x50] sm:$0xff]
  %v4860 = vld [vmem:[%s4848 + $0x58] sm:$0xff]
  %v4861 = vld [vmem:[%s4848 + $0x60] sm:$0xff]
  %v4862 = vld [vmem:[%s4848 + $0x68] sm:$0xff]
  %v4863 = vld [vmem:[%s4848 + $0x70] sm:$0xff]
  %v4864 = vld [vmem:[%s4848 + $0x78] sm:$0xff]
  %v4881 = vunpack.c.l.b16 %v4849
  %v4882 = vunpack.c.h.b16 %v4849
  %v4883 = vunpack.c.l.b16 %v4850
  %v4884 = vunpack.c.h.b16 %v4850
  %v4885 = vunpack.c.l.b16 %v4851
  %v4886 = vunpack.c.h.b16 %v4851
  %v4887 = vunpack.c.l.b16 %v4852
  %v4888 = vunpack.c.h.b16 %v4852
  %v4889 = vunpack.c.l.b16 %v4853
  %v4890 = vunpack.c.h.b16 %v4853
  %v4891 = vunpack.c.l.b16 %v4854
  %v4892 = vunpack.c.h.b16 %v4854
  %v4893 = vunpack.c.l.b16 %v4855
  %v4894 = vunpack.c.h.b16 %v4855
  %v4895 = vunpack.c.l.b16 %v4856
  %v4896 = vunpack.c.h.b16 %v4856
  %v4897 = vunpack.c.l.b16 %v4857
  %v4898 = vunpack.c.h.b16 %v4857
  %v4899 = vunpack.c.l.b16 %v4858
  %v4900 = vunpack.c.h.b16 %v4858
  %v4901 = vunpack.c.l.b16 %v4859
  %v4902 = vunpack.c.h.b16 %v4859
  %v4903 = vunpack.c.l.b16 %v4860
  %v4904 = vunpack.c.h.b16 %v4860
  %v4905 = vunpack.c.l.b16 %v4861
  %v4906 = vunpack.c.h.b16 %v4861
  %v4907 = vunpack.c.l.b16 %v4862
  %v4908 = vunpack.c.h.b16 %v4862
  %v4909 = vunpack.c.l.b16 %v4863
  %v4910 = vunpack.c.h.b16 %v4863
  %v4911 = vunpack.c.l.b16 %v4864
  %v4912 = vunpack.c.h.b16 %v4864
  %v4913 = vpack.c.b16 %v4883, %v4881
  %v4914 = vpack.c.b16 %v4884, %v4882
  %v4915 = vpack.c.b16 %v4887, %v4885
  %v4916 = vpack.c.b16 %v4888, %v4886
  %v4917 = vpack.c.b16 %v4891, %v4889
  %v4918 = vpack.c.b16 %v4892, %v4890
  %v4919 = vpack.c.b16 %v4895, %v4893
  %v4920 = vpack.c.b16 %v4896, %v4894
  %v4921 = vpack.c.b16 %v4899, %v4897
  %v4922 = vpack.c.b16 %v4900, %v4898
  %v4923 = vpack.c.b16 %v4903, %v4901
  %v4924 = vpack.c.b16 %v4904, %v4902
  %v4925 = vpack.c.b16 %v4907, %v4905
  %v4926 = vpack.c.b16 %v4908, %v4906
  %v4927 = vpack.c.b16 %v4911, %v4909
  %v4928 = vpack.c.b16 %v4912, %v4910
  %4945 = vmatprep.subr.bf16.mxu0 %v4914
  %4946 = vmatpush1.bf16.msra.mxu0 %v4913
  %4947 = vmatprep.subr.bf16.mxu0 %v4916
  %4948 = vmatpush1.bf16.msra.mxu0 %v4915
  %4949 = vmatprep.subr.bf16.mxu0 %v4918
  %4950 = vmatpush1.bf16.msra.mxu0 %v4917
  %4951 = vmatprep.subr.bf16.mxu0 %v4920
  %4952 = vmatpush1.bf16.msra.mxu0 %v4919
  %4953 = vmatprep.subr.bf16.mxu0 %v4922
  %4954 = vmatpush1.bf16.msra.mxu0 %v4921
  %4955 = vmatprep.subr.bf16.mxu0 %v4924
  %4956 = vmatpush1.bf16.msra.mxu0 %v4923
  %4957 = vmatprep.subr.bf16.mxu0 %v4926
  %4958 = vmatpush1.bf16.msra.mxu0 %v4925
  %4959 = vmatprep.subr.bf16.mxu0 %v4928
  %4960 = vmatpush1.bf16.msra.mxu0 %v4927
  %4961 = vmatprep.subr.bf16.mxu0 0
  %4962 = vmatpush1.bf16.msra.mxu0 0
  %4963 = vmatprep.subr.bf16.mxu0 0
  %4964 = vmatpush1.bf16.msra.mxu0 0
  %4965 = vmatprep.subr.bf16.mxu0 0
  %4966 = vmatpush1.bf16.msra.mxu0 0
  %4967 = vmatprep.subr.bf16.mxu0 0
  %4968 = vmatpush1.bf16.msra.mxu0 0
  %4969 = vmatprep.subr.bf16.mxu0 0
  %4970 = vmatpush1.bf16.msra.mxu0 0
  %4971 = vmatprep.subr.bf16.mxu0 0
  %4972 = vmatpush1.bf16.msra.mxu0 0
  %4973 = vmatprep.subr.bf16.mxu0 0
  %4974 = vmatpush1.bf16.msra.mxu0 0
  %4975 = vmatprep.subr.bf16.mxu0 0
  %4976 = vmatpush1.bf16.msra.mxu0 0
  %4977 = vmatprep.mubr.bf16.mxu0 0
  %4978 = vmatmul.mubr.bf16.gmra.mrb[0].mxu0 %v4833
  %v4979 = vpop.f32.mrb[0].mxu0
  %v4980 = vadd.f32 0.0, %v4979
  %v4981 = vpop.f32.mrb[0].mxu0
  %v4982 = vadd.f32 0.0, %v4981
  %v4983 = vpop.f32.mrb[0].mxu0
  %v4984 = vadd.f32 0.0, %v4983
  %v4985 = vpop.f32.mrb[0].mxu0
  %v4986 = vadd.f32 0.0, %v4985
  %4987 = vmatprep.mubr.bf16.mxu0 0
  %4988 = vmatmul.mubr.bf16.gmra.mrb[0].mxu0 %v4834
  %v4989 = vpop.f32.mrb[0].mxu0
  %v4990 = vadd.f32 0.0, %v4989
  %v4991 = vpop.f32.mrb[0].mxu0
  %v4992 = vadd.f32 0.0, %v4991
  %v4993 = vpop.f32.mrb[0].mxu0
  %v4994 = vadd.f32 0.0, %v4993
  %v4995 = vpop.f32.mrb[0].mxu0
  %v4996 = vadd.f32 0.0, %v4995
  %4997 = vmatprep.mubr.bf16.mxu0 0
  %4998 = vmatmul.mubr.bf16.gmra.mrb[0].mxu0 %v4835
  %v4999 = vpop.f32.mrb[0].mxu0
  %v5000 = vadd.f32 0.0, %v4999
  %v5001 = vpop.f32.mrb[0].mxu0
  %v5002 = vadd.f32 0.0, %v5001
  %v5003 = vpop.f32.mrb[0].mxu0
  %v5004 = vadd.f32 0.0, %v5003
  %v5005 = vpop.f32.mrb[0].mxu0
  %v5006 = vadd.f32 0.0, %v5005
  %5007 = vmatprep.mubr.bf16.mxu0 0
  %5008 = vmatmul.mubr.bf16.gmra.mrb[0].mxu0 %v4836
  %v5009 = vpop.f32.mrb[0].mxu0
  %v5010 = vadd.f32 0.0, %v5009
  %v5011 = vpop.f32.mrb[0].mxu0
  %v5012 = vadd.f32 0.0, %v5011
  %v5013 = vpop.f32.mrb[0].mxu0
  %v5014 = vadd.f32 0.0, %v5013
  %v5015 = vpop.f32.mrb[0].mxu0
  %v5016 = vadd.f32 0.0, %v5015
  %5017 = vmatprep.mubr.bf16.mxu0 0
  %5018 = vmatmul.mubr.bf16.gmra.mrb[0].mxu0 %v4837
  %v5019 = vpop.f32.mrb[0].mxu0
  %v5020 = vadd.f32 0.0, %v5019
  %v5021 = vpop.f32.mrb[0].mxu0
  %v5022 = vadd.f32 0.0, %v5021
  %v5023 = vpop.f32.mrb[0].mxu0
  %v5024 = vadd.f32 0.0, %v5023
  %v5025 = vpop.f32.mrb[0].mxu0
  %v5026 = vadd.f32 0.0, %v5025
  %5027 = vmatprep.mubr.bf16.mxu0 0
  %5028 = vmatmul.mubr.bf16.gmra.mrb[0].mxu0 %v4838
  %v5029 = vpop.f32.mrb[0].mxu0
  %v5030 = vadd.f32 0.0, %v5029
  %v5031 = vpop.f32.mrb[0].mxu0
  %v5032 = vadd.f32 0.0, %v5031
  %v5033 = vpop.f32.mrb[0].mxu0
  %v5034 = vadd.f32 0.0, %v5033
  %v5035 = vpop.f32.mrb[0].mxu0
  %v5036 = vadd.f32 0.0, %v5035
  %5037 = vmatprep.mubr.bf16.mxu0 0
  %5038 = vmatmul.mubr.bf16.gmra.mrb[0].mxu0 %v4839
  %v5039 = vpop.f32.mrb[0].mxu0
  %v5040 = vadd.f32 0.0, %v5039
  %v5041 = vpop.f32.mrb[0].mxu0
  %v5042 = vadd.f32 0.0, %v5041
  %v5043 = vpop.f32.mrb[0].mxu0
  %v5044 = vadd.f32 0.0, %v5043
  %v5045 = vpop.f32.mrb[0].mxu0
  %v5046 = vadd.f32 0.0, %v5045
  %5047 = vmatprep.mubr.bf16.mxu0 0
  %5048 = vmatmul.mubr.bf16.gmra.mrb[0].mxu0 %v4840
  %v5049 = vpop.f32.mrb[0].mxu0
  %v5050 = vadd.f32 0.0, %v5049
  %v5051 = vpop.f32.mrb[0].mxu0
  %v5052 = vadd.f32 0.0, %v5051
  %v5053 = vpop.f32.mrb[0].mxu0
  %v5054 = vadd.f32 0.0, %v5053
  %v5055 = vpop.f32.mrb[0].mxu0
  %v5056 = vadd.f32 0.0, %v5055
  %5057 = vmatprep.mubr.bf16.mxu0 0
  %5058 = vmatmul.mubr.bf16.gmra.mrb[0].mxu0 %v4841
  %v5059 = vpop.f32.mrb[0].mxu0
  %v5060 = vadd.f32 0.0, %v5059
  %v5061 = vpop.f32.mrb[0].mxu0
  %v5062 = vadd.f32 0.0, %v5061
  %v5063 = vpop.f32.mrb[0].mxu0
  %v5064 = vadd.f32 0.0, %v5063
  %v5065 = vpop.f32.mrb[0].mxu0
  %v5066 = vadd.f32 0.0, %v5065
  %5067 = vmatprep.mubr.bf16.mxu0 0
  %5068 = vmatmul.mubr.bf16.gmra.mrb[0].mxu0 %v4842
  %v5069 = vpop.f32.mrb[0].mxu0
  %v5070 = vadd.f32 0.0, %v5069
  %v5071 = vpop.f32.mrb[0].mxu0
  %v5072 = vadd.f32 0.0, %v5071
  %v5073 = vpop.f32.mrb[0].mxu0
  %v5074 = vadd.f32 0.0, %v5073
  %v5075 = vpop.f32.mrb[0].mxu0
  %v5076 = vadd.f32 0.0, %v5075
  %5077 = vmatprep.mubr.bf16.mxu0 0
  %5078 = vmatmul.mubr.bf16.gmra.mrb[0].mxu0 %v4843
  %v5079 = vpop.f32.mrb[0].mxu0
  %v5080 = vadd.f32 0.0, %v5079
  %v5081 = vpop.f32.mrb[0].mxu0
  %v5082 = vadd.f32 0.0, %v5081
  %v5083 = vpop.f32.mrb[0].mxu0
  %v5084 = vadd.f32 0.0, %v5083
  %v5085 = vpop.f32.mrb[0].mxu0
  %v5086 = vadd.f32 0.0, %v5085
  %5087 = vmatprep.mubr.bf16.mxu0 0
  %5088 = vmatmul.mubr.bf16.gmra.mrb[0].mxu0 %v4844
  %v5089 = vpop.f32.mrb[0].mxu0
  %v5090 = vadd.f32 0.0, %v5089
  %v5091 = vpop.f32.mrb[0].mxu0
  %v5092 = vadd.f32 0.0, %v5091
  %v5093 = vpop.f32.mrb[0].mxu0
  %v5094 = vadd.f32 0.0, %v5093
  %v5095 = vpop.f32.mrb[0].mxu0
  %v5096 = vadd.f32 0.0, %v5095
  %5097 = vmatprep.mubr.bf16.mxu0 0
  %5098 = vmatmul.mubr.bf16.gmra.mrb[0].mxu0 %v4845
  %v5099 = vpop.f32.mrb[0].mxu0
  %v5100 = vadd.f32 0.0, %v5099
  %v5101 = vpop.f32.mrb[0].mxu0
  %v5102 = vadd.f32 0.0, %v5101
  %v5103 = vpop.f32.mrb[0].mxu0
  %v5104 = vadd.f32 0.0, %v5103
  %v5105 = vpop.f32.mrb[0].mxu0
  %v5106 = vadd.f32 0.0, %v5105
  %5107 = vmatprep.mubr.bf16.mxu0 0
  %5108 = vmatmul.mubr.bf16.gmra.mrb[0].mxu0 %v4846
  %v5109 = vpop.f32.mrb[0].mxu0
  %v5110 = vadd.f32 0.0, %v5109
  %v5111 = vpop.f32.mrb[0].mxu0
  %v5112 = vadd.f32 0.0, %v5111
  %v5113 = vpop.f32.mrb[0].mxu0
  %v5114 = vadd.f32 0.0, %v5113
  %v5115 = vpop.f32.mrb[0].mxu0
  %v5116 = vadd.f32 0.0, %v5115
  %5117 = vmatprep.mubr.bf16.mxu0 0
  %5118 = vmatmul.mubr.bf16.gmra.mrb[0].mxu0 %v4847
  %v5119 = vpop.f32.mrb[0].mxu0
  %v5120 = vadd.f32 0.0, %v5119
  %v5121 = vpop.f32.mrb[0].mxu0
  %v5122 = vadd.f32 0.0, %v5121
  %v5123 = vpop.f32.mrb[0].mxu0
  %v5124 = vadd.f32 0.0, %v5123
  %v5125 = vpop.f32.mrb[0].mxu0
  %v5126 = vadd.f32 0.0, %v5125
  %5127 = vdwg.mxu0
  %v5128 = vadd.f32 %v4685, %v4980
  %v5129 = vadd.f32 %v4687, %v4982
  %v5130 = vadd.f32 %v4689, %v4984
  %v5131 = vadd.f32 %v4691, %v4986
  %v5132 = vadd.f32 %v4695, %v4990
  %v5133 = vadd.f32 %v4697, %v4992
  %v5134 = vadd.f32 %v4699, %v4994
  %v5135 = vadd.f32 %v4701, %v4996
  %v5136 = vadd.f32 %v4705, %v5000
  %v5137 = vadd.f32 %v4707, %v5002
  %v5138 = vadd.f32 %v4709, %v5004
  %v5139 = vadd.f32 %v4711, %v5006
  %v5140 = vadd.f32 %v4715, %v5010
  %v5141 = vadd.f32 %v4717, %v5012
  %v5142 = vadd.f32 %v4719, %v5014
  %v5143 = vadd.f32 %v4721, %v5016
  %v5144 = vadd.f32 %v4725, %v5020
  %v5145 = vadd.f32 %v4727, %v5022
  %v5146 = vadd.f32 %v4729, %v5024
  %v5147 = vadd.f32 %v4731, %v5026
  %v5148 = vadd.f32 %v4735, %v5030
  %v5149 = vadd.f32 %v4737, %v5032
  %v5150 = vadd.f32 %v4739, %v5034
  %v5151 = vadd.f32 %v4741, %v5036
  %v5152 = vadd.f32 %v4745, %v5040
  %v5153 = vadd.f32 %v4747, %v5042
  %v5154 = vadd.f32 %v4749, %v5044
  %v5155 = vadd.f32 %v4751, %v5046
  %v5156 = vadd.f32 %v4755, %v5050
  %v5157 = vadd.f32 %v4757, %v5052
  %v5158 = vadd.f32 %v4759, %v5054
  %v5159 = vadd.f32 %v4761, %v5056
  %v5160 = vadd.f32 %v4765, %v5060
  %v5161 = vadd.f32 %v4767, %v5062
  %v5162 = vadd.f32 %v4769, %v5064
  %v5163 = vadd.f32 %v4771, %v5066
  %v5164 = vadd.f32 %v4775, %v5070
  %v5165 = vadd.f32 %v4777, %v5072
  %v5166 = vadd.f32 %v4779, %v5074
  %v5167 = vadd.f32 %v4781, %v5076
  %v5168 = vadd.f32 %v4785, %v5080
  %v5169 = vadd.f32 %v4787, %v5082
  %v5170 = vadd.f32 %v4789, %v5084
  %v5171 = vadd.f32 %v4791, %v5086
  %v5172 = vadd.f32 %v4795, %v5090
  %v5173 = vadd.f32 %v4797, %v5092
  %v5174 = vadd.f32 %v4799, %v5094
  %v5175 = vadd.f32 %v4801, %v5096
  %v5176 = vadd.f32 %v4805, %v5100
  %v5177 = vadd.f32 %v4807, %v5102
  %v5178 = vadd.f32 %v4809, %v5104
  %v5179 = vadd.f32 %v4811, %v5106
  %v5180 = vadd.f32 %v4815, %v5110
  %v5181 = vadd.f32 %v4817, %v5112
  %v5182 = vadd.f32 %v4819, %v5114
  %v5183 = vadd.f32 %v4821, %v5116
  %v5184 = vadd.f32 %v4825, %v5120
  %v5185 = vadd.f32 %v4827, %v5122
  %v5186 = vadd.f32 %v4829, %v5124
  %v5187 = vadd.f32 %v4831, %v5126
  %v5188 = vmax.f32 %v5128, %v5129
  %v5189 = vmax.f32 %v5130, %v5131
  %v5190 = vmax.f32 %v5132, %v5133
  %v5191 = vmax.f32 %v5134, %v5135
  %v5192 = vmax.f32 %v5136, %v5137
  %v5193 = vmax.f32 %v5138, %v5139
  %v5194 = vmax.f32 %v5140, %v5141
  %v5195 = vmax.f32 %v5142, %v5143
  %v5196 = vmax.f32 %v5144, %v5145
  %v5197 = vmax.f32 %v5146, %v5147
  %v5198 = vmax.f32 %v5148, %v5149
  %v5199 = vmax.f32 %v5150, %v5151
  %v5200 = vmax.f32 %v5152, %v5153
  %v5201 = vmax.f32 %v5154, %v5155
  %v5202 = vmax.f32 %v5156, %v5157
  %v5203 = vmax.f32 %v5158, %v5159
  %v5204 = vmax.f32 %v5160, %v5161
  %v5205 = vmax.f32 %v5162, %v5163
  %v5206 = vmax.f32 %v5164, %v5165
  %v5207 = vmax.f32 %v5166, %v5167
  %v5208 = vmax.f32 %v5168, %v5169
  %v5209 = vmax.f32 %v5170, %v5171
  %v5210 = vmax.f32 %v5172, %v5173
  %v5211 = vmax.f32 %v5174, %v5175
  %v5212 = vmax.f32 %v5176, %v5177
  %v5213 = vmax.f32 %v5178, %v5179
  %v5214 = vmax.f32 %v5180, %v5181
  %v5215 = vmax.f32 %v5182, %v5183
  %v5216 = vmax.f32 %v5184, %v5185
  %v5217 = vmax.f32 %v5186, %v5187
  %vm5248 = vcmask 1043456
  %v5249 = vrot.slane %v5188, 4
  %v5250 = vrot.slane %v5189, 4
  %v5251 = vsel %vm5248, %v5249, %v5250
  %v5252 = vrot.slane %v5190, 4
  %v5253 = vsel %vm5248, %v5250, %v5252
  %v5254 = vrot.slane %v5191, 4
  %v5255 = vsel %vm5248, %v5252, %v5254
  %v5256 = vrot.slane %v5192, 4
  %v5257 = vsel %vm5248, %v5254, %v5256
  %v5258 = vrot.slane %v5193, 4
  %v5259 = vsel %vm5248, %v5256, %v5258
  %v5260 = vrot.slane %v5194, 4
  %v5261 = vsel %vm5248, %v5258, %v5260
  %v5262 = vrot.slane %v5195, 4
  %v5263 = vsel %vm5248, %v5260, %v5262
  %v5264 = vrot.slane %v5196, 4
  %v5265 = vsel %vm5248, %v5262, %v5264
  %v5266 = vrot.slane %v5197, 4
  %v5267 = vsel %vm5248, %v5264, %v5266
  %v5268 = vrot.slane %v5198, 4
  %v5269 = vsel %vm5248, %v5266, %v5268
  %v5270 = vrot.slane %v5199, 4
  %v5271 = vsel %vm5248, %v5268, %v5270
  %v5272 = vrot.slane %v5200, 4
  %v5273 = vsel %vm5248, %v5270, %v5272
  %v5274 = vrot.slane %v5201, 4
  %v5275 = vsel %vm5248, %v5272, %v5274
  %v5276 = vrot.slane %v5202, 4
  %v5277 = vsel %vm5248, %v5274, %v5276
  %v5278 = vrot.slane %v5203, 4
  %v5279 = vsel %vm5248, %v5276, %v5278
  %v5280 = vrot.slane %v5204, 4
  %v5281 = vsel %vm5248, %v5278, %v5280
  %v5282 = vrot.slane %v5205, 4
  %v5283 = vsel %vm5248, %v5280, %v5282
  %v5284 = vrot.slane %v5206, 4
  %v5285 = vsel %vm5248, %v5282, %v5284
  %v5286 = vrot.slane %v5207, 4
  %v5287 = vsel %vm5248, %v5284, %v5286
  %v5288 = vrot.slane %v5208, 4
  %v5289 = vsel %vm5248, %v5286, %v5288
  %v5290 = vrot.slane %v5209, 4
  %v5291 = vsel %vm5248, %v5288, %v5290
  %v5292 = vrot.slane %v5210, 4
  %v5293 = vsel %vm5248, %v5290, %v5292
  %v5294 = vrot.slane %v5211, 4
  %v5295 = vsel %vm5248, %v5292, %v5294
  %v5296 = vrot.slane %v5212, 4
  %v5297 = vsel %vm5248, %v5294, %v5296
  %v5298 = vrot.slane %v5213, 4
  %v5299 = vsel %vm5248, %v5296, %v5298
  %v5300 = vrot.slane %v5214, 4
  %v5301 = vsel %vm5248, %v5298, %v5300
  %v5302 = vrot.slane %v5215, 4
  %v5303 = vsel %vm5248, %v5300, %v5302
  %v5304 = vrot.slane %v5216, 4
  %v5305 = vsel %vm5248, %v5302, %v5304
  %v5306 = vrot.slane %v5217, 4
  %v5307 = vsel %vm5248, %v5304, %v5306
  %v5337 = vmax.f32 %v5188, %v5251
  %v5338 = vmax.f32 %v5189, %v5253
  %v5339 = vmax.f32 %v5190, %v5255
  %v5340 = vmax.f32 %v5191, %v5257
  %v5341 = vmax.f32 %v5192, %v5259
  %v5342 = vmax.f32 %v5193, %v5261
  %v5343 = vmax.f32 %v5194, %v5263
  %v5344 = vmax.f32 %v5195, %v5265
  %v5345 = vmax.f32 %v5196, %v5267
  %v5346 = vmax.f32 %v5197, %v5269
  %v5347 = vmax.f32 %v5198, %v5271
  %v5348 = vmax.f32 %v5199, %v5273
  %v5349 = vmax.f32 %v5200, %v5275
  %v5350 = vmax.f32 %v5201, %v5277
  %v5351 = vmax.f32 %v5202, %v5279
  %v5352 = vmax.f32 %v5203, %v5281
  %v5353 = vmax.f32 %v5204, %v5283
  %v5354 = vmax.f32 %v5205, %v5285
  %v5355 = vmax.f32 %v5206, %v5287
  %v5356 = vmax.f32 %v5207, %v5289
  %v5357 = vmax.f32 %v5208, %v5291
  %v5358 = vmax.f32 %v5209, %v5293
  %v5359 = vmax.f32 %v5210, %v5295
  %v5360 = vmax.f32 %v5211, %v5297
  %v5361 = vmax.f32 %v5212, %v5299
  %v5362 = vmax.f32 %v5213, %v5301
  %v5363 = vmax.f32 %v5214, %v5303
  %v5364 = vmax.f32 %v5215, %v5305
  %v5365 = vmax.f32 %v5216, %v5307
  %v5366 = vlaneseq
  %v5367 = vshrl.u32 %v5366, 7
  %v5368 = vsub.s32 2, %v5367
  %v5369 = vrot.slane %v24, %v5368
  %v5370 = vadd.f32 %v5337, %v5369
  %v5371 = vadd.f32 %v5338, %v5369
  %v5372 = vadd.f32 %v5339, %v5369
  %v5373 = vadd.f32 %v5340, %v5369
  %v5374 = vadd.f32 %v5341, %v5369
  %v5375 = vadd.f32 %v5342, %v5369
  %v5376 = vadd.f32 %v5343, %v5369
  %v5377 = vadd.f32 %v5344, %v5369
  %v5378 = vadd.f32 %v5345, %v5369
  %v5379 = vadd.f32 %v5346, %v5369
  %v5380 = vadd.f32 %v5347, %v5369
  %v5381 = vadd.f32 %v5348, %v5369
  %v5382 = vadd.f32 %v5349, %v5369
  %v5383 = vadd.f32 %v5350, %v5369
  %v5384 = vadd.f32 %v5351, %v5369
  %v5385 = vadd.f32 %v5352, %v5369
  %v5386 = vadd.f32 %v5353, %v5369
  %v5387 = vadd.f32 %v5354, %v5369
  %v5388 = vadd.f32 %v5355, %v5369
  %v5389 = vadd.f32 %v5356, %v5369
  %v5390 = vadd.f32 %v5357, %v5369
  %v5391 = vadd.f32 %v5358, %v5369
  %v5392 = vadd.f32 %v5359, %v5369
  %v5393 = vadd.f32 %v5360, %v5369
  %v5394 = vadd.f32 %v5361, %v5369
  %v5395 = vadd.f32 %v5362, %v5369
  %v5396 = vadd.f32 %v5363, %v5369
  %v5397 = vadd.f32 %v5364, %v5369
  %v5398 = vadd.f32 %v5365, %v5369
  %v5399 = vmax.f32 %v5370, 0.0
  %v5400 = vmax.f32 %v5371, 0.0
  %v5401 = vmax.f32 %v5372, 0.0
  %v5402 = vmax.f32 %v5373, 0.0
  %v5403 = vmax.f32 %v5374, 0.0
  %v5404 = vmax.f32 %v5375, 0.0
  %v5405 = vmax.f32 %v5376, 0.0
  %v5406 = vmax.f32 %v5377, 0.0
  %v5407 = vmax.f32 %v5378, 0.0
  %v5408 = vmax.f32 %v5379, 0.0
  %v5409 = vmax.f32 %v5380, 0.0
  %v5410 = vmax.f32 %v5381, 0.0
  %v5411 = vmax.f32 %v5382, 0.0
  %v5412 = vmax.f32 %v5383, 0.0
  %v5413 = vmax.f32 %v5384, 0.0
  %v5414 = vmax.f32 %v5385, 0.0
  %v5415 = vmax.f32 %v5386, 0.0
  %v5416 = vmax.f32 %v5387, 0.0
  %v5417 = vmax.f32 %v5388, 0.0
  %v5418 = vmax.f32 %v5389, 0.0
  %v5419 = vmax.f32 %v5390, 0.0
  %v5420 = vmax.f32 %v5391, 0.0
  %v5421 = vmax.f32 %v5392, 0.0
  %v5422 = vmax.f32 %v5393, 0.0
  %v5423 = vmax.f32 %v5394, 0.0
  %v5424 = vmax.f32 %v5395, 0.0
  %v5425 = vmax.f32 %v5396, 0.0
  %v5426 = vmax.f32 %v5397, 0.0
  %v5427 = vmax.f32 %v5398, 0.0
  %v5428 = vlaneseq
  %v5429 = vshrl.u32 %v5428, 7
  %v5430 = vlaneseq
  %v5431 = vand.u32 %v5430, 127
  %v5432 = vadd.s32 %v5431, 128
  %v5433 = vmul.u32 %v5429, 32
  %vm5434 = vcmp.eq.s32.totalorder %v5431, %v5433
  %vm5435 = vcmp.eq.s32.totalorder %v5432, %v5433
  %v5436 = vsel %vm5434, 1, 0
  %v5437 = vsel %vm5435, 1, 0
  %v5438 = vcvt.s32.f32 %v5436
  %v5439 = vcvt.s32.f32 %v5437
  %vm5440 = vcmask 826368
  %v5442 = vsel %vm5440, %v5439, 0
  %vm5444 = vcmask 1044480
  %v5446 = vsel %vm5444, %v5427, 0
  %5448 = vmatprep.subr.mxu0 0.0
  %5449 = vmatpush1.msra.mxu0 %v5399
  %5450 = vmatprep.subr.mxu0 0.0
  %5451 = vmatpush1.msra.mxu0 %v5400
  %5452 = vmatprep.subr.mxu0 0.0
  %5453 = vmatpush1.msra.mxu0 %v5401
  %5454 = vmatprep.subr.mxu0 0.0
  %5455 = vmatpush1.msra.mxu0 %v5402
  %5456 = vmatprep.subr.mxu0 0.0
  %5457 = vmatpush1.msra.mxu0 %v5403
  %5458 = vmatprep.subr.mxu0 0.0
  %5459 = vmatpush1.msra.mxu0 %v5404
  %5460 = vmatprep.subr.mxu0 0.0
  %5461 = vmatpush1.msra.mxu0 %v5405
  %5462 = vmatprep.subr.mxu0 0.0
  %5463 = vmatpush1.msra.mxu0 %v5406
  %5464 = vmatprep.subr.mxu0 0.0
  %5465 = vmatpush1.msra.mxu0 %v5407
  %5466 = vmatprep.subr.mxu0 0.0
  %5467 = vmatpush1.msra.mxu0 %v5408
  %5468 = vmatprep.subr.mxu0 0.0
  %5469 = vmatpush1.msra.mxu0 %v5409
  %5470 = vmatprep.subr.mxu0 0.0
  %5471 = vmatpush1.msra.mxu0 %v5410
  %5472 = vmatprep.subr.mxu0 0.0
  %5473 = vmatpush1.msra.mxu0 %v5411
  %5474 = vmatprep.subr.mxu0 0.0
  %5475 = vmatpush1.msra.mxu0 %v5412
  %5476 = vmatprep.subr.mxu0 0.0
  %5477 = vmatpush1.msra.mxu0 %v5413
  %5478 = vmatprep.subr.mxu0 0.0
  %5479 = vmatpush1.msra.mxu0 %v5414
  %5480 = vmatprep.subr.mxu0 0.0
  %5481 = vmatpush1.msra.mxu0 %v5415
  %5482 = vmatprep.subr.mxu0 0.0
  %5483 = vmatpush1.msra.mxu0 %v5416
  %5484 = vmatprep.subr.mxu0 0.0
  %5485 = vmatpush1.msra.mxu0 %v5417
  %5486 = vmatprep.subr.mxu0 0.0
  %5487 = vmatpush1.msra.mxu0 %v5418
  %5488 = vmatprep.subr.mxu0 0.0
  %5489 = vmatpush1.msra.mxu0 %v5419
  %5490 = vmatprep.subr.mxu0 0.0
  %5491 = vmatpush1.msra.mxu0 %v5420
  %5492 = vmatprep.subr.mxu0 0.0
  %5493 = vmatpush1.msra.mxu0 %v5421
  %5494 = vmatprep.subr.mxu0 0.0
  %5495 = vmatpush1.msra.mxu0 %v5422
  %5496 = vmatprep.subr.mxu0 0.0
  %5497 = vmatpush1.msra.mxu0 %v5423
  %5498 = vmatprep.subr.mxu0 0.0
  %5499 = vmatpush1.msra.mxu0 %v5424
  %5500 = vmatprep.subr.mxu0 0.0
  %5501 = vmatpush1.msra.mxu0 %v5425
  %5502 = vmatprep.subr.mxu0 0.0
  %5503 = vmatpush1.msra.mxu0 %v5426
  %5504 = vmatprep.subr.mxu0 0.0
  %5505 = vmatpush1.msra.mxu0 %v5446
  %5506 = vmatprep.subr.mxu0 0.0
  %5507 = vmatpush1.msra.mxu0 0.0
  %5508 = vmatprep.subr.mxu0 0.0
  %5509 = vmatpush1.msra.mxu0 0.0
  %5510 = vmatprep.subr.mxu0 0.0
  %5511 = vmatpush1.msra.mxu0 0.0
  %5512 = vmatprep.mubr.f32.mxu0 %v5442
  %5513 = vmatmul.mubr.f32.gmra.mrb[0].mxu0 %v5438
  %v5514 = vpop.f32.mrb[0].mxu0
  %v5515 = vadd.f32 0.0, %v5514
  %v5516 = vpop.f32.mrb[0].mxu0
  %5517 = vdwg.mxu0
  %v5518 = vpack.c.bf16 %v5515, %v5515
  %v5519 = vld [vmem:[%s4] sm:$0xf]
  %v5520 = vld [vmem:[%s4 + $0x4] sm:$0xf]
  %v5521 = vld [vmem:[%s4 + $0x8] sm:$0xf]
  %v5522 = vld [vmem:[%s4 + $0xc] sm:$0xf]
  %v5523 = vld [vmem:[%s4 + $0x10] sm:$0xf]
  %v5524 = vld [vmem:[%s4 + $0x14] sm:$0xf]
  %v5525 = vld [vmem:[%s4 + $0x18] sm:$0xf]
  %v5526 = vld [vmem:[%s4 + $0x1c] sm:$0xf]
  %v5527 = vld [vmem:[%s4 + $0x20] sm:$0xf]
  %v5528 = vld [vmem:[%s4 + $0x24] sm:$0xf]
  %v5529 = vld [vmem:[%s4 + $0x28] sm:$0xf]
  %v5530 = vld [vmem:[%s4 + $0x2c] sm:$0xf]
  %v5531 = vld [vmem:[%s4 + $0x30] sm:$0xf]
  %v5532 = vld [vmem:[%s4 + $0x34] sm:$0xf]
  %v5533 = vld [vmem:[%s4 + $0x38] sm:$0xf]
  %v5534 = vld [vmem:[%s4 + $0x3c] sm:$0xf]
  %v5535 = vlaneseq
  %v5536 = vshrl.u32 %v5535, 7
  %v5537 = vsub.s32 3, %v5536
  %v5538 = vrot.slane %v24, %v5537
  %v5555 = vunpack.c.l.b16 %v5519
  %v5556 = vunpack.c.l.b16 %v5520
  %v5557 = vunpack.c.l.b16 %v5521
  %v5558 = vunpack.c.l.b16 %v5522
  %v5559 = vunpack.c.l.b16 %v5523
  %v5560 = vunpack.c.l.b16 %v5524
  %v5561 = vunpack.c.l.b16 %v5525
  %v5562 = vunpack.c.l.b16 %v5526
  %v5563 = vunpack.c.l.b16 %v5527
  %v5564 = vunpack.c.l.b16 %v5528
  %v5565 = vunpack.c.l.b16 %v5529
  %v5566 = vunpack.c.l.b16 %v5530
  %v5567 = vunpack.c.l.b16 %v5531
  %v5568 = vunpack.c.l.b16 %v5532
  %v5569 = vunpack.c.l.b16 %v5533
  %v5570 = vunpack.c.l.b16 %v5534
  %v5571 = vpack.c.b16 %v5556, %v5555
  %v5572 = vpack.c.b16 %v5558, %v5557
  %v5573 = vpack.c.b16 %v5560, %v5559
  %v5574 = vpack.c.b16 %v5562, %v5561
  %v5575 = vpack.c.b16 %v5564, %v5563
  %v5576 = vpack.c.b16 %v5566, %v5565
  %v5577 = vpack.c.b16 %v5568, %v5567
  %v5578 = vpack.c.b16 %v5570, %v5569
  %5587 = vmatprep.subr.bf16.mxu0 0
  %5588 = vmatpush1.bf16.msra.mxu0 %v5571
  %5589 = vmatprep.subr.bf16.mxu0 0
  %5590 = vmatpush1.bf16.msra.mxu0 %v5572
  %5591 = vmatprep.subr.bf16.mxu0 0
  %5592 = vmatpush1.bf16.msra.mxu0 %v5573
  %5593 = vmatprep.subr.bf16.mxu0 0
  %5594 = vmatpush1.bf16.msra.mxu0 %v5574
  %5595 = vmatprep.subr.bf16.mxu0 0
  %5596 = vmatpush1.bf16.msra.mxu0 %v5575
  %5597 = vmatprep.subr.bf16.mxu0 0
  %5598 = vmatpush1.bf16.msra.mxu0 %v5576
  %5599 = vmatprep.subr.bf16.mxu0 0
  %5600 = vmatpush1.bf16.msra.mxu0 %v5577
  %5601 = vmatprep.subr.bf16.mxu0 0
  %5602 = vmatpush1.bf16.msra.mxu0 %v5578
  %5603 = vmatprep.subr.bf16.mxu0 0
  %5604 = vmatpush1.bf16.msra.mxu0 0
  %5605 = vmatprep.subr.bf16.mxu0 0
  %5606 = vmatpush1.bf16.msra.mxu0 0
  %5607 = vmatprep.subr.bf16.mxu0 0
  %5608 = vmatpush1.bf16.msra.mxu0 0
  %5609 = vmatprep.subr.bf16.mxu0 0
  %5610 = vmatpush1.bf16.msra.mxu0 0
  %5611 = vmatprep.subr.bf16.mxu0 0
  %5612 = vmatpush1.bf16.msra.mxu0 0
  %5613 = vmatprep.subr.bf16.mxu0 0
  %5614 = vmatpush1.bf16.msra.mxu0 0
  %5615 = vmatprep.subr.bf16.mxu0 0
  %5616 = vmatpush1.bf16.msra.mxu0 0
  %5617 = vmatprep.subr.bf16.mxu0 0
  %5618 = vmatpush1.bf16.msra.mxu0 0
  %5619 = vmatprep.mubr.bf16.mxu0 0
  %5620 = vmatmul.mubr.bf16.gmra.mrb[0].mxu0 %v5518
  %v5621 = vpop.f32.mrb[0].mxu0
  %v5622 = vadd.f32 %v5538, %v5621
  %v5623 = vpop.f32.mrb[0].mxu0
  %v5624 = vpop.f32.mrb[0].mxu0
  %v5625 = vpop.f32.mrb[0].mxu0
  %5626 = vdwg.mxu0
  %vm5627 = vcmp.lt.s32.totalorder %v5431, 10
  %v5628 = vsel %vm5627, %v5622, -1e+30
  %5629 = vmax.xlane.f32.xlu0 %v5628
  %v5630 = vpop.xlane.xlu0 %5629
  %v5631 = vsub.f32 %v5628, %v5630
  %v5632 = vmul.f32 %v5631, 1.442695
  %v5633 = vpow.pop %v5632
  %v5634 = vsel %vm5627, %v5633, 0.0
  %5635 = vadd.xlane.f32.xlu0 %v5634
  %v5636 = vpop.xlane.xlu0 %5635
  %v5637 = vlog2.pop %v5636
  %v5638 = vmul.f32 %v5637, 0.6931472
  %v5639 = vsub.f32 %v5631, %v5638
  %5640 = vst [vmem:[%s6] sm:$0xff] %v5639
  // Predicated region
  $region26: #{net_forward.1} parent=0 // pred_check
    _
  $region27: #{net_forward.1} parent=0 // pred_check_branch
    %5642 = sbr.rel (0) target = $region29
  $region28: #{net_forward.1} parent=0 // pred_region
    _
  $region29: #{net_forward.1} parent=0 // pred_fallthru
    _
  // Predicated region
  $region30: #{net_forward.1} parent=0 // pred_check
    _
  $region31: #{net_forward.1} parent=0 // pred_check_branch
    %5644 = sbr.rel (0) target = $region33
  $region32: #{net_forward.1} parent=0 // pred_region
    _
  $region33: #{net_forward.1} parent=0 // pred_fallthru
    _

</llo_original>
